<compile_context>
chip_gen: v7x
topology: tpu7x:2x2x1
jax: 0.10.0
libtpu: 0.0.40
codegen_flags: <defaults>
</compile_context>

<pallas_src>
import math
import numpy as np

import jax
import jax.numpy as jnp
from jax.experimental import pallas as pl
from jax.experimental.pallas import tpu as pltpu


# ------------------------------------------------------------------ config --
class Args:
    num_fusion_layers = 2          # -> one SelfMultiFusionLayer
    fusion_type = "self"
    gcn_channels = 2               # two propagation scales (A, A^2)
    in_size = 8                    # node input features
    gcn_hidden = 32                # hidden dim
    num_classes = 3
    gcn_dropout = 0.1              # eval mode -> identity
    pos_encoding = "lap"
    alpha = 0.5
    eta = 0.6
    num_heads = 4
    ffn_dim = 64
    device = None


B = 2            # graphs in the batch
M = 8            # max nodes per graph (dense padding)
OUT_LANES = 128  # lane-dense output slab width


# ------------------------------------------------------------ fused kernel --
def _make_fused_kernel(cfg, n_fusion, fusion_alphas, vec_idx, Bt, Mn):
    H = cfg.gcn_hidden
    nh = cfg.num_heads
    hd = H // nh
    Fd = cfg.ffn_dim
    alpha = cfg.alpha
    eta = cfg.eta
    N = Bt * Mn

    def kernel(x_ref, a_ref, bias_ref, mask_ref,
               fw_ref, wqkv_ref, wo_ref, wf1_ref, wf2_ref, fgw_ref,
               mw1_ref, mw2_ref, mw3_ref, vecs_ref, out_ref):
        x = x_ref[0]          # (N, F)   Bt graphs packed on the node axis
        a1 = a_ref[0]         # (N, N)   block-diagonal normalized adjacency
        bias = bias_ref[0]    # (N, N)   block-diag attention bias (-1e9 off-block)
        mask = mask_ref[0]    # (N, 1)   node validity

        def vec(name, width):
            r = vec_idx[name]
            return vecs_ref[r:r + 1, :width]          # (1, width), lane-dense slab

        def layernorm(h, l, tag):
            mu = jnp.mean(h, axis=-1, keepdims=True)
            var = jnp.mean((h - mu) ** 2, axis=-1, keepdims=True)
            return ((h - mu) * jax.lax.rsqrt(var + 1e-5)
                    * vec(f"{tag}g{l}", H) + vec(f"{tag}b{l}", H))

        def transformer(l, x_in):
            # One fused lane-dense QKV matmul; 1/sqrt(hd) pre-folded into Q.
            qkv = (jnp.dot(x_in, wqkv_ref[l],
                           preferred_element_type=jnp.float32)
                   + vec(f"bqkv{l}", 3 * H))                         # (N, 3H)
            ctx_heads = []
            for h in range(nh):
                qh = qkv[:, h * hd:(h + 1) * hd]
                kh = qkv[:, H + h * hd:H + (h + 1) * hd]
                vh = qkv[:, 2 * H + h * hd:2 * H + (h + 1) * hd]
                s = jax.lax.dot_general(
                    qh, kh, (((1,), (1,)), ((), ())),
                    preferred_element_type=jnp.float32) + bias       # (N, N)
                s = s - jnp.max(s, axis=-1, keepdims=True)
                p = jnp.exp(s)
                p = p * pl.reciprocal(jnp.sum(p, axis=-1, keepdims=True),
                                      approx=True)
                ctx_heads.append(jnp.dot(p, vh,
                                         preferred_element_type=jnp.float32))
            ctx = jnp.concatenate(ctx_heads, axis=-1)                # (N, H)
            attn = (jnp.dot(ctx, wo_ref[l],
                            preferred_element_type=jnp.float32)
                    + vec(f"bo{l}", H))                              # single proj matmul
            h1 = layernorm(x_in + attn, l, "ln1")
            f = jnp.maximum(jnp.dot(h1, wf1_ref[l],
                                    preferred_element_type=jnp.float32)
                            + vec(f"bf1{l}", Fd), 0.0)
            f = (jnp.dot(f, wf2_ref[l], preferred_element_type=jnp.float32)
                 + vec(f"bf2{l}", H))
            h2 = layernorm(h1 + f, l, "ln2")
            return h2 * mask

        # second propagation scale computed in-kernel (drops one (N,N) HBM stream)
        a2 = jnp.dot(a1, a1, preferred_element_type=jnp.float32)

        # position embedding (dense projection of node features)
        x_pe = (jnp.dot(x, fw_ref[0], preferred_element_type=jnp.float32)
                + vec("pos_b", H)) * mask

        # multi-scale GCN encoder (two propagation scales, averaged)
        g1 = jnp.maximum(
            jnp.dot(a1, jnp.dot(x, fw_ref[1], preferred_element_type=jnp.float32),
                    preferred_element_type=jnp.float32) + vec("gcn_b0", H), 0.0)
        g2 = jnp.maximum(
            jnp.dot(a2, jnp.dot(x, fw_ref[2], preferred_element_type=jnp.float32),
                    preferred_element_type=jnp.float32) + vec("gcn_b1", H), 0.0)
        x_gcn = 0.5 * (g1 + g2) * mask

        # transformer encoder with adjacency attention bias
        x_trans = transformer(0, x_pe)

        # alpha mix (in-kernel, no HBM round trip)
        x_mix = alpha * x_gcn + (1.0 - alpha) * x_trans

        # fusion layers with eta residual
        for i in range(n_fusion):
            res_mix = x_mix
            x_gcn = jnp.maximum(
                jnp.dot(jnp.dot(a1, x_gcn, preferred_element_type=jnp.float32),
                        fgw_ref[i], preferred_element_type=jnp.float32)
                + vec(f"fgb{i}", H), 0.0) * mask
            x_trans = transformer(1 + i, x_trans)
            a_i = fusion_alphas[i]
            x_mix = a_i * x_gcn + (1.0 - a_i) * x_trans
            x_mix = eta * x_mix + (1.0 - eta) * res_mix

        # masked global add pool as one (Bt,N)x(N,3H) MXU matmul
        gid = jax.lax.broadcasted_iota(jnp.int32, (Bt, N), 0)
        nid = jax.lax.broadcasted_iota(jnp.int32, (Bt, N), 1)
        pool = jnp.logical_and(nid >= gid * Mn,
                               nid < (gid + 1) * Mn).astype(jnp.float32)
        feat = jnp.concatenate([x_gcn, x_trans, x_mix], axis=-1)     # (N, 3H)
        pooled = jnp.dot(pool, feat, preferred_element_type=jnp.float32)  # (Bt, 3H)

        # three MLP heads as one block-diagonal matmul chain; final layer is
        # lane-padded to 128 so the HBM store is a full-width vst.
        h = jnp.maximum(jnp.dot(pooled, mw1_ref[...],
                                preferred_element_type=jnp.float32)
                        + vec("mb1", 3 * H), 0.0)
        h = jnp.maximum(jnp.dot(h, mw2_ref[...],
                                preferred_element_type=jnp.float32)
                        + vec("mb2", 3 * (H // 2)), 0.0)
        logits = (jnp.dot(h, mw3_ref[...], preferred_element_type=jnp.float32)
                  + vec("mb3", OUT_LANES))
        out_ref[...] = logits.astype(out_ref.dtype)                  # (Bt, 128)

    return kernel


# --------------------------------------------------------------- parameters --
def init_params(key, cfg):
    F, H, Fd, C = cfg.in_size, cfg.gcn_hidden, cfg.ffn_dim, cfg.num_classes
    keys = iter(jax.random.split(key, 64))

    def glorot(shape):
        lim = math.sqrt(6.0 / (shape[0] + shape[1]))
        return jax.random.uniform(next(keys), shape, jnp.float32, -lim, lim)

    def zeros(shape):
        return jnp.zeros(shape, jnp.float32)

    def trans_params():
        return dict(wqkv=glorot((H, 3 * H)), bqkv=zeros((1, 3 * H)),
                    wo=glorot((H, H)), bo=zeros((1, H)),
                    ln1_g=jnp.ones((1, H), jnp.float32), ln1_b=zeros((1, H)),
                    wf1=glorot((H, Fd)), bf1=zeros((1, Fd)),
                    wf2=glorot((Fd, H)), bf2=zeros((1, H)),
                    ln2_g=jnp.ones((1, H), jnp.float32), ln2_b=zeros((1, H)))

    def mlp_params():
        return dict(w1=glorot((H, H)), b1=zeros((1, H)),
                    w2=glorot((H, H // 2)), b2=zeros((1, H // 2)),
                    w3=glorot((H // 2, C)), b3=zeros((1, C)))

    # deterministic per-layer alpha (mirrors np.random.normal(alpha, alpha))
    rng = np.random.default_rng(0)
    fusion = []
    for _ in range(cfg.num_fusion_layers - 1):
        a1 = float(rng.normal(cfg.alpha, cfg.alpha))
        if a1 >= 1.0:
            a1 = cfg.alpha
        fusion.append(dict(alpha_i=a1,
                           gcn_w=glorot((H, H)), gcn_b=zeros((1, H)),
                           trans=trans_params()))

    return dict(
        pos_w=glorot((F, H)), pos_b=zeros((1, H)),
        gcn1_w0=glorot((F, H)), gcn1_b0=zeros((1, H)),
        gcn1_w1=glorot((F, H)), gcn1_b1=zeros((1, H)),
        trans1=trans_params(),
        fusion=fusion,
        fc_gcn=mlp_params(), fc_trans=mlp_params(), fc_fusion=mlp_params(),
    )


def pack_params(params, cfg):
    """Re-layout logical parameters into the fused-kernel argument list."""
    H = cfg.gcn_hidden
    nh = cfg.num_heads
    hd = H // nh
    scale = 1.0 / math.sqrt(hd)

    layers = [params["trans1"]] + [f["trans"] for f in params["fusion"]]
    n_fusion = len(params["fusion"])

    def fold_q(w):   # fold 1/sqrt(hd) softmax scale into the Q columns
        return jnp.concatenate([w[..., :H] * scale, w[..., H:]], axis=-1)

    wqkv = jnp.stack([fold_q(t["wqkv"]) for t in layers], axis=0)   # (L, H, 3H)
    wo = jnp.stack([t["wo"] for t in layers], axis=0)               # (L, H, H)
    wf1 = jnp.stack([t["wf1"] for t in layers], axis=0)             # (L, H, Fd)
    wf2 = jnp.stack([t["wf2"] for t in layers], axis=0)             # (L, Fd, H)

    fw = jnp.stack([params["pos_w"], params["gcn1_w0"], params["gcn1_w1"]],
                   axis=0)                                          # (3, F, H)
    if n_fusion:
        fgw = jnp.stack([f["gcn_w"] for f in params["fusion"]], axis=0)
    else:
        fgw = jnp.zeros((1, H, H), jnp.float32)                     # unused placeholder

    def bdiag(mats):
        rows = sum(m.shape[0] for m in mats)
        cols = sum(m.shape[1] for m in mats)
        out = jnp.zeros((rows, cols), jnp.float32)
        r = c = 0
        for m in mats:
            out = out.at[r:r + m.shape[0], c:c + m.shape[1]].set(m)
            r += m.shape[0]
            c += m.shape[1]
        return out

    heads = [params["fc_gcn"], params["fc_trans"], params["fc_fusion"]]
    mw1 = bdiag([h["w1"] for h in heads])                           # (3H, 3H)
    mw2 = bdiag([h["w2"] for h in heads])                           # (3H, 3H/2)
    mw3 = bdiag([h["w3"] for h in heads])                           # (3H/2, 3C)
    assert mw3.shape[1] <= OUT_LANES
    mw3 = jnp.pad(mw3, ((0, 0), (0, OUT_LANES - mw3.shape[1])))     # lane-dense out

    mb1 = jnp.concatenate([h["b1"] for h in heads], axis=-1)
    mb2 = jnp.concatenate([h["b2"] for h in heads], axis=-1)
    mb3 = jnp.concatenate([h["b3"] for h in heads], axis=-1)

    # all bias / layernorm vectors consolidated into one (K, 128) slab
    rows, idx = [], {}

    def add(name, v):
        v = jnp.asarray(v, jnp.float32).reshape(1, -1)
        assert v.shape[1] <= OUT_LANES
        idx[name] = len(rows)
        rows.append(jnp.pad(v, ((0, 0), (0, OUT_LANES - v.shape[1]))))

    add("pos_b", params["pos_b"])
    add("gcn_b0", params["gcn1_b0"])
    add("gcn_b1", params["gcn1_b1"])
    for l, t in enumerate(layers):
        add(f"bqkv{l}", fold_q(t["bqkv"]))
        add(f"bo{l}", t["bo"])
        add(f"ln1g{l}", t["ln1_g"])
        add(f"ln1b{l}", t["ln1_b"])
        add(f"bf1{l}", t["bf1"])
        add(f"bf2{l}", t["bf2"])
        add(f"ln2g{l}", t["ln2_g"])
        add(f"ln2b{l}", t["ln2_b"])
    for i, f in enumerate(params["fusion"]):
        add(f"fgb{i}", f["gcn_b"])
    add("mb1", mb1)
    add("mb2", mb2)
    add("mb3", mb3)
    vecs = jnp.concatenate(rows, axis=0)                            # (K, 128)

    weights = [fw, wqkv, wo, wf1, wf2, fgw, mw1, mw2, mw3, vecs]
    alphas = [f["alpha_i"] for f in params["fusion"]]
    return weights, alphas, idx


# ----------------------------------------------------------------- forward --
def graph_self_fusion_forward(weights, alphas, vec_idx, x_dense, a_norm,
                              att_bias, mask, cfg, target_rows=128):
    Bq, Mq, F = x_dense.shape
    C = cfg.num_classes
    n_fusion = cfg.num_fusion_layers - 1

    # Pack Bt graphs block-diagonally per grid step so node rows fill the
    # sublane/MXU-row axis (128 rows on v5e; pass target_rows=256 on v6e/v7x).
    Bt = max(1, min(Bq, max(1, target_rows // Mq)))
    G = -(-Bq // Bt)
    Bp = G * Bt
    pad = Bp - Bq
    if pad:
        x_dense = jnp.pad(x_dense, ((0, pad), (0, 0), (0, 0)))
        a_norm = jnp.pad(a_norm, ((0, pad), (0, 0), (0, 0)))
        att_bias = jnp.pad(att_bias, ((0, pad), (0, 0), (0, 0)))
        mask = jnp.pad(mask, ((0, pad), (0, 0)))

    N = Bt * Mq

    def block_diag(a, off_value=0.0):
        a = a.reshape(G, Bt, Mq, Mq)
        eye = jnp.eye(Bt, dtype=a.dtype)[None, :, :, None, None]
        full = a[:, :, None, :, :] * eye + (1.0 - eye) * off_value
        return full.transpose(0, 1, 3, 2, 4).reshape(G, N, N)

    x_pack = x_dense.reshape(G, N, F)
    mask_pack = mask.reshape(G, N, 1)
    a_pack = block_diag(a_norm)                       # block-diag adjacency
    bias_pack = block_diag(att_bias, off_value=-1e9)  # -1e9 across graphs

    in_specs = [
        pl.BlockSpec((1, N, F), lambda i: (i, 0, 0)),     # x (packed)
        pl.BlockSpec((1, N, N), lambda i: (i, 0, 0)),     # a_norm (block-diag)
        pl.BlockSpec((1, N, N), lambda i: (i, 0, 0)),     # attention bias
        pl.BlockSpec((1, N, 1), lambda i: (i, 0, 0)),     # mask
    ] + [pl.BlockSpec(w.shape, lambda i, _n=w.ndim: (0,) * _n) for w in weights]

    kernel = _make_fused_kernel(cfg, n_fusion,
                                tuple(float(a) for a in alphas),
                                vec_idx, Bt, Mq)

    logits = pl.pallas_call(
        kernel,
        out_shape=jax.ShapeDtypeStruct((Bp, OUT_LANES), jnp.float32),
        grid=(G,),
        in_specs=in_specs,
        out_specs=pl.BlockSpec((Bt, OUT_LANES), lambda i: (i, 0)),
        compiler_params=pltpu.CompilerParams(
            dimension_semantics=("parallel",),           # both TCs on v7x
            vmem_limit_bytes=32 * 1024 * 1024),
    )(x_pack, a_pack, bias_pack, mask_pack, *weights)

    logits = logits[:Bq]
    return logits[:, :C], logits[:, C:2 * C], logits[:, 2 * C:3 * C]


# -------------------------------------------------------------------- main --
if __name__ == "__main__":
    cfg = Args()
    key = jax.random.PRNGKey(0)
    k_x, k_adj, k_params = jax.random.split(key, 3)

    # dense graph batch: graph 0 has 8 valid nodes, graph 1 has 6
    n_nodes = jnp.array([8, 6])
    mask = (jnp.arange(M)[None, :] < n_nodes[:, None]).astype(jnp.float32)  # [B, M]

    # node features
    x_dense = jax.random.normal(k_x, (B, M, cfg.in_size), jnp.float32)
    x_dense = x_dense * mask[:, :, None]

    # random symmetric adjacency, restricted to valid nodes, no self loops
    ar = jax.random.bernoulli(k_adj, 0.4, (B, M, M)).astype(jnp.float32)
    adj = jnp.maximum(ar, jnp.swapaxes(ar, 1, 2))
    adj = adj * (1.0 - jnp.eye(M))[None]
    adj = adj * mask[:, :, None] * mask[:, None, :]

    # symmetric GCN normalization with self loops (valid nodes only)
    a_hat = adj + jnp.eye(M)[None] * mask[:, :, None]
    deg = jnp.sum(a_hat, axis=-1)
    dinv = jnp.where(deg > 0, 1.0 / jnp.sqrt(jnp.maximum(deg, 1e-12)), 0.0)
    a_norm = a_hat * dinv[:, :, None] * dinv[:, None, :]

    # additive attention bias = dense adjacency + key-padding mask
    att_bias = adj + (1.0 - mask[:, None, :]) * (-1e9)

    params = init_params(k_params, cfg)
    weights, alphas, vec_idx = pack_params(params, cfg)

    out_gcn, out_trans, out_mix = graph_self_fusion_forward(
        weights, alphas, vec_idx, x_dense, a_norm, att_bias, mask, cfg)
    jax.block_until_ready((out_gcn, out_trans, out_mix))

    assert out_gcn.shape == (B, cfg.num_classes)
    assert out_trans.shape == (B, cfg.num_classes)
    assert out_mix.shape == (B, cfg.num_classes)
    assert all(bool(jnp.all(jnp.isfinite(o))) for o in (out_gcn, out_trans, out_mix))
    print("KERNEL_OK")
</pallas_src>

<mosaic_0001>
module attributes {stable_mosaic.version = 11 : i64} {
  func.func @kernel(%arg0: i32, %arg1: memref<1x16x8xf32, #tpu.memory_space<vmem>>, %arg2: memref<1x16x16xf32, #tpu.memory_space<vmem>>, %arg3: memref<1x16x16xf32, #tpu.memory_space<vmem>>, %arg4: memref<1x16x1xf32, #tpu.memory_space<vmem>>, %arg5: memref<3x8x32xf32, #tpu.memory_space<vmem>>, %arg6: memref<2x32x96xf32, #tpu.memory_space<vmem>>, %arg7: memref<2x32x32xf32, #tpu.memory_space<vmem>>, %arg8: memref<2x32x64xf32, #tpu.memory_space<vmem>>, %arg9: memref<2x64x32xf32, #tpu.memory_space<vmem>>, %arg10: memref<1x32x32xf32, #tpu.memory_space<vmem>>, %arg11: memref<96x96xf32, #tpu.memory_space<vmem>>, %arg12: memref<96x48xf32, #tpu.memory_space<vmem>>, %arg13: memref<48x128xf32, #tpu.memory_space<vmem>>, %arg14: memref<23x128xf32, #tpu.memory_space<vmem>>, %arg15: memref<2x128xf32, #tpu.memory_space<vmem>>) attributes {dimension_semantics = [#tpu.dimension_semantics<parallel>], iteration_bounds = array<i64: 1>, scalar_prefetch = 0 : i64, scratch_operands = 0 : i64, tpu.core_type = #tpu.core_type<tc>, window_params = [{transform_indices = @transform_0, window_bounds = array<i64: 1, 16, 8>}, {transform_indices = @transform_1, window_bounds = array<i64: 1, 16, 16>}, {transform_indices = @transform_2, window_bounds = array<i64: 1, 16, 16>}, {transform_indices = @transform_3, window_bounds = array<i64: 1, 16, 1>}, {pipeline_mode = #tpu.pipeline_mode<synchronous>, transform_indices = @transform_4, window_bounds = array<i64: 3, 8, 32>}, {pipeline_mode = #tpu.pipeline_mode<synchronous>, transform_indices = @transform_5, window_bounds = array<i64: 2, 32, 96>}, {pipeline_mode = #tpu.pipeline_mode<synchronous>, transform_indices = @transform_6, window_bounds = array<i64: 2, 32, 32>}, {pipeline_mode = #tpu.pipeline_mode<synchronous>, transform_indices = @transform_7, window_bounds = array<i64: 2, 32, 64>}, {pipeline_mode = #tpu.pipeline_mode<synchronous>, transform_indices = @transform_8, window_bounds = array<i64: 2, 64, 32>}, {pipeline_mode = #tpu.pipeline_mode<synchronous>, transform_indices = @transform_9, window_bounds = array<i64: 1, 32, 32>}, {pipeline_mode = #tpu.pipeline_mode<synchronous>, transform_indices = @transform_10, window_bounds = array<i64: 96, 96>}, {pipeline_mode = #tpu.pipeline_mode<synchronous>, transform_indices = @transform_11, window_bounds = array<i64: 96, 48>}, {pipeline_mode = #tpu.pipeline_mode<synchronous>, transform_indices = @transform_12, window_bounds = array<i64: 48, 128>}, {pipeline_mode = #tpu.pipeline_mode<synchronous>, transform_indices = @transform_13, window_bounds = array<i64: 23, 128>}, {transform_indices = @transform_14, window_bounds = array<i64: 2, 128>}]} {
    %c0 = arith.constant 0 : index
    %c0_0 = arith.constant 0 : index
    %c0_1 = arith.constant 0 : index
    %0 = vector.load %arg1[%c0, %c0_0, %c0_1] : memref<1x16x8xf32, #tpu.memory_space<vmem>>, vector<1x16x8xf32>
    %1 = vector.shape_cast %0 : vector<1x16x8xf32> to vector<16x8xf32>
    %c0_2 = arith.constant 0 : index
    %c0_3 = arith.constant 0 : index
    %c0_4 = arith.constant 0 : index
    %2 = vector.load %arg2[%c0_2, %c0_3, %c0_4] : memref<1x16x16xf32, #tpu.memory_space<vmem>>, vector<1x16x16xf32>
    %3 = vector.shape_cast %2 : vector<1x16x16xf32> to vector<16x16xf32>
    %c0_5 = arith.constant 0 : index
    %c0_6 = arith.constant 0 : index
    %c0_7 = arith.constant 0 : index
    %4 = vector.load %arg3[%c0_5, %c0_6, %c0_7] : memref<1x16x16xf32, #tpu.memory_space<vmem>>, vector<1x16x16xf32>
    %5 = vector.shape_cast %4 : vector<1x16x16xf32> to vector<16x16xf32>
    %c0_8 = arith.constant 0 : index
    %c0_9 = arith.constant 0 : index
    %c0_10 = arith.constant 0 : index
    %6 = vector.load %arg4[%c0_8, %c0_9, %c0_10] : memref<1x16x1xf32, #tpu.memory_space<vmem>>, vector<1x16x1xf32>
    %7 = vector.shape_cast %6 : vector<1x16x1xf32> to vector<16x1xf32>
    %cst = arith.constant dense<0.000000e+00> : vector<16x16xf32>
    %8 = tpu.matmul %3, %3, %cst {dimension_numbers = #tpu.dot_dimension_numbers<[1], [0], [0], [1], [0, 0, 1, 1], [], []>} : vector<16x16xf32>, vector<16x16xf32>, vector<16x16xf32> -> vector<16x16xf32>
    %c0_11 = arith.constant 0 : index
    %c0_12 = arith.constant 0 : index
    %c0_13 = arith.constant 0 : index
    %9 = vector.load %arg5[%c0_11, %c0_12, %c0_13] : memref<3x8x32xf32, #tpu.memory_space<vmem>>, vector<1x8x32xf32>
    %10 = vector.shape_cast %9 : vector<1x8x32xf32> to vector<8x32xf32>
    %cst_14 = arith.constant dense<0.000000e+00> : vector<16x32xf32>
    %11 = tpu.matmul %1, %10, %cst_14 {dimension_numbers = #tpu.dot_dimension_numbers<[1], [0], [0], [1], [0, 0, 1, 1], [], []>} : vector<16x8xf32>, vector<8x32xf32>, vector<16x32xf32> -> vector<16x32xf32>
    %c0_15 = arith.constant 0 : index
    %c0_16 = arith.constant 0 : index
    %12 = vector.load %arg14[%c0_15, %c0_16] : memref<23x128xf32, #tpu.memory_space<vmem>>, vector<1x32xf32>
    %13 = vector.broadcast %12 : vector<1x32xf32> to vector<16x32xf32>
    %14 = arith.addf %11, %13 : vector<16x32xf32>
    %15 = vector.broadcast %7 : vector<16x1xf32> to vector<16x32xf32>
    %16 = arith.mulf %14, %15 : vector<16x32xf32>
    %c1 = arith.constant 1 : index
    %c0_17 = arith.constant 0 : index
    %c0_18 = arith.constant 0 : index
    %17 = vector.load %arg5[%c1, %c0_17, %c0_18] : memref<3x8x32xf32, #tpu.memory_space<vmem>>, vector<1x8x32xf32>
    %18 = vector.shape_cast %17 : vector<1x8x32xf32> to vector<8x32xf32>
    %cst_19 = arith.constant dense<0.000000e+00> : vector<16x32xf32>
    %19 = tpu.matmul %1, %18, %cst_19 {dimension_numbers = #tpu.dot_dimension_numbers<[1], [0], [0], [1], [0, 0, 1, 1], [], []>} : vector<16x8xf32>, vector<8x32xf32>, vector<16x32xf32> -> vector<16x32xf32>
    %cst_20 = arith.constant dense<0.000000e+00> : vector<16x32xf32>
    %20 = tpu.matmul %3, %19, %cst_20 {dimension_numbers = #tpu.dot_dimension_numbers<[1], [0], [0], [1], [0, 0, 1, 1], [], []>} : vector<16x16xf32>, vector<16x32xf32>, vector<16x32xf32> -> vector<16x32xf32>
    %c1_21 = arith.constant 1 : index
    %c0_22 = arith.constant 0 : index
    %21 = vector.load %arg14[%c1_21, %c0_22] : memref<23x128xf32, #tpu.memory_space<vmem>>, vector<1x32xf32>
    %22 = vector.broadcast %21 : vector<1x32xf32> to vector<16x32xf32>
    %23 = arith.addf %20, %22 : vector<16x32xf32>
    %cst_23 = arith.constant 0.000000e+00 : f32
    %24 = vector.broadcast %cst_23 : f32 to vector<16x32xf32>
    %25 = arith.maximumf %23, %24 : vector<16x32xf32>
    %c2 = arith.constant 2 : index
    %c0_24 = arith.constant 0 : index
    %c0_25 = arith.constant 0 : index
    %26 = vector.load %arg5[%c2, %c0_24, %c0_25] : memref<3x8x32xf32, #tpu.memory_space<vmem>>, vector<1x8x32xf32>
    %27 = vector.shape_cast %26 : vector<1x8x32xf32> to vector<8x32xf32>
    %cst_26 = arith.constant dense<0.000000e+00> : vector<16x32xf32>
    %28 = tpu.matmul %1, %27, %cst_26 {dimension_numbers = #tpu.dot_dimension_numbers<[1], [0], [0], [1], [0, 0, 1, 1], [], []>} : vector<16x8xf32>, vector<8x32xf32>, vector<16x32xf32> -> vector<16x32xf32>
    %cst_27 = arith.constant dense<0.000000e+00> : vector<16x32xf32>
    %29 = tpu.matmul %8, %28, %cst_27 {dimension_numbers = #tpu.dot_dimension_numbers<[1], [0], [0], [1], [0, 0, 1, 1], [], []>} : vector<16x16xf32>, vector<16x32xf32>, vector<16x32xf32> -> vector<16x32xf32>
    %c2_28 = arith.constant 2 : index
    %c0_29 = arith.constant 0 : index
    %30 = vector.load %arg14[%c2_28, %c0_29] : memref<23x128xf32, #tpu.memory_space<vmem>>, vector<1x32xf32>
    %31 = vector.broadcast %30 : vector<1x32xf32> to vector<16x32xf32>
    %32 = arith.addf %29, %31 : vector<16x32xf32>
    %cst_30 = arith.constant 0.000000e+00 : f32
    %33 = vector.broadcast %cst_30 : f32 to vector<16x32xf32>
    %34 = arith.maximumf %32, %33 : vector<16x32xf32>
    %35 = arith.addf %25, %34 : vector<16x32xf32>
    %cst_31 = arith.constant 5.000000e-01 : f32
    %36 = vector.broadcast %cst_31 : f32 to vector<16x32xf32>
    %37 = arith.mulf %36, %35 : vector<16x32xf32>
    %38 = vector.broadcast %7 : vector<16x1xf32> to vector<16x32xf32>
    %39 = arith.mulf %37, %38 : vector<16x32xf32>
    %c0_32 = arith.constant 0 : index
    %c0_33 = arith.constant 0 : index
    %c0_34 = arith.constant 0 : index
    %40 = vector.load %arg6[%c0_32, %c0_33, %c0_34] : memref<2x32x96xf32, #tpu.memory_space<vmem>>, vector<1x32x96xf32>
    %41 = vector.shape_cast %40 : vector<1x32x96xf32> to vector<32x96xf32>
    %cst_35 = arith.constant dense<0.000000e+00> : vector<16x96xf32>
    %42 = tpu.matmul %16, %41, %cst_35 {dimension_numbers = #tpu.dot_dimension_numbers<[1], [0], [0], [1], [0, 0, 1, 1], [], []>} : vector<16x32xf32>, vector<32x96xf32>, vector<16x96xf32> -> vector<16x96xf32>
    %c3 = arith.constant 3 : index
    %c0_36 = arith.constant 0 : index
    %43 = vector.load %arg14[%c3, %c0_36] : memref<23x128xf32, #tpu.memory_space<vmem>>, vector<1x96xf32>
    %44 = vector.broadcast %43 : vector<1x96xf32> to vector<16x96xf32>
    %45 = arith.addf %42, %44 : vector<16x96xf32>
    %46 = vector.extract_strided_slice %45 {offsets = [0, 0], sizes = [16, 8], strides = [1, 1]} : vector<16x96xf32> to vector<16x8xf32>
    %47 = vector.extract_strided_slice %45 {offsets = [0, 32], sizes = [16, 8], strides = [1, 1]} : vector<16x96xf32> to vector<16x8xf32>
    %48 = vector.extract_strided_slice %45 {offsets = [0, 64], sizes = [16, 8], strides = [1, 1]} : vector<16x96xf32> to vector<16x8xf32>
    %cst_37 = arith.constant dense<0.000000e+00> : vector<16x16xf32>
    %49 = tpu.matmul %46, %47, %cst_37 {dimension_numbers = #tpu.dot_dimension_numbers<[1], [1], [0], [0], [0, 0, 1, 0], [], []>} : vector<16x8xf32>, vector<16x8xf32>, vector<16x16xf32> -> vector<16x16xf32>
    %50 = arith.addf %49, %5 : vector<16x16xf32>
    %cst_38 = arith.constant dense<0xFF800000> : vector<16xf32>
    %51 = vector.multi_reduction <maximumf>, %50, %cst_38 [1] : vector<16x16xf32> to vector<16xf32>
    %52 = vector.shape_cast %51 : vector<16xf32> to vector<16x1xf32>
    %53 = vector.broadcast %52 : vector<16x1xf32> to vector<16x16xf32>
    %54 = arith.subf %50, %53 : vector<16x16xf32>
    %55 = math.exp %54 : vector<16x16xf32>
    %cst_39 = arith.constant dense<0.000000e+00> : vector<16xf32>
    %56 = vector.multi_reduction <add>, %55, %cst_39 [1] : vector<16x16xf32> to vector<16xf32>
    %57 = vector.shape_cast %56 : vector<16xf32> to vector<16x1xf32>
    %58 = tpu.reciprocal %57 {approx = true} : vector<16x1xf32> -> vector<16x1xf32>
    %59 = vector.broadcast %58 : vector<16x1xf32> to vector<16x16xf32>
    %60 = arith.mulf %55, %59 : vector<16x16xf32>
    %cst_40 = arith.constant dense<0.000000e+00> : vector<16x8xf32>
    %61 = tpu.matmul %60, %48, %cst_40 {dimension_numbers = #tpu.dot_dimension_numbers<[1], [0], [0], [1], [0, 0, 1, 1], [], []>} : vector<16x16xf32>, vector<16x8xf32>, vector<16x8xf32> -> vector<16x8xf32>
    %62 = vector.extract_strided_slice %45 {offsets = [0, 8], sizes = [16, 8], strides = [1, 1]} : vector<16x96xf32> to vector<16x8xf32>
    %63 = vector.extract_strided_slice %45 {offsets = [0, 40], sizes = [16, 8], strides = [1, 1]} : vector<16x96xf32> to vector<16x8xf32>
    %64 = vector.extract_strided_slice %45 {offsets = [0, 72], sizes = [16, 8], strides = [1, 1]} : vector<16x96xf32> to vector<16x8xf32>
    %cst_41 = arith.constant dense<0.000000e+00> : vector<16x16xf32>
    %65 = tpu.matmul %62, %63, %cst_41 {dimension_numbers = #tpu.dot_dimension_numbers<[1], [1], [0], [0], [0, 0, 1, 0], [], []>} : vector<16x8xf32>, vector<16x8xf32>, vector<16x16xf32> -> vector<16x16xf32>
    %66 = arith.addf %65, %5 : vector<16x16xf32>
    %cst_42 = arith.constant dense<0xFF800000> : vector<16xf32>
    %67 = vector.multi_reduction <maximumf>, %66, %cst_42 [1] : vector<16x16xf32> to vector<16xf32>
    %68 = vector.shape_cast %67 : vector<16xf32> to vector<16x1xf32>
    %69 = vector.broadcast %68 : vector<16x1xf32> to vector<16x16xf32>
    %70 = arith.subf %66, %69 : vector<16x16xf32>
    %71 = math.exp %70 : vector<16x16xf32>
    %cst_43 = arith.constant dense<0.000000e+00> : vector<16xf32>
    %72 = vector.multi_reduction <add>, %71, %cst_43 [1] : vector<16x16xf32> to vector<16xf32>
    %73 = vector.shape_cast %72 : vector<16xf32> to vector<16x1xf32>
    %74 = tpu.reciprocal %73 {approx = true} : vector<16x1xf32> -> vector<16x1xf32>
    %75 = vector.broadcast %74 : vector<16x1xf32> to vector<16x16xf32>
    %76 = arith.mulf %71, %75 : vector<16x16xf32>
    %cst_44 = arith.constant dense<0.000000e+00> : vector<16x8xf32>
    %77 = tpu.matmul %76, %64, %cst_44 {dimension_numbers = #tpu.dot_dimension_numbers<[1], [0], [0], [1], [0, 0, 1, 1], [], []>} : vector<16x16xf32>, vector<16x8xf32>, vector<16x8xf32> -> vector<16x8xf32>
    %78 = vector.extract_strided_slice %45 {offsets = [0, 16], sizes = [16, 8], strides = [1, 1]} : vector<16x96xf32> to vector<16x8xf32>
    %79 = vector.extract_strided_slice %45 {offsets = [0, 48], sizes = [16, 8], strides = [1, 1]} : vector<16x96xf32> to vector<16x8xf32>
    %80 = vector.extract_strided_slice %45 {offsets = [0, 80], sizes = [16, 8], strides = [1, 1]} : vector<16x96xf32> to vector<16x8xf32>
    %cst_45 = arith.constant dense<0.000000e+00> : vector<16x16xf32>
    %81 = tpu.matmul %78, %79, %cst_45 {dimension_numbers = #tpu.dot_dimension_numbers<[1], [1], [0], [0], [0, 0, 1, 0], [], []>} : vector<16x8xf32>, vector<16x8xf32>, vector<16x16xf32> -> vector<16x16xf32>
    %82 = arith.addf %81, %5 : vector<16x16xf32>
    %cst_46 = arith.constant dense<0xFF800000> : vector<16xf32>
    %83 = vector.multi_reduction <maximumf>, %82, %cst_46 [1] : vector<16x16xf32> to vector<16xf32>
    %84 = vector.shape_cast %83 : vector<16xf32> to vector<16x1xf32>
    %85 = vector.broadcast %84 : vector<16x1xf32> to vector<16x16xf32>
    %86 = arith.subf %82, %85 : vector<16x16xf32>
    %87 = math.exp %86 : vector<16x16xf32>
    %cst_47 = arith.constant dense<0.000000e+00> : vector<16xf32>
    %88 = vector.multi_reduction <add>, %87, %cst_47 [1] : vector<16x16xf32> to vector<16xf32>
    %89 = vector.shape_cast %88 : vector<16xf32> to vector<16x1xf32>
    %90 = tpu.reciprocal %89 {approx = true} : vector<16x1xf32> -> vector<16x1xf32>
    %91 = vector.broadcast %90 : vector<16x1xf32> to vector<16x16xf32>
    %92 = arith.mulf %87, %91 : vector<16x16xf32>
    %cst_48 = arith.constant dense<0.000000e+00> : vector<16x8xf32>
    %93 = tpu.matmul %92, %80, %cst_48 {dimension_numbers = #tpu.dot_dimension_numbers<[1], [0], [0], [1], [0, 0, 1, 1], [], []>} : vector<16x16xf32>, vector<16x8xf32>, vector<16x8xf32> -> vector<16x8xf32>
    %94 = vector.extract_strided_slice %45 {offsets = [0, 24], sizes = [16, 8], strides = [1, 1]} : vector<16x96xf32> to vector<16x8xf32>
    %95 = vector.extract_strided_slice %45 {offsets = [0, 56], sizes = [16, 8], strides = [1, 1]} : vector<16x96xf32> to vector<16x8xf32>
    %96 = vector.extract_strided_slice %45 {offsets = [0, 88], sizes = [16, 8], strides = [1, 1]} : vector<16x96xf32> to vector<16x8xf32>
    %cst_49 = arith.constant dense<0.000000e+00> : vector<16x16xf32>
    %97 = tpu.matmul %94, %95, %cst_49 {dimension_numbers = #tpu.dot_dimension_numbers<[1], [1], [0], [0], [0, 0, 1, 0], [], []>} : vector<16x8xf32>, vector<16x8xf32>, vector<16x16xf32> -> vector<16x16xf32>
    %98 = arith.addf %97, %5 : vector<16x16xf32>
    %cst_50 = arith.constant dense<0xFF800000> : vector<16xf32>
    %99 = vector.multi_reduction <maximumf>, %98, %cst_50 [1] : vector<16x16xf32> to vector<16xf32>
    %100 = vector.shape_cast %99 : vector<16xf32> to vector<16x1xf32>
    %101 = vector.broadcast %100 : vector<16x1xf32> to vector<16x16xf32>
    %102 = arith.subf %98, %101 : vector<16x16xf32>
    %103 = math.exp %102 : vector<16x16xf32>
    %cst_51 = arith.constant dense<0.000000e+00> : vector<16xf32>
    %104 = vector.multi_reduction <add>, %103, %cst_51 [1] : vector<16x16xf32> to vector<16xf32>
    %105 = vector.shape_cast %104 : vector<16xf32> to vector<16x1xf32>
    %106 = tpu.reciprocal %105 {approx = true} : vector<16x1xf32> -> vector<16x1xf32>
    %107 = vector.broadcast %106 : vector<16x1xf32> to vector<16x16xf32>
    %108 = arith.mulf %103, %107 : vector<16x16xf32>
    %cst_52 = arith.constant dense<0.000000e+00> : vector<16x8xf32>
    %109 = tpu.matmul %108, %96, %cst_52 {dimension_numbers = #tpu.dot_dimension_numbers<[1], [0], [0], [1], [0, 0, 1, 1], [], []>} : vector<16x16xf32>, vector<16x8xf32>, vector<16x8xf32> -> vector<16x8xf32>
    %110 = tpu.concatenate %61, %77, %93, %109 in 1 : vector<16x8xf32>, vector<16x8xf32>, vector<16x8xf32>, vector<16x8xf32> -> vector<16x32xf32>
    %c0_53 = arith.constant 0 : index
    %c0_54 = arith.constant 0 : index
    %c0_55 = arith.constant 0 : index
    %111 = vector.load %arg7[%c0_53, %c0_54, %c0_55] : memref<2x32x32xf32, #tpu.memory_space<vmem>>, vector<1x32x32xf32>
    %112 = vector.shape_cast %111 : vector<1x32x32xf32> to vector<32x32xf32>
    %cst_56 = arith.constant dense<0.000000e+00> : vector<16x32xf32>
    %113 = tpu.matmul %110, %112, %cst_56 {dimension_numbers = #tpu.dot_dimension_numbers<[1], [0], [0], [1], [0, 0, 1, 1], [], []>} : vector<16x32xf32>, vector<32x32xf32>, vector<16x32xf32> -> vector<16x32xf32>
    %c4 = arith.constant 4 : index
    %c0_57 = arith.constant 0 : index
    %114 = vector.load %arg14[%c4, %c0_57] : memref<23x128xf32, #tpu.memory_space<vmem>>, vector<1x32xf32>
    %115 = vector.broadcast %114 : vector<1x32xf32> to vector<16x32xf32>
    %116 = arith.addf %113, %115 : vector<16x32xf32>
    %117 = arith.addf %16, %116 : vector<16x32xf32>
    %cst_58 = arith.constant dense<0.000000e+00> : vector<16xf32>
    %118 = vector.multi_reduction <add>, %117, %cst_58 [1] : vector<16x32xf32> to vector<16xf32>
    %119 = vector.shape_cast %118 : vector<16xf32> to vector<16x1xf32>
    %cst_59 = arith.constant 3.200000e+01 : f32
    %120 = vector.broadcast %cst_59 : f32 to vector<16x1xf32>
    %121 = arith.divf %119, %120 : vector<16x1xf32>
    %122 = vector.broadcast %121 : vector<16x1xf32> to vector<16x32xf32>
    %123 = arith.subf %117, %122 : vector<16x32xf32>
    %124 = arith.mulf %123, %123 : vector<16x32xf32>
    %cst_60 = arith.constant dense<0.000000e+00> : vector<16xf32>
    %125 = vector.multi_reduction <add>, %124, %cst_60 [1] : vector<16x32xf32> to vector<16xf32>
    %126 = vector.shape_cast %125 : vector<16xf32> to vector<16x1xf32>
    %cst_61 = arith.constant 3.200000e+01 : f32
    %127 = vector.broadcast %cst_61 : f32 to vector<16x1xf32>
    %128 = arith.divf %126, %127 : vector<16x1xf32>
    %129 = vector.broadcast %121 : vector<16x1xf32> to vector<16x32xf32>
    %130 = arith.subf %117, %129 : vector<16x32xf32>
    %cst_62 = arith.constant 9.99999974E-6 : f32
    %131 = vector.broadcast %cst_62 : f32 to vector<16x1xf32>
    %132 = arith.addf %128, %131 : vector<16x1xf32>
    %133 = math.rsqrt %132 : vector<16x1xf32>
    %134 = vector.broadcast %133 : vector<16x1xf32> to vector<16x32xf32>
    %135 = arith.mulf %130, %134 : vector<16x32xf32>
    %c5 = arith.constant 5 : index
    %c0_63 = arith.constant 0 : index
    %136 = vector.load %arg14[%c5, %c0_63] : memref<23x128xf32, #tpu.memory_space<vmem>>, vector<1x32xf32>
    %137 = vector.broadcast %136 : vector<1x32xf32> to vector<16x32xf32>
    %138 = arith.mulf %135, %137 : vector<16x32xf32>
    %c6 = arith.constant 6 : index
    %c0_64 = arith.constant 0 : index
    %139 = vector.load %arg14[%c6, %c0_64] : memref<23x128xf32, #tpu.memory_space<vmem>>, vector<1x32xf32>
    %140 = vector.broadcast %139 : vector<1x32xf32> to vector<16x32xf32>
    %141 = arith.addf %138, %140 : vector<16x32xf32>
    %c0_65 = arith.constant 0 : index
    %c0_66 = arith.constant 0 : index
    %c0_67 = arith.constant 0 : index
    %142 = vector.load %arg8[%c0_65, %c0_66, %c0_67] : memref<2x32x64xf32, #tpu.memory_space<vmem>>, vector<1x32x64xf32>
    %143 = vector.shape_cast %142 : vector<1x32x64xf32> to vector<32x64xf32>
    %cst_68 = arith.constant dense<0.000000e+00> : vector<16x64xf32>
    %144 = tpu.matmul %141, %143, %cst_68 {dimension_numbers = #tpu.dot_dimension_numbers<[1], [0], [0], [1], [0, 0, 1, 1], [], []>} : vector<16x32xf32>, vector<32x64xf32>, vector<16x64xf32> -> vector<16x64xf32>
    %c7 = arith.constant 7 : index
    %c0_69 = arith.constant 0 : index
    %145 = vector.load %arg14[%c7, %c0_69] : memref<23x128xf32, #tpu.memory_space<vmem>>, vector<1x64xf32>
    %146 = vector.broadcast %145 : vector<1x64xf32> to vector<16x64xf32>
    %147 = arith.addf %144, %146 : vector<16x64xf32>
    %cst_70 = arith.constant 0.000000e+00 : f32
    %148 = vector.broadcast %cst_70 : f32 to vector<16x64xf32>
    %149 = arith.maximumf %147, %148 : vector<16x64xf32>
    %c0_71 = arith.constant 0 : index
    %c0_72 = arith.constant 0 : index
    %c0_73 = arith.constant 0 : index
    %150 = vector.load %arg9[%c0_71, %c0_72, %c0_73] : memref<2x64x32xf32, #tpu.memory_space<vmem>>, vector<1x64x32xf32>
    %151 = vector.shape_cast %150 : vector<1x64x32xf32> to vector<64x32xf32>
    %cst_74 = arith.constant dense<0.000000e+00> : vector<16x32xf32>
    %152 = tpu.matmul %149, %151, %cst_74 {dimension_numbers = #tpu.dot_dimension_numbers<[1], [0], [0], [1], [0, 0, 1, 1], [], []>} : vector<16x64xf32>, vector<64x32xf32>, vector<16x32xf32> -> vector<16x32xf32>
    %c8 = arith.constant 8 : index
    %c0_75 = arith.constant 0 : index
    %153 = vector.load %arg14[%c8, %c0_75] : memref<23x128xf32, #tpu.memory_space<vmem>>, vector<1x32xf32>
    %154 = vector.broadcast %153 : vector<1x32xf32> to vector<16x32xf32>
    %155 = arith.addf %152, %154 : vector<16x32xf32>
    %156 = arith.addf %141, %155 : vector<16x32xf32>
    %cst_76 = arith.constant dense<0.000000e+00> : vector<16xf32>
    %157 = vector.multi_reduction <add>, %156, %cst_76 [1] : vector<16x32xf32> to vector<16xf32>
    %158 = vector.shape_cast %157 : vector<16xf32> to vector<16x1xf32>
    %cst_77 = arith.constant 3.200000e+01 : f32
    %159 = vector.broadcast %cst_77 : f32 to vector<16x1xf32>
    %160 = arith.divf %158, %159 : vector<16x1xf32>
    %161 = vector.broadcast %160 : vector<16x1xf32> to vector<16x32xf32>
    %162 = arith.subf %156, %161 : vector<16x32xf32>
    %163 = arith.mulf %162, %162 : vector<16x32xf32>
    %cst_78 = arith.constant dense<0.000000e+00> : vector<16xf32>
    %164 = vector.multi_reduction <add>, %163, %cst_78 [1] : vector<16x32xf32> to vector<16xf32>
    %165 = vector.shape_cast %164 : vector<16xf32> to vector<16x1xf32>
    %cst_79 = arith.constant 3.200000e+01 : f32
    %166 = vector.broadcast %cst_79 : f32 to vector<16x1xf32>
    %167 = arith.divf %165, %166 : vector<16x1xf32>
    %168 = vector.broadcast %160 : vector<16x1xf32> to vector<16x32xf32>
    %169 = arith.subf %156, %168 : vector<16x32xf32>
    %cst_80 = arith.constant 9.99999974E-6 : f32
    %170 = vector.broadcast %cst_80 : f32 to vector<16x1xf32>
    %171 = arith.addf %167, %170 : vector<16x1xf32>
    %172 = math.rsqrt %171 : vector<16x1xf32>
    %173 = vector.broadcast %172 : vector<16x1xf32> to vector<16x32xf32>
    %174 = arith.mulf %169, %173 : vector<16x32xf32>
    %c9 = arith.constant 9 : index
    %c0_81 = arith.constant 0 : index
    %175 = vector.load %arg14[%c9, %c0_81] : memref<23x128xf32, #tpu.memory_space<vmem>>, vector<1x32xf32>
    %176 = vector.broadcast %175 : vector<1x32xf32> to vector<16x32xf32>
    %177 = arith.mulf %174, %176 : vector<16x32xf32>
    %c10 = arith.constant 10 : index
    %c0_82 = arith.constant 0 : index
    %178 = vector.load %arg14[%c10, %c0_82] : memref<23x128xf32, #tpu.memory_space<vmem>>, vector<1x32xf32>
    %179 = vector.broadcast %178 : vector<1x32xf32> to vector<16x32xf32>
    %180 = arith.addf %177, %179 : vector<16x32xf32>
    %181 = vector.broadcast %7 : vector<16x1xf32> to vector<16x32xf32>
    %182 = arith.mulf %180, %181 : vector<16x32xf32>
    %cst_83 = arith.constant 5.000000e-01 : f32
    %183 = vector.broadcast %cst_83 : f32 to vector<16x32xf32>
    %184 = arith.mulf %183, %39 : vector<16x32xf32>
    %cst_84 = arith.constant 5.000000e-01 : f32
    %185 = vector.broadcast %cst_84 : f32 to vector<16x32xf32>
    %186 = arith.mulf %185, %182 : vector<16x32xf32>
    %187 = arith.addf %184, %186 : vector<16x32xf32>
    %cst_85 = arith.constant dense<0.000000e+00> : vector<16x32xf32>
    %188 = tpu.matmul %3, %39, %cst_85 {dimension_numbers = #tpu.dot_dimension_numbers<[1], [0], [0], [1], [0, 0, 1, 1], [], []>} : vector<16x16xf32>, vector<16x32xf32>, vector<16x32xf32> -> vector<16x32xf32>
    %c0_86 = arith.constant 0 : index
    %c0_87 = arith.constant 0 : index
    %c0_88 = arith.constant 0 : index
    %189 = vector.load %arg10[%c0_86, %c0_87, %c0_88] : memref<1x32x32xf32, #tpu.memory_space<vmem>>, vector<1x32x32xf32>
    %190 = vector.shape_cast %189 : vector<1x32x32xf32> to vector<32x32xf32>
    %cst_89 = arith.constant dense<0.000000e+00> : vector<16x32xf32>
    %191 = tpu.matmul %188, %190, %cst_89 {dimension_numbers = #tpu.dot_dimension_numbers<[1], [0], [0], [1], [0, 0, 1, 1], [], []>} : vector<16x32xf32>, vector<32x32xf32>, vector<16x32xf32> -> vector<16x32xf32>
    %c19 = arith.constant 19 : index
    %c0_90 = arith.constant 0 : index
    %192 = vector.load %arg14[%c19, %c0_90] : memref<23x128xf32, #tpu.memory_space<vmem>>, vector<1x32xf32>
    %193 = vector.broadcast %192 : vector<1x32xf32> to vector<16x32xf32>
    %194 = arith.addf %191, %193 : vector<16x32xf32>
    %cst_91 = arith.constant 0.000000e+00 : f32
    %195 = vector.broadcast %cst_91 : f32 to vector<16x32xf32>
    %196 = arith.maximumf %194, %195 : vector<16x32xf32>
    %197 = vector.broadcast %7 : vector<16x1xf32> to vector<16x32xf32>
    %198 = arith.mulf %196, %197 : vector<16x32xf32>
    %c1_92 = arith.constant 1 : index
    %c0_93 = arith.constant 0 : index
    %c0_94 = arith.constant 0 : index
    %199 = vector.load %arg6[%c1_92, %c0_93, %c0_94] : memref<2x32x96xf32, #tpu.memory_space<vmem>>, vector<1x32x96xf32>
    %200 = vector.shape_cast %199 : vector<1x32x96xf32> to vector<32x96xf32>
    %cst_95 = arith.constant dense<0.000000e+00> : vector<16x96xf32>
    %201 = tpu.matmul %182, %200, %cst_95 {dimension_numbers = #tpu.dot_dimension_numbers<[1], [0], [0], [1], [0, 0, 1, 1], [], []>} : vector<16x32xf32>, vector<32x96xf32>, vector<16x96xf32> -> vector<16x96xf32>
    %c11 = arith.constant 11 : index
    %c0_96 = arith.constant 0 : index
    %202 = vector.load %arg14[%c11, %c0_96] : memref<23x128xf32, #tpu.memory_space<vmem>>, vector<1x96xf32>
    %203 = vector.broadcast %202 : vector<1x96xf32> to vector<16x96xf32>
    %204 = arith.addf %201, %203 : vector<16x96xf32>
    %205 = vector.extract_strided_slice %204 {offsets = [0, 0], sizes = [16, 8], strides = [1, 1]} : vector<16x96xf32> to vector<16x8xf32>
    %206 = vector.extract_strided_slice %204 {offsets = [0, 32], sizes = [16, 8], strides = [1, 1]} : vector<16x96xf32> to vector<16x8xf32>
    %207 = vector.extract_strided_slice %204 {offsets = [0, 64], sizes = [16, 8], strides = [1, 1]} : vector<16x96xf32> to vector<16x8xf32>
    %cst_97 = arith.constant dense<0.000000e+00> : vector<16x16xf32>
    %208 = tpu.matmul %205, %206, %cst_97 {dimension_numbers = #tpu.dot_dimension_numbers<[1], [1], [0], [0], [0, 0, 1, 0], [], []>} : vector<16x8xf32>, vector<16x8xf32>, vector<16x16xf32> -> vector<16x16xf32>
    %209 = arith.addf %208, %5 : vector<16x16xf32>
    %cst_98 = arith.constant dense<0xFF800000> : vector<16xf32>
    %210 = vector.multi_reduction <maximumf>, %209, %cst_98 [1] : vector<16x16xf32> to vector<16xf32>
    %211 = vector.shape_cast %210 : vector<16xf32> to vector<16x1xf32>
    %212 = vector.broadcast %211 : vector<16x1xf32> to vector<16x16xf32>
    %213 = arith.subf %209, %212 : vector<16x16xf32>
    %214 = math.exp %213 : vector<16x16xf32>
    %cst_99 = arith.constant dense<0.000000e+00> : vector<16xf32>
    %215 = vector.multi_reduction <add>, %214, %cst_99 [1] : vector<16x16xf32> to vector<16xf32>
    %216 = vector.shape_cast %215 : vector<16xf32> to vector<16x1xf32>
    %217 = tpu.reciprocal %216 {approx = true} : vector<16x1xf32> -> vector<16x1xf32>
    %218 = vector.broadcast %217 : vector<16x1xf32> to vector<16x16xf32>
    %219 = arith.mulf %214, %218 : vector<16x16xf32>
    %cst_100 = arith.constant dense<0.000000e+00> : vector<16x8xf32>
    %220 = tpu.matmul %219, %207, %cst_100 {dimension_numbers = #tpu.dot_dimension_numbers<[1], [0], [0], [1], [0, 0, 1, 1], [], []>} : vector<16x16xf32>, vector<16x8xf32>, vector<16x8xf32> -> vector<16x8xf32>
    %221 = vector.extract_strided_slice %204 {offsets = [0, 8], sizes = [16, 8], strides = [1, 1]} : vector<16x96xf32> to vector<16x8xf32>
    %222 = vector.extract_strided_slice %204 {offsets = [0, 40], sizes = [16, 8], strides = [1, 1]} : vector<16x96xf32> to vector<16x8xf32>
    %223 = vector.extract_strided_slice %204 {offsets = [0, 72], sizes = [16, 8], strides = [1, 1]} : vector<16x96xf32> to vector<16x8xf32>
    %cst_101 = arith.constant dense<0.000000e+00> : vector<16x16xf32>
    %224 = tpu.matmul %221, %222, %cst_101 {dimension_numbers = #tpu.dot_dimension_numbers<[1], [1], [0], [0], [0, 0, 1, 0], [], []>} : vector<16x8xf32>, vector<16x8xf32>, vector<16x16xf32> -> vector<16x16xf32>
    %225 = arith.addf %224, %5 : vector<16x16xf32>
    %cst_102 = arith.constant dense<0xFF800000> : vector<16xf32>
    %226 = vector.multi_reduction <maximumf>, %225, %cst_102 [1] : vector<16x16xf32> to vector<16xf32>
    %227 = vector.shape_cast %226 : vector<16xf32> to vector<16x1xf32>
    %228 = vector.broadcast %227 : vector<16x1xf32> to vector<16x16xf32>
    %229 = arith.subf %225, %228 : vector<16x16xf32>
    %230 = math.exp %229 : vector<16x16xf32>
    %cst_103 = arith.constant dense<0.000000e+00> : vector<16xf32>
    %231 = vector.multi_reduction <add>, %230, %cst_103 [1] : vector<16x16xf32> to vector<16xf32>
    %232 = vector.shape_cast %231 : vector<16xf32> to vector<16x1xf32>
    %233 = tpu.reciprocal %232 {approx = true} : vector<16x1xf32> -> vector<16x1xf32>
    %234 = vector.broadcast %233 : vector<16x1xf32> to vector<16x16xf32>
    %235 = arith.mulf %230, %234 : vector<16x16xf32>
    %cst_104 = arith.constant dense<0.000000e+00> : vector<16x8xf32>
    %236 = tpu.matmul %235, %223, %cst_104 {dimension_numbers = #tpu.dot_dimension_numbers<[1], [0], [0], [1], [0, 0, 1, 1], [], []>} : vector<16x16xf32>, vector<16x8xf32>, vector<16x8xf32> -> vector<16x8xf32>
    %237 = vector.extract_strided_slice %204 {offsets = [0, 16], sizes = [16, 8], strides = [1, 1]} : vector<16x96xf32> to vector<16x8xf32>
    %238 = vector.extract_strided_slice %204 {offsets = [0, 48], sizes = [16, 8], strides = [1, 1]} : vector<16x96xf32> to vector<16x8xf32>
    %239 = vector.extract_strided_slice %204 {offsets = [0, 80], sizes = [16, 8], strides = [1, 1]} : vector<16x96xf32> to vector<16x8xf32>
    %cst_105 = arith.constant dense<0.000000e+00> : vector<16x16xf32>
    %240 = tpu.matmul %237, %238, %cst_105 {dimension_numbers = #tpu.dot_dimension_numbers<[1], [1], [0], [0], [0, 0, 1, 0], [], []>} : vector<16x8xf32>, vector<16x8xf32>, vector<16x16xf32> -> vector<16x16xf32>
    %241 = arith.addf %240, %5 : vector<16x16xf32>
    %cst_106 = arith.constant dense<0xFF800000> : vector<16xf32>
    %242 = vector.multi_reduction <maximumf>, %241, %cst_106 [1] : vector<16x16xf32> to vector<16xf32>
    %243 = vector.shape_cast %242 : vector<16xf32> to vector<16x1xf32>
    %244 = vector.broadcast %243 : vector<16x1xf32> to vector<16x16xf32>
    %245 = arith.subf %241, %244 : vector<16x16xf32>
    %246 = math.exp %245 : vector<16x16xf32>
    %cst_107 = arith.constant dense<0.000000e+00> : vector<16xf32>
    %247 = vector.multi_reduction <add>, %246, %cst_107 [1] : vector<16x16xf32> to vector<16xf32>
    %248 = vector.shape_cast %247 : vector<16xf32> to vector<16x1xf32>
    %249 = tpu.reciprocal %248 {approx = true} : vector<16x1xf32> -> vector<16x1xf32>
    %250 = vector.broadcast %249 : vector<16x1xf32> to vector<16x16xf32>
    %251 = arith.mulf %246, %250 : vector<16x16xf32>
    %cst_108 = arith.constant dense<0.000000e+00> : vector<16x8xf32>
    %252 = tpu.matmul %251, %239, %cst_108 {dimension_numbers = #tpu.dot_dimension_numbers<[1], [0], [0], [1], [0, 0, 1, 1], [], []>} : vector<16x16xf32>, vector<16x8xf32>, vector<16x8xf32> -> vector<16x8xf32>
    %253 = vector.extract_strided_slice %204 {offsets = [0, 24], sizes = [16, 8], strides = [1, 1]} : vector<16x96xf32> to vector<16x8xf32>
    %254 = vector.extract_strided_slice %204 {offsets = [0, 56], sizes = [16, 8], strides = [1, 1]} : vector<16x96xf32> to vector<16x8xf32>
    %255 = vector.extract_strided_slice %204 {offsets = [0, 88], sizes = [16, 8], strides = [1, 1]} : vector<16x96xf32> to vector<16x8xf32>
    %cst_109 = arith.constant dense<0.000000e+00> : vector<16x16xf32>
    %256 = tpu.matmul %253, %254, %cst_109 {dimension_numbers = #tpu.dot_dimension_numbers<[1], [1], [0], [0], [0, 0, 1, 0], [], []>} : vector<16x8xf32>, vector<16x8xf32>, vector<16x16xf32> -> vector<16x16xf32>
    %257 = arith.addf %256, %5 : vector<16x16xf32>
    %cst_110 = arith.constant dense<0xFF800000> : vector<16xf32>
    %258 = vector.multi_reduction <maximumf>, %257, %cst_110 [1] : vector<16x16xf32> to vector<16xf32>
    %259 = vector.shape_cast %258 : vector<16xf32> to vector<16x1xf32>
    %260 = vector.broadcast %259 : vector<16x1xf32> to vector<16x16xf32>
    %261 = arith.subf %257, %260 : vector<16x16xf32>
    %262 = math.exp %261 : vector<16x16xf32>
    %cst_111 = arith.constant dense<0.000000e+00> : vector<16xf32>
    %263 = vector.multi_reduction <add>, %262, %cst_111 [1] : vector<16x16xf32> to vector<16xf32>
    %264 = vector.shape_cast %263 : vector<16xf32> to vector<16x1xf32>
    %265 = tpu.reciprocal %264 {approx = true} : vector<16x1xf32> -> vector<16x1xf32>
    %266 = vector.broadcast %265 : vector<16x1xf32> to vector<16x16xf32>
    %267 = arith.mulf %262, %266 : vector<16x16xf32>
    %cst_112 = arith.constant dense<0.000000e+00> : vector<16x8xf32>
    %268 = tpu.matmul %267, %255, %cst_112 {dimension_numbers = #tpu.dot_dimension_numbers<[1], [0], [0], [1], [0, 0, 1, 1], [], []>} : vector<16x16xf32>, vector<16x8xf32>, vector<16x8xf32> -> vector<16x8xf32>
    %269 = tpu.concatenate %220, %236, %252, %268 in 1 : vector<16x8xf32>, vector<16x8xf32>, vector<16x8xf32>, vector<16x8xf32> -> vector<16x32xf32>
    %c1_113 = arith.constant 1 : index
    %c0_114 = arith.constant 0 : index
    %c0_115 = arith.constant 0 : index
    %270 = vector.load %arg7[%c1_113, %c0_114, %c0_115] : memref<2x32x32xf32, #tpu.memory_space<vmem>>, vector<1x32x32xf32>
    %271 = vector.shape_cast %270 : vector<1x32x32xf32> to vector<32x32xf32>
    %cst_116 = arith.constant dense<0.000000e+00> : vector<16x32xf32>
    %272 = tpu.matmul %269, %271, %cst_116 {dimension_numbers = #tpu.dot_dimension_numbers<[1], [0], [0], [1], [0, 0, 1, 1], [], []>} : vector<16x32xf32>, vector<32x32xf32>, vector<16x32xf32> -> vector<16x32xf32>
    %c12 = arith.constant 12 : index
    %c0_117 = arith.constant 0 : index
    %273 = vector.load %arg14[%c12, %c0_117] : memref<23x128xf32, #tpu.memory_space<vmem>>, vector<1x32xf32>
    %274 = vector.broadcast %273 : vector<1x32xf32> to vector<16x32xf32>
    %275 = arith.addf %272, %274 : vector<16x32xf32>
    %276 = arith.addf %182, %275 : vector<16x32xf32>
    %cst_118 = arith.constant dense<0.000000e+00> : vector<16xf32>
    %277 = vector.multi_reduction <add>, %276, %cst_118 [1] : vector<16x32xf32> to vector<16xf32>
    %278 = vector.shape_cast %277 : vector<16xf32> to vector<16x1xf32>
    %cst_119 = arith.constant 3.200000e+01 : f32
    %279 = vector.broadcast %cst_119 : f32 to vector<16x1xf32>
    %280 = arith.divf %278, %279 : vector<16x1xf32>
    %281 = vector.broadcast %280 : vector<16x1xf32> to vector<16x32xf32>
    %282 = arith.subf %276, %281 : vector<16x32xf32>
    %283 = arith.mulf %282, %282 : vector<16x32xf32>
    %cst_120 = arith.constant dense<0.000000e+00> : vector<16xf32>
    %284 = vector.multi_reduction <add>, %283, %cst_120 [1] : vector<16x32xf32> to vector<16xf32>
    %285 = vector.shape_cast %284 : vector<16xf32> to vector<16x1xf32>
    %cst_121 = arith.constant 3.200000e+01 : f32
    %286 = vector.broadcast %cst_121 : f32 to vector<16x1xf32>
    %287 = arith.divf %285, %286 : vector<16x1xf32>
    %288 = vector.broadcast %280 : vector<16x1xf32> to vector<16x32xf32>
    %289 = arith.subf %276, %288 : vector<16x32xf32>
    %cst_122 = arith.constant 9.99999974E-6 : f32
    %290 = vector.broadcast %cst_122 : f32 to vector<16x1xf32>
    %291 = arith.addf %287, %290 : vector<16x1xf32>
    %292 = math.rsqrt %291 : vector<16x1xf32>
    %293 = vector.broadcast %292 : vector<16x1xf32> to vector<16x32xf32>
    %294 = arith.mulf %289, %293 : vector<16x32xf32>
    %c13 = arith.constant 13 : index
    %c0_123 = arith.constant 0 : index
    %295 = vector.load %arg14[%c13, %c0_123] : memref<23x128xf32, #tpu.memory_space<vmem>>, vector<1x32xf32>
    %296 = vector.broadcast %295 : vector<1x32xf32> to vector<16x32xf32>
    %297 = arith.mulf %294, %296 : vector<16x32xf32>
    %c14 = arith.constant 14 : index
    %c0_124 = arith.constant 0 : index
    %298 = vector.load %arg14[%c14, %c0_124] : memref<23x128xf32, #tpu.memory_space<vmem>>, vector<1x32xf32>
    %299 = vector.broadcast %298 : vector<1x32xf32> to vector<16x32xf32>
    %300 = arith.addf %297, %299 : vector<16x32xf32>
    %c1_125 = arith.constant 1 : index
    %c0_126 = arith.constant 0 : index
    %c0_127 = arith.constant 0 : index
    %301 = vector.load %arg8[%c1_125, %c0_126, %c0_127] : memref<2x32x64xf32, #tpu.memory_space<vmem>>, vector<1x32x64xf32>
    %302 = vector.shape_cast %301 : vector<1x32x64xf32> to vector<32x64xf32>
    %cst_128 = arith.constant dense<0.000000e+00> : vector<16x64xf32>
    %303 = tpu.matmul %300, %302, %cst_128 {dimension_numbers = #tpu.dot_dimension_numbers<[1], [0], [0], [1], [0, 0, 1, 1], [], []>} : vector<16x32xf32>, vector<32x64xf32>, vector<16x64xf32> -> vector<16x64xf32>
    %c15 = arith.constant 15 : index
    %c0_129 = arith.constant 0 : index
    %304 = vector.load %arg14[%c15, %c0_129] : memref<23x128xf32, #tpu.memory_space<vmem>>, vector<1x64xf32>
    %305 = vector.broadcast %304 : vector<1x64xf32> to vector<16x64xf32>
    %306 = arith.addf %303, %305 : vector<16x64xf32>
    %cst_130 = arith.constant 0.000000e+00 : f32
    %307 = vector.broadcast %cst_130 : f32 to vector<16x64xf32>
    %308 = arith.maximumf %306, %307 : vector<16x64xf32>
    %c1_131 = arith.constant 1 : index
    %c0_132 = arith.constant 0 : index
    %c0_133 = arith.constant 0 : index
    %309 = vector.load %arg9[%c1_131, %c0_132, %c0_133] : memref<2x64x32xf32, #tpu.memory_space<vmem>>, vector<1x64x32xf32>
    %310 = vector.shape_cast %309 : vector<1x64x32xf32> to vector<64x32xf32>
    %cst_134 = arith.constant dense<0.000000e+00> : vector<16x32xf32>
    %311 = tpu.matmul %308, %310, %cst_134 {dimension_numbers = #tpu.dot_dimension_numbers<[1], [0], [0], [1], [0, 0, 1, 1], [], []>} : vector<16x64xf32>, vector<64x32xf32>, vector<16x32xf32> -> vector<16x32xf32>
    %c16 = arith.constant 16 : index
    %c0_135 = arith.constant 0 : index
    %312 = vector.load %arg14[%c16, %c0_135] : memref<23x128xf32, #tpu.memory_space<vmem>>, vector<1x32xf32>
    %313 = vector.broadcast %312 : vector<1x32xf32> to vector<16x32xf32>
    %314 = arith.addf %311, %313 : vector<16x32xf32>
    %315 = arith.addf %300, %314 : vector<16x32xf32>
    %cst_136 = arith.constant dense<0.000000e+00> : vector<16xf32>
    %316 = vector.multi_reduction <add>, %315, %cst_136 [1] : vector<16x32xf32> to vector<16xf32>
    %317 = vector.shape_cast %316 : vector<16xf32> to vector<16x1xf32>
    %cst_137 = arith.constant 3.200000e+01 : f32
    %318 = vector.broadcast %cst_137 : f32 to vector<16x1xf32>
    %319 = arith.divf %317, %318 : vector<16x1xf32>
    %320 = vector.broadcast %319 : vector<16x1xf32> to vector<16x32xf32>
    %321 = arith.subf %315, %320 : vector<16x32xf32>
    %322 = arith.mulf %321, %321 : vector<16x32xf32>
    %cst_138 = arith.constant dense<0.000000e+00> : vector<16xf32>
    %323 = vector.multi_reduction <add>, %322, %cst_138 [1] : vector<16x32xf32> to vector<16xf32>
    %324 = vector.shape_cast %323 : vector<16xf32> to vector<16x1xf32>
    %cst_139 = arith.constant 3.200000e+01 : f32
    %325 = vector.broadcast %cst_139 : f32 to vector<16x1xf32>
    %326 = arith.divf %324, %325 : vector<16x1xf32>
    %327 = vector.broadcast %319 : vector<16x1xf32> to vector<16x32xf32>
    %328 = arith.subf %315, %327 : vector<16x32xf32>
    %cst_140 = arith.constant 9.99999974E-6 : f32
    %329 = vector.broadcast %cst_140 : f32 to vector<16x1xf32>
    %330 = arith.addf %326, %329 : vector<16x1xf32>
    %331 = math.rsqrt %330 : vector<16x1xf32>
    %332 = vector.broadcast %331 : vector<16x1xf32> to vector<16x32xf32>
    %333 = arith.mulf %328, %332 : vector<16x32xf32>
    %c17 = arith.constant 17 : index
    %c0_141 = arith.constant 0 : index
    %334 = vector.load %arg14[%c17, %c0_141] : memref<23x128xf32, #tpu.memory_space<vmem>>, vector<1x32xf32>
    %335 = vector.broadcast %334 : vector<1x32xf32> to vector<16x32xf32>
    %336 = arith.mulf %333, %335 : vector<16x32xf32>
    %c18 = arith.constant 18 : index
    %c0_142 = arith.constant 0 : index
    %337 = vector.load %arg14[%c18, %c0_142] : memref<23x128xf32, #tpu.memory_space<vmem>>, vector<1x32xf32>
    %338 = vector.broadcast %337 : vector<1x32xf32> to vector<16x32xf32>
    %339 = arith.addf %336, %338 : vector<16x32xf32>
    %340 = vector.broadcast %7 : vector<16x1xf32> to vector<16x32xf32>
    %341 = arith.mulf %339, %340 : vector<16x32xf32>
    %cst_143 = arith.constant 0.562865138 : f32
    %342 = vector.broadcast %cst_143 : f32 to vector<16x32xf32>
    %343 = arith.mulf %342, %198 : vector<16x32xf32>
    %cst_144 = arith.constant 0.437134892 : f32
    %344 = vector.broadcast %cst_144 : f32 to vector<16x32xf32>
    %345 = arith.mulf %344, %341 : vector<16x32xf32>
    %346 = arith.addf %343, %345 : vector<16x32xf32>
    %cst_145 = arith.constant 6.000000e-01 : f32
    %347 = vector.broadcast %cst_145 : f32 to vector<16x32xf32>
    %348 = arith.mulf %347, %346 : vector<16x32xf32>
    %cst_146 = arith.constant 4.000000e-01 : f32
    %349 = vector.broadcast %cst_146 : f32 to vector<16x32xf32>
    %350 = arith.mulf %349, %187 : vector<16x32xf32>
    %351 = arith.addf %348, %350 : vector<16x32xf32>
    %352 = tpu.iota {dimensions = array<i32: 0>} : vector<2x16xi32>
    %353 = tpu.iota {dimensions = array<i32: 1>} : vector<2x16xi32>
    %c8_i32 = arith.constant 8 : i32
    %354 = vector.broadcast %c8_i32 : i32 to vector<2x16xi32>
    %355 = arith.muli %352, %354 : vector<2x16xi32>
    %356 = arith.cmpi sge, %353, %355 : vector<2x16xi32>
    %c1_i32 = arith.constant 1 : i32
    %357 = vector.broadcast %c1_i32 : i32 to vector<2x16xi32>
    %358 = arith.addi %352, %357 : vector<2x16xi32>
    %c8_i32_147 = arith.constant 8 : i32
    %359 = vector.broadcast %c8_i32_147 : i32 to vector<2x16xi32>
    %360 = arith.muli %358, %359 : vector<2x16xi32>
    %361 = arith.cmpi slt, %353, %360 : vector<2x16xi32>
    %362 = arith.andi %356, %361 : vector<2x16xi1>
    %363 = arith.extui %362 : vector<2x16xi1> to vector<2x16xi32>
    %364 = arith.sitofp %363 : vector<2x16xi32> to vector<2x16xf32>
    %365 = tpu.concatenate %198, %341, %351 in 1 : vector<16x32xf32>, vector<16x32xf32>, vector<16x32xf32> -> vector<16x96xf32>
    %cst_148 = arith.constant dense<0.000000e+00> : vector<2x96xf32>
    %366 = tpu.matmul %364, %365, %cst_148 {dimension_numbers = #tpu.dot_dimension_numbers<[1], [0], [0], [1], [0, 0, 1, 1], [], []>} : vector<2x16xf32>, vector<16x96xf32>, vector<2x96xf32> -> vector<2x96xf32>
    %c0_149 = arith.constant 0 : index
    %c0_150 = arith.constant 0 : index
    %367 = vector.load %arg11[%c0_149, %c0_150] : memref<96x96xf32, #tpu.memory_space<vmem>>, vector<96x96xf32>
    %cst_151 = arith.constant dense<0.000000e+00> : vector<2x96xf32>
    %368 = tpu.matmul %366, %367, %cst_151 {dimension_numbers = #tpu.dot_dimension_numbers<[1], [0], [0], [1], [0, 0, 1, 1], [], []>} : vector<2x96xf32>, vector<96x96xf32>, vector<2x96xf32> -> vector<2x96xf32>
    %c20 = arith.constant 20 : index
    %c0_152 = arith.constant 0 : index
    %369 = vector.load %arg14[%c20, %c0_152] : memref<23x128xf32, #tpu.memory_space<vmem>>, vector<1x96xf32>
    %370 = vector.broadcast %369 : vector<1x96xf32> to vector<2x96xf32>
    %371 = arith.addf %368, %370 : vector<2x96xf32>
    %cst_153 = arith.constant 0.000000e+00 : f32
    %372 = vector.broadcast %cst_153 : f32 to vector<2x96xf32>
    %373 = arith.maximumf %371, %372 : vector<2x96xf32>
    %c0_154 = arith.constant 0 : index
    %c0_155 = arith.constant 0 : index
    %374 = vector.load %arg12[%c0_154, %c0_155] : memref<96x48xf32, #tpu.memory_space<vmem>>, vector<96x48xf32>
    %cst_156 = arith.constant dense<0.000000e+00> : vector<2x48xf32>
    %375 = tpu.matmul %373, %374, %cst_156 {dimension_numbers = #tpu.dot_dimension_numbers<[1], [0], [0], [1], [0, 0, 1, 1], [], []>} : vector<2x96xf32>, vector<96x48xf32>, vector<2x48xf32> -> vector<2x48xf32>
    %c21 = arith.constant 21 : index
    %c0_157 = arith.constant 0 : index
    %376 = vector.load %arg14[%c21, %c0_157] : memref<23x128xf32, #tpu.memory_space<vmem>>, vector<1x48xf32>
    %377 = vector.broadcast %376 : vector<1x48xf32> to vector<2x48xf32>
    %378 = arith.addf %375, %377 : vector<2x48xf32>
    %cst_158 = arith.constant 0.000000e+00 : f32
    %379 = vector.broadcast %cst_158 : f32 to vector<2x48xf32>
    %380 = arith.maximumf %378, %379 : vector<2x48xf32>
    %c0_159 = arith.constant 0 : index
    %c0_160 = arith.constant 0 : index
    %381 = vector.load %arg13[%c0_159, %c0_160] : memref<48x128xf32, #tpu.memory_space<vmem>>, vector<48x128xf32>
    %cst_161 = arith.constant dense<0.000000e+00> : vector<2x128xf32>
    %382 = tpu.matmul %380, %381, %cst_161 {dimension_numbers = #tpu.dot_dimension_numbers<[1], [0], [0], [1], [0, 0, 1, 1], [], []>} : vector<2x48xf32>, vector<48x128xf32>, vector<2x128xf32> -> vector<2x128xf32>
    %c22 = arith.constant 22 : index
    %c0_162 = arith.constant 0 : index
    %383 = vector.load %arg14[%c22, %c0_162] : memref<23x128xf32, #tpu.memory_space<vmem>>, vector<1x128xf32>
    %384 = vector.broadcast %383 : vector<1x128xf32> to vector<2x128xf32>
    %385 = arith.addf %382, %384 : vector<2x128xf32>
    %c0_163 = arith.constant 0 : index
    %c0_164 = arith.constant 0 : index
    %386 = vector.load %arg15[%c0_163, %c0_164] : memref<2x128xf32, #tpu.memory_space<vmem>>, vector<2x128xf32>
    tpu.vector_store %arg15[%c0_163, %c0_164], %385 {strides = array<i32>} : memref<2x128xf32, #tpu.memory_space<vmem>>, vector<2x128xf32>,
    return
  }
  func.func @transform_0(%arg0: i32) -> (i32, i32, i32) {
    %c0_i32 = arith.constant 0 : i32
    %c0_i32_0 = arith.constant 0 : i32
    %c0_i32_1 = arith.constant 0 : i32
    return %arg0, %c0_i32, %c0_i32_0 : i32, i32, i32
  }
  func.func @transform_1(%arg0: i32) -> (i32, i32, i32) {
    %c0_i32 = arith.constant 0 : i32
    %c0_i32_0 = arith.constant 0 : i32
    %c0_i32_1 = arith.constant 0 : i32
    return %arg0, %c0_i32, %c0_i32_0 : i32, i32, i32
  }
  func.func @transform_2(%arg0: i32) -> (i32, i32, i32) {
    %c0_i32 = arith.constant 0 : i32
    %c0_i32_0 = arith.constant 0 : i32
    %c0_i32_1 = arith.constant 0 : i32
    return %arg0, %c0_i32, %c0_i32_0 : i32, i32, i32
  }
  func.func @transform_3(%arg0: i32) -> (i32, i32, i32) {
    %c0_i32 = arith.constant 0 : i32
    %c0_i32_0 = arith.constant 0 : i32
    %c0_i32_1 = arith.constant 0 : i32
    return %arg0, %c0_i32, %c0_i32_0 : i32, i32, i32
  }
  func.func @transform_4(%arg0: i32) -> (i32, i32, i32) {
    %c0_i32 = arith.constant 0 : i32
    %c0_i32_0 = arith.constant 0 : i32
    %c0_i32_1 = arith.constant 0 : i32
    %c0_i32_2 = arith.constant 0 : i32
    return %c0_i32, %c0_i32_0, %c0_i32_1 : i32, i32, i32
  }
  func.func @transform_5(%arg0: i32) -> (i32, i32, i32) {
    %c0_i32 = arith.constant 0 : i32
    %c0_i32_0 = arith.constant 0 : i32
    %c0_i32_1 = arith.constant 0 : i32
    %c0_i32_2 = arith.constant 0 : i32
    return %c0_i32, %c0_i32_0, %c0_i32_1 : i32, i32, i32
  }
  func.func @transform_6(%arg0: i32) -> (i32, i32, i32) {
    %c0_i32 = arith.constant 0 : i32
    %c0_i32_0 = arith.constant 0 : i32
    %c0_i32_1 = arith.constant 0 : i32
    %c0_i32_2 = arith.constant 0 : i32
    return %c0_i32, %c0_i32_0, %c0_i32_1 : i32, i32, i32
  }
  func.func @transform_7(%arg0: i32) -> (i32, i32, i32) {
    %c0_i32 = arith.constant 0 : i32
    %c0_i32_0 = arith.constant 0 : i32
    %c0_i32_1 = arith.constant 0 : i32
    %c0_i32_2 = arith.constant 0 : i32
    return %c0_i32, %c0_i32_0, %c0_i32_1 : i32, i32, i32
  }
  func.func @transform_8(%arg0: i32) -> (i32, i32, i32) {
    %c0_i32 = arith.constant 0 : i32
    %c0_i32_0 = arith.constant 0 : i32
    %c0_i32_1 = arith.constant 0 : i32
    %c0_i32_2 = arith.constant 0 : i32
    return %c0_i32, %c0_i32_0, %c0_i32_1 : i32, i32, i32
  }
  func.func @transform_9(%arg0: i32) -> (i32, i32, i32) {
    %c0_i32 = arith.constant 0 : i32
    %c0_i32_0 = arith.constant 0 : i32
    %c0_i32_1 = arith.constant 0 : i32
    %c0_i32_2 = arith.constant 0 : i32
    return %c0_i32, %c0_i32_0, %c0_i32_1 : i32, i32, i32
  }
  func.func @transform_10(%arg0: i32) -> (i32, i32) {
    %c0_i32 = arith.constant 0 : i32
    %c0_i32_0 = arith.constant 0 : i32
    %c0_i32_1 = arith.constant 0 : i32
    return %c0_i32, %c0_i32_0 : i32, i32
  }
  func.func @transform_11(%arg0: i32) -> (i32, i32) {
    %c0_i32 = arith.constant 0 : i32
    %c0_i32_0 = arith.constant 0 : i32
    %c0_i32_1 = arith.constant 0 : i32
    return %c0_i32, %c0_i32_0 : i32, i32
  }
  func.func @transform_12(%arg0: i32) -> (i32, i32) {
    %c0_i32 = arith.constant 0 : i32
    %c0_i32_0 = arith.constant 0 : i32
    %c0_i32_1 = arith.constant 0 : i32
    return %c0_i32, %c0_i32_0 : i32, i32
  }
  func.func @transform_13(%arg0: i32) -> (i32, i32) {
    %c0_i32 = arith.constant 0 : i32
    %c0_i32_0 = arith.constant 0 : i32
    %c0_i32_1 = arith.constant 0 : i32
    return %c0_i32, %c0_i32_0 : i32, i32
  }
  func.func @transform_14(%arg0: i32) -> (i32, i32) {
    %c0_i32 = arith.constant 0 : i32
    %c0_i32_0 = arith.constant 0 : i32
    return %arg0, %c0_i32 : i32, i32
  }
}

</mosaic_0001>

<llo_original>
// kernel: tpu_custom_call.1
$region0: #{tpu_custom_call.1}
  #allocation0 [shape = 'u32[]', space=smem, size = 0x4, offset = 0x4, fixed_abs, tag = 'smem constant byte address 0x4 - core index']
  #allocation1 [shape = 'u32[144,128]{1,0:T(1,128)}', space=vmem, size = 0x12000, scoped, tag = 'internal scratch']
  %s0 = inlined_call_operand.vmem [shape: f32[1,16,8], index: 0, kind: input, shape index: {}]
  %s1 = inlined_call_operand.hbm [shape: f32[1,16,16], index: 1, kind: input, shape index: {}]
  %s2 = inlined_call_operand.hbm [shape: f32[1,16,16], index: 2, kind: input, shape index: {}]
  %s3 = inlined_call_operand.vmem [shape: f32[1,16,1], index: 3, kind: input, shape index: {}]
  %s4 = inlined_call_operand.hbm [shape: f32[3,8,32], index: 4, kind: input, shape index: {}]
  %s5 = inlined_call_operand.vmem [shape: f32[2,32,96], index: 5, kind: input, shape index: {}]
  %s6 = inlined_call_operand.vmem [shape: f32[2,32,32], index: 6, kind: input, shape index: {}]
  %s7 = inlined_call_operand.vmem [shape: f32[2,32,64], index: 7, kind: input, shape index: {}]
  %s8 = inlined_call_operand.vmem [shape: f32[2,64,32], index: 8, kind: input, shape index: {}]
  %s9 = inlined_call_operand.hbm [shape: f32[1,32,32], index: 9, kind: input, shape index: {}]
  %s10 = inlined_call_operand.vmem [shape: f32[96,96], index: 10, kind: input, shape index: {}]
  %s11 = inlined_call_operand.vmem [shape: f32[96,48], index: 11, kind: input, shape index: {}]
  %s12 = inlined_call_operand.vmem [shape: f32[48,128], index: 12, kind: input, shape index: {}]
  %s13 = inlined_call_operand.hbm [shape: f32[23,128], index: 13, kind: input, shape index: {}]
  %s14 = inlined_call_operand.hbm [shape: f32[2,128], index: 14, kind: output, shape index: {}]
  %s15 = sld [smem:[#allocation0]]
  $region86: #{tpu_custom_call.1} parent=0
    _
  %s17 = ssub.s32 1, %s15
  %s18 = scalar_select 0, %s17, %s15
  $region1: #{tpu_custom_call.1} parent=0
    #allocation2 [shape = 'u8[8192]{0}', space=vmem, size = 0x2000, scoped, tag = 'input window, operand 1, single buffered']
    #allocation3 [shape = 's32[1]{0}', space=sflag, size = 0x4, scoped, tag = 'scoped memory for tpu_custom_call.1']
    #allocation4 [shape = 's32[1]{0}', space=sflag, size = 0x4, scoped, tag = 'scoped memory for tpu_custom_call.1']
    #allocation5 [shape = 'u8[8192]{0}', space=vmem, size = 0x2000, scoped, tag = 'input window, operand 2, single buffered']
    #allocation6 [shape = 's32[1]{0}', space=sflag, size = 0x4, scoped, tag = 'scoped memory for tpu_custom_call.1']
    #allocation7 [shape = 'u8[12288]{0}', space=vmem, size = 0x3000, scoped, tag = 'input window, operand 4, single buffered']
    #allocation8 [shape = 'u8[16384]{0}', space=vmem, size = 0x4000, scoped, tag = 'input window, operand 9, single buffered']
    #allocation9 [shape = 's32[1]{0}', space=sflag, size = 0x4, scoped, tag = 'scoped memory for tpu_custom_call.1']
    #allocation10 [shape = 'u8[12288]{0}', space=vmem, size = 0x3000, scoped, tag = 'input window, operand 13, single buffered']
    #allocation11 [shape = 'u8[1024]{0}', space=vmem, size = 0x400, scoped, tag = 'output window, operand 0, single buffered']
    %19 = vsyncpa [#allocation3], 0
    %20 = vsyncpa [#allocation6], 0
    %21 = vsyncpa [#allocation9], 0
    %22 = vsyncpa [#allocation4], 0
    // Predicated region
    $region2: #{tpu_custom_call.1} parent=1 // pred_check
      _
    $region3: #{tpu_custom_call.1} parent=1 // pred_check_branch
      %24 = sbr.rel (0) target = $region5
    $region4: #{tpu_custom_call.1} parent=1 // pred_region
      _
    $region5: #{tpu_custom_call.1} parent=1 // pred_fallthru
      _
    // Predicated region
    $region6: #{tpu_custom_call.1} parent=1 // pred_check
      _
    $region7: #{tpu_custom_call.1} parent=1 // pred_check_branch
      %26 = sbr.rel (0) target = $region9
    $region8: #{tpu_custom_call.1} parent=1 // pred_region
      %s28 = ssub.s32 256, 256
      %29 = vsyncadd [#allocation3], %s28
      %s30 = sshll.u32 [#allocation2], 4
      %s31 = int_to_ptr.vmem [resolvable:$true] %s30
      %36 = dma.hbm_to_vmem [thread:$0]  %s1, 256, %s31, [#allocation3], 128, 128, 8
    $region9: #{tpu_custom_call.1} parent=1 // pred_fallthru
      _
    // Predicated region
    $region10: #{tpu_custom_call.1} parent=1 // pred_check
      _
    $region11: #{tpu_custom_call.1} parent=1 // pred_check_branch
      %38 = sbr.rel (0) target = $region13
    $region12: #{tpu_custom_call.1} parent=1 // pred_region
      %s40 = ssub.s32 256, 256
      %41 = vsyncadd [#allocation6], %s40
      %s42 = sshll.u32 [#allocation5], 4
      %s43 = int_to_ptr.vmem [resolvable:$true] %s42
      %48 = dma.hbm_to_vmem [thread:$0]  %s2, 256, %s43, [#allocation6], 128, 128, 8
    $region13: #{tpu_custom_call.1} parent=1 // pred_fallthru
      _
    // Predicated region
    $region14: #{tpu_custom_call.1} parent=1 // pred_check
      _
    $region15: #{tpu_custom_call.1} parent=1 // pred_check_branch
      %50 = sbr.rel (0) target = $region17
    $region16: #{tpu_custom_call.1} parent=1 // pred_region
      _
    $region17: #{tpu_custom_call.1} parent=1 // pred_fallthru
      _
    // Predicated region
    $region18: #{tpu_custom_call.1} parent=1 // pred_check
      _
    $region19: #{tpu_custom_call.1} parent=1 // pred_check_branch
      %52 = sbr.rel (0) target = $region21
    $region20: #{tpu_custom_call.1} parent=1 // pred_region
      %s54 = ssub.s32 384, 384
      %55 = vsyncadd [#allocation6], %s54
      %s56 = sshll.u32 [#allocation7], 4
      %s57 = int_to_ptr.vmem [resolvable:$true] %s56
      %62 = dma.hbm_to_vmem [thread:$0]  %s4, 384, %s57, [#allocation6], 128, 128, 8
    $region21: #{tpu_custom_call.1} parent=1 // pred_fallthru
      _
    // Predicated region
    $region22: #{tpu_custom_call.1} parent=1 // pred_check
      _
    $region23: #{tpu_custom_call.1} parent=1 // pred_check_branch
      %64 = sbr.rel (0) target = $region25
    $region24: #{tpu_custom_call.1} parent=1 // pred_region
      _
    $region25: #{tpu_custom_call.1} parent=1 // pred_fallthru
      _
    // Predicated region
    $region26: #{tpu_custom_call.1} parent=1 // pred_check
      _
    $region27: #{tpu_custom_call.1} parent=1 // pred_check_branch
      %66 = sbr.rel (0) target = $region29
    $region28: #{tpu_custom_call.1} parent=1 // pred_region
      _
    $region29: #{tpu_custom_call.1} parent=1 // pred_fallthru
      _
    // Predicated region
    $region30: #{tpu_custom_call.1} parent=1 // pred_check
      _
    $region31: #{tpu_custom_call.1} parent=1 // pred_check_branch
      %68 = sbr.rel (0) target = $region33
    $region32: #{tpu_custom_call.1} parent=1 // pred_region
      _
    $region33: #{tpu_custom_call.1} parent=1 // pred_fallthru
      _
    // Predicated region
    $region34: #{tpu_custom_call.1} parent=1 // pred_check
      _
    $region35: #{tpu_custom_call.1} parent=1 // pred_check_branch
      %70 = sbr.rel (0) target = $region37
    $region36: #{tpu_custom_call.1} parent=1 // pred_region
      _
    $region37: #{tpu_custom_call.1} parent=1 // pred_fallthru
      _
    // Predicated region
    $region38: #{tpu_custom_call.1} parent=1 // pred_check
      _
    $region39: #{tpu_custom_call.1} parent=1 // pred_check_branch
      %72 = sbr.rel (0) target = $region41
    $region40: #{tpu_custom_call.1} parent=1 // pred_region
      %s74 = ssub.s32 512, 512
      %75 = vsyncadd [#allocation9], %s74
      %s76 = sshll.u32 [#allocation8], 4
      %s77 = int_to_ptr.vmem [resolvable:$true] %s76
      %82 = dma.hbm_to_vmem [thread:$0]  %s9, 512, %s77, [#allocation9], 128, 128, 8
    $region41: #{tpu_custom_call.1} parent=1 // pred_fallthru
      _
    // Predicated region
    $region42: #{tpu_custom_call.1} parent=1 // pred_check
      _
    $region43: #{tpu_custom_call.1} parent=1 // pred_check_branch
      %84 = sbr.rel (0) target = $region45
    $region44: #{tpu_custom_call.1} parent=1 // pred_region
      _
    $region45: #{tpu_custom_call.1} parent=1 // pred_fallthru
      _
    // Predicated region
    $region46: #{tpu_custom_call.1} parent=1 // pred_check
      _
    $region47: #{tpu_custom_call.1} parent=1 // pred_check_branch
      %86 = sbr.rel (0) target = $region49
    $region48: #{tpu_custom_call.1} parent=1 // pred_region
      _
    $region49: #{tpu_custom_call.1} parent=1 // pred_fallthru
      _
    // Predicated region
    $region50: #{tpu_custom_call.1} parent=1 // pred_check
      _
    $region51: #{tpu_custom_call.1} parent=1 // pred_check_branch
      %88 = sbr.rel (0) target = $region53
    $region52: #{tpu_custom_call.1} parent=1 // pred_region
      _
    $region53: #{tpu_custom_call.1} parent=1 // pred_fallthru
      _
    // Predicated region
    $region54: #{tpu_custom_call.1} parent=1 // pred_check
      _
    $region55: #{tpu_custom_call.1} parent=1 // pred_check_branch
      %90 = sbr.rel (0) target = $region57
    $region56: #{tpu_custom_call.1} parent=1 // pred_region
      %s92 = ssub.s32 384, 384
      %93 = vsyncadd [#allocation9], %s92
      %s94 = sshll.u32 [#allocation10], 4
      %s95 = int_to_ptr.vmem [resolvable:$true] %s94
      %100 = dma.hbm_to_vmem [thread:$0]  %s13, 384, %s95, [#allocation9], 128, 128, 8
    $region57: #{tpu_custom_call.1} parent=1 // pred_fallthru
      _
    // Predicated region
    $region58: #{tpu_custom_call.1} parent=1 // pred_check
      _
    $region59: #{tpu_custom_call.1} parent=1 // pred_check_branch
      %102 = sbr.rel (0) target = $region61
    $region60: #{tpu_custom_call.1} parent=1 // pred_region
      %103 = dma.done [#allocation3], 256
    $region61: #{tpu_custom_call.1} parent=1 // pred_fallthru
      _
    // Predicated region
    $region62: #{tpu_custom_call.1} parent=1 // pred_check
      _
    $region63: #{tpu_custom_call.1} parent=1 // pred_check_branch
      %105 = sbr.rel (0) target = $region65
    $region64: #{tpu_custom_call.1} parent=1 // pred_region
      %106 = dma.done [#allocation6], 256
    $region65: #{tpu_custom_call.1} parent=1 // pred_fallthru
      _
    // Predicated region
    $region66: #{tpu_custom_call.1} parent=1 // pred_check
      _
    $region67: #{tpu_custom_call.1} parent=1 // pred_check_branch
      %108 = sbr.rel (0) target = $region69
    $region68: #{tpu_custom_call.1} parent=1 // pred_region
      %109 = dma.done [#allocation6], 384
    $region69: #{tpu_custom_call.1} parent=1 // pred_fallthru
      _
    // Predicated region
    $region70: #{tpu_custom_call.1} parent=1 // pred_check
      _
    $region71: #{tpu_custom_call.1} parent=1 // pred_check_branch
      %111 = sbr.rel (0) target = $region73
    $region72: #{tpu_custom_call.1} parent=1 // pred_region
      %112 = dma.done [#allocation9], 512
    $region73: #{tpu_custom_call.1} parent=1 // pred_fallthru
      _
    // Predicated region
    $region74: #{tpu_custom_call.1} parent=1 // pred_check
      _
    $region75: #{tpu_custom_call.1} parent=1 // pred_check_branch
      %114 = sbr.rel (0) target = $region77
    $region76: #{tpu_custom_call.1} parent=1 // pred_region
      %115 = dma.done [#allocation9], 384
    $region77: #{tpu_custom_call.1} parent=1 // pred_fallthru
      _
    %v116 = vld [vmem:[%s0] sm:$0xff]
    %v117 = vld [vmem:[%s0 + $0x8] sm:$0xff]
    %v118 = vld [vmem:[#allocation2] sm:$0xff]
    %v119 = vld [vmem:[#allocation2 + $0x8] sm:$0xff]
    %v120 = vld [vmem:[#allocation5] sm:$0xff]
    %v121 = vld [vmem:[#allocation5 + $0x8] sm:$0xff]
    %v122 = vld [vmem:[%s3] sm:$0xff]
    %v123 = vld [vmem:[%s3 + $0x8] sm:$0xff]
    %vm124 = vcmask 130048
    %v126 = vsel %vm124, %v118, 0
    %v129 = vsel %vm124, %v119, 0
    %131 = vmatprep.subr.mxu0 0.0
    %132 = vmatpush1.msra.mxu0 %v118
    %133 = vmatprep.subr.mxu0 0.0
    %134 = vmatpush1.msra.mxu0 %v119
    %135 = vmatprep.subr.mxu0 0.0
    %136 = vmatpush1.msra.mxu0 0.0
    %137 = vmatprep.subr.mxu0 0.0
    %138 = vmatpush1.msra.mxu0 0.0
    %139 = vmatprep.subr.mxu0 0.0
    %140 = vmatpush1.msra.mxu0 0.0
    %141 = vmatprep.subr.mxu0 0.0
    %142 = vmatpush1.msra.mxu0 0.0
    %143 = vmatprep.subr.mxu0 0.0
    %144 = vmatpush1.msra.mxu0 0.0
    %145 = vmatprep.subr.mxu0 0.0
    %146 = vmatpush1.msra.mxu0 0.0
    %147 = vmatprep.subr.mxu0 0.0
    %148 = vmatpush1.msra.mxu0 0.0
    %149 = vmatprep.subr.mxu0 0.0
    %150 = vmatpush1.msra.mxu0 0.0
    %151 = vmatprep.subr.mxu0 0.0
    %152 = vmatpush1.msra.mxu0 0.0
    %153 = vmatprep.subr.mxu0 0.0
    %154 = vmatpush1.msra.mxu0 0.0
    %155 = vmatprep.subr.mxu0 0.0
    %156 = vmatpush1.msra.mxu0 0.0
    %157 = vmatprep.subr.mxu0 0.0
    %158 = vmatpush1.msra.mxu0 0.0
    %159 = vmatprep.subr.mxu0 0.0
    %160 = vmatpush1.msra.mxu0 0.0
    %161 = vmatprep.subr.mxu0 0.0
    %162 = vmatpush1.msra.mxu0 0.0
    %163 = vmatprep.subr.mxu0 0.0
    %164 = vmatpush1.msra.mxu0 0.0
    %165 = vmatprep.subr.mxu0 0.0
    %166 = vmatpush1.msra.mxu0 0.0
    %167 = vmatprep.subr.mxu0 0.0
    %168 = vmatpush1.msra.mxu0 0.0
    %169 = vmatprep.subr.mxu0 0.0
    %170 = vmatpush1.msra.mxu0 0.0
    %171 = vmatprep.subr.mxu0 0.0
    %172 = vmatpush1.msra.mxu0 0.0
    %173 = vmatprep.subr.mxu0 0.0
    %174 = vmatpush1.msra.mxu0 0.0
    %175 = vmatprep.subr.mxu0 0.0
    %176 = vmatpush1.msra.mxu0 0.0
    %177 = vmatprep.subr.mxu0 0.0
    %178 = vmatpush1.msra.mxu0 0.0
    %179 = vmatprep.subr.mxu0 0.0
    %180 = vmatpush1.msra.mxu0 0.0
    %181 = vmatprep.subr.mxu0 0.0
    %182 = vmatpush1.msra.mxu0 0.0
    %183 = vmatprep.subr.mxu0 0.0
    %184 = vmatpush1.msra.mxu0 0.0
    %185 = vmatprep.subr.mxu0 0.0
    %186 = vmatpush1.msra.mxu0 0.0
    %187 = vmatprep.subr.mxu0 0.0
    %188 = vmatpush1.msra.mxu0 0.0
    %189 = vmatprep.subr.mxu0 0.0
    %190 = vmatpush1.msra.mxu0 0.0
    %191 = vmatprep.subr.mxu0 0.0
    %192 = vmatpush1.msra.mxu0 0.0
    %193 = vmatprep.subr.mxu0 0.0
    %194 = vmatpush1.msra.mxu0 0.0
    %195 = vmatprep.mubr.f32.mxu0 0.0
    %196 = vmatmul.mubr.f32.gmra.mrb[0].mxu0 %v126
    %v197 = vpop.f32.mrb[0].mxu0
    %v198 = vadd.f32 0.0, %v197
    %v199 = vpop.f32.mrb[0].mxu0
    %200 = vmatprep.mubr.f32.mxu0 0.0
    %201 = vmatmul.mubr.f32.gmra.mrb[0].mxu0 %v129
    %v202 = vpop.f32.mrb[0].mxu0
    %v203 = vadd.f32 0.0, %v202
    %v204 = vpop.f32.mrb[0].mxu0
    %205 = vdwg.mxu0
    %v206 = vld [vmem:[#allocation7] sm:$0xff]
    %v207 = vld [vmem:[#allocation10] sm:$0x1]
    %v208 = vlaneseq
    %v209 = vshrl.u32 %v208, 7
    %v210 = vsub.s32 0, %v209
    %v211 = vrot.slane %v207, %v210
    %vm212 = vcmask 64512
    %v214 = vsel %vm212, %v116, 0
    %v217 = vsel %vm212, %v117, 0
    %219 = vmatprep.subr.mxu0 0.0
    %220 = vmatpush1.msra.mxu0 %v206
    %221 = vmatprep.subr.mxu0 0.0
    %222 = vmatpush1.msra.mxu0 0.0
    %223 = vmatprep.subr.mxu0 0.0
    %224 = vmatpush1.msra.mxu0 0.0
    %225 = vmatprep.subr.mxu0 0.0
    %226 = vmatpush1.msra.mxu0 0.0
    %227 = vmatprep.subr.mxu0 0.0
    %228 = vmatpush1.msra.mxu0 0.0
    %229 = vmatprep.subr.mxu0 0.0
    %230 = vmatpush1.msra.mxu0 0.0
    %231 = vmatprep.subr.mxu0 0.0
    %232 = vmatpush1.msra.mxu0 0.0
    %233 = vmatprep.subr.mxu0 0.0
    %234 = vmatpush1.msra.mxu0 0.0
    %235 = vmatprep.subr.mxu0 0.0
    %236 = vmatpush1.msra.mxu0 0.0
    %237 = vmatprep.subr.mxu0 0.0
    %238 = vmatpush1.msra.mxu0 0.0
    %239 = vmatprep.subr.mxu0 0.0
    %240 = vmatpush1.msra.mxu0 0.0
    %241 = vmatprep.subr.mxu0 0.0
    %242 = vmatpush1.msra.mxu0 0.0
    %243 = vmatprep.subr.mxu0 0.0
    %244 = vmatpush1.msra.mxu0 0.0
    %245 = vmatprep.subr.mxu0 0.0
    %246 = vmatpush1.msra.mxu0 0.0
    %247 = vmatprep.subr.mxu0 0.0
    %248 = vmatpush1.msra.mxu0 0.0
    %249 = vmatprep.subr.mxu0 0.0
    %250 = vmatpush1.msra.mxu0 0.0
    %251 = vmatprep.subr.mxu0 0.0
    %252 = vmatpush1.msra.mxu0 0.0
    %253 = vmatprep.subr.mxu0 0.0
    %254 = vmatpush1.msra.mxu0 0.0
    %255 = vmatprep.subr.mxu0 0.0
    %256 = vmatpush1.msra.mxu0 0.0
    %257 = vmatprep.subr.mxu0 0.0
    %258 = vmatpush1.msra.mxu0 0.0
    %259 = vmatprep.subr.mxu0 0.0
    %260 = vmatpush1.msra.mxu0 0.0
    %261 = vmatprep.subr.mxu0 0.0
    %262 = vmatpush1.msra.mxu0 0.0
    %263 = vmatprep.subr.mxu0 0.0
    %264 = vmatpush1.msra.mxu0 0.0
    %265 = vmatprep.subr.mxu0 0.0
    %266 = vmatpush1.msra.mxu0 0.0
    %267 = vmatprep.subr.mxu0 0.0
    %268 = vmatpush1.msra.mxu0 0.0
    %269 = vmatprep.subr.mxu0 0.0
    %270 = vmatpush1.msra.mxu0 0.0
    %271 = vmatprep.subr.mxu0 0.0
    %272 = vmatpush1.msra.mxu0 0.0
    %273 = vmatprep.subr.mxu0 0.0
    %274 = vmatpush1.msra.mxu0 0.0
    %275 = vmatprep.subr.mxu0 0.0
    %276 = vmatpush1.msra.mxu0 0.0
    %277 = vmatprep.subr.mxu0 0.0
    %278 = vmatpush1.msra.mxu0 0.0
    %279 = vmatprep.subr.mxu0 0.0
    %280 = vmatpush1.msra.mxu0 0.0
    %281 = vmatprep.subr.mxu0 0.0
    %282 = vmatpush1.msra.mxu0 0.0
    %283 = vmatprep.mubr.f32.mxu0 0.0
    %284 = vmatmul.mubr.f32.gmra.mrb[0].mxu0 %v214
    %v285 = vpop.f32.mrb[0].mxu0
    %v286 = vadd.f32 %v211, %v285
    %v287 = vpop.f32.mrb[0].mxu0
    %288 = vmatprep.mubr.f32.mxu0 0.0
    %289 = vmatmul.mubr.f32.gmra.mrb[0].mxu0 %v217
    %v290 = vpop.f32.mrb[0].mxu0
    %v291 = vadd.f32 %v211, %v290
    %v292 = vpop.f32.mrb[0].mxu0
    %293 = vdwg.mxu0
    %295 = vset.pattern.permute.xlu0 0
    %296 = vperm.xlu0 %295, %v122
    %v297 = vpop.permute.xlu0 %296
    %300 = vset.pattern.permute.xlu0 0
    %301 = vperm.xlu0 %300, %v123
    %v302 = vpop.permute.xlu0 %301
    %v304 = vmul.f32 %v286, %v297
    %v305 = vmul.f32 %v291, %v302
    %s306 = scalar_lea.vmem [#allocation7], 8
    %v307 = vld [vmem:[%s306] sm:$0xff]
    %308 = vmatprep.subr.mxu0 0.0
    %309 = vmatpush1.msra.mxu0 %v307
    %310 = vmatprep.subr.mxu0 0.0
    %311 = vmatpush1.msra.mxu0 0.0
    %312 = vmatprep.subr.mxu0 0.0
    %313 = vmatpush1.msra.mxu0 0.0
    %314 = vmatprep.subr.mxu0 0.0
    %315 = vmatpush1.msra.mxu0 0.0
    %316 = vmatprep.subr.mxu0 0.0
    %317 = vmatpush1.msra.mxu0 0.0
    %318 = vmatprep.subr.mxu0 0.0
    %319 = vmatpush1.msra.mxu0 0.0
    %320 = vmatprep.subr.mxu0 0.0
    %321 = vmatpush1.msra.mxu0 0.0
    %322 = vmatprep.subr.mxu0 0.0
    %323 = vmatpush1.msra.mxu0 0.0
    %324 = vmatprep.subr.mxu0 0.0
    %325 = vmatpush1.msra.mxu0 0.0
    %326 = vmatprep.subr.mxu0 0.0
    %327 = vmatpush1.msra.mxu0 0.0
    %328 = vmatprep.subr.mxu0 0.0
    %329 = vmatpush1.msra.mxu0 0.0
    %330 = vmatprep.subr.mxu0 0.0
    %331 = vmatpush1.msra.mxu0 0.0
    %332 = vmatprep.subr.mxu0 0.0
    %333 = vmatpush1.msra.mxu0 0.0
    %334 = vmatprep.subr.mxu0 0.0
    %335 = vmatpush1.msra.mxu0 0.0
    %336 = vmatprep.subr.mxu0 0.0
    %337 = vmatpush1.msra.mxu0 0.0
    %338 = vmatprep.subr.mxu0 0.0
    %339 = vmatpush1.msra.mxu0 0.0
    %340 = vmatprep.subr.mxu0 0.0
    %341 = vmatpush1.msra.mxu0 0.0
    %342 = vmatprep.subr.mxu0 0.0
    %343 = vmatpush1.msra.mxu0 0.0
    %344 = vmatprep.subr.mxu0 0.0
    %345 = vmatpush1.msra.mxu0 0.0
    %346 = vmatprep.subr.mxu0 0.0
    %347 = vmatpush1.msra.mxu0 0.0
    %348 = vmatprep.subr.mxu0 0.0
    %349 = vmatpush1.msra.mxu0 0.0
    %350 = vmatprep.subr.mxu0 0.0
    %351 = vmatpush1.msra.mxu0 0.0
    %352 = vmatprep.subr.mxu0 0.0
    %353 = vmatpush1.msra.mxu0 0.0
    %354 = vmatprep.subr.mxu0 0.0
    %355 = vmatpush1.msra.mxu0 0.0
    %356 = vmatprep.subr.mxu0 0.0
    %357 = vmatpush1.msra.mxu0 0.0
    %358 = vmatprep.subr.mxu0 0.0
    %359 = vmatpush1.msra.mxu0 0.0
    %360 = vmatprep.subr.mxu0 0.0
    %361 = vmatpush1.msra.mxu0 0.0
    %362 = vmatprep.subr.mxu0 0.0
    %363 = vmatpush1.msra.mxu0 0.0
    %364 = vmatprep.subr.mxu0 0.0
    %365 = vmatpush1.msra.mxu0 0.0
    %366 = vmatprep.subr.mxu0 0.0
    %367 = vmatpush1.msra.mxu0 0.0
    %368 = vmatprep.subr.mxu0 0.0
    %369 = vmatpush1.msra.mxu0 0.0
    %370 = vmatprep.subr.mxu0 0.0
    %371 = vmatpush1.msra.mxu0 0.0
    %372 = vmatprep.mubr.f32.mxu0 0.0
    %373 = vmatmul.mubr.f32.gmra.mrb[0].mxu0 %v214
    %v374 = vpop.f32.mrb[0].mxu0
    %v375 = vadd.f32 0.0, %v374
    %v376 = vpop.f32.mrb[0].mxu0
    %377 = vmatprep.mubr.f32.mxu0 0.0
    %378 = vmatmul.mubr.f32.gmra.mrb[0].mxu0 %v217
    %v379 = vpop.f32.mrb[0].mxu0
    %v380 = vadd.f32 0.0, %v379
    %v381 = vpop.f32.mrb[0].mxu0
    %382 = vdwg.mxu0
    %v383 = vld [vmem:[#allocation10 + $0x1] sm:$0x1]
    %v384 = vlaneseq
    %v385 = vshrl.u32 %v384, 7
    %v386 = vsub.s32 0, %v385
    %v387 = vrot.slane %v383, %v386
    %388 = vmatprep.subr.mxu0 0.0
    %389 = vmatpush1.msra.mxu0 %v375
    %390 = vmatprep.subr.mxu0 0.0
    %391 = vmatpush1.msra.mxu0 %v380
    %392 = vmatprep.subr.mxu0 0.0
    %393 = vmatpush1.msra.mxu0 0.0
    %394 = vmatprep.subr.mxu0 0.0
    %395 = vmatpush1.msra.mxu0 0.0
    %396 = vmatprep.subr.mxu0 0.0
    %397 = vmatpush1.msra.mxu0 0.0
    %398 = vmatprep.subr.mxu0 0.0
    %399 = vmatpush1.msra.mxu0 0.0
    %400 = vmatprep.subr.mxu0 0.0
    %401 = vmatpush1.msra.mxu0 0.0
    %402 = vmatprep.subr.mxu0 0.0
    %403 = vmatpush1.msra.mxu0 0.0
    %404 = vmatprep.subr.mxu0 0.0
    %405 = vmatpush1.msra.mxu0 0.0
    %406 = vmatprep.subr.mxu0 0.0
    %407 = vmatpush1.msra.mxu0 0.0
    %408 = vmatprep.subr.mxu0 0.0
    %409 = vmatpush1.msra.mxu0 0.0
    %410 = vmatprep.subr.mxu0 0.0
    %411 = vmatpush1.msra.mxu0 0.0
    %412 = vmatprep.subr.mxu0 0.0
    %413 = vmatpush1.msra.mxu0 0.0
    %414 = vmatprep.subr.mxu0 0.0
    %415 = vmatpush1.msra.mxu0 0.0
    %416 = vmatprep.subr.mxu0 0.0
    %417 = vmatpush1.msra.mxu0 0.0
    %418 = vmatprep.subr.mxu0 0.0
    %419 = vmatpush1.msra.mxu0 0.0
    %420 = vmatprep.subr.mxu0 0.0
    %421 = vmatpush1.msra.mxu0 0.0
    %422 = vmatprep.subr.mxu0 0.0
    %423 = vmatpush1.msra.mxu0 0.0
    %424 = vmatprep.subr.mxu0 0.0
    %425 = vmatpush1.msra.mxu0 0.0
    %426 = vmatprep.subr.mxu0 0.0
    %427 = vmatpush1.msra.mxu0 0.0
    %428 = vmatprep.subr.mxu0 0.0
    %429 = vmatpush1.msra.mxu0 0.0
    %430 = vmatprep.subr.mxu0 0.0
    %431 = vmatpush1.msra.mxu0 0.0
    %432 = vmatprep.subr.mxu0 0.0
    %433 = vmatpush1.msra.mxu0 0.0
    %434 = vmatprep.subr.mxu0 0.0
    %435 = vmatpush1.msra.mxu0 0.0
    %436 = vmatprep.subr.mxu0 0.0
    %437 = vmatpush1.msra.mxu0 0.0
    %438 = vmatprep.subr.mxu0 0.0
    %439 = vmatpush1.msra.mxu0 0.0
    %440 = vmatprep.subr.mxu0 0.0
    %441 = vmatpush1.msra.mxu0 0.0
    %442 = vmatprep.subr.mxu0 0.0
    %443 = vmatpush1.msra.mxu0 0.0
    %444 = vmatprep.subr.mxu0 0.0
    %445 = vmatpush1.msra.mxu0 0.0
    %446 = vmatprep.subr.mxu0 0.0
    %447 = vmatpush1.msra.mxu0 0.0
    %448 = vmatprep.subr.mxu0 0.0
    %449 = vmatpush1.msra.mxu0 0.0
    %450 = vmatprep.subr.mxu0 0.0
    %451 = vmatpush1.msra.mxu0 0.0
    %452 = vmatprep.mubr.f32.mxu0 0.0
    %453 = vmatmul.mubr.f32.gmra.mrb[0].mxu0 %v126
    %v454 = vpop.f32.mrb[0].mxu0
    %v455 = vadd.f32 %v387, %v454
    %v456 = vpop.f32.mrb[0].mxu0
    %457 = vmatprep.mubr.f32.mxu0 0.0
    %458 = vmatmul.mubr.f32.gmra.mrb[0].mxu0 %v129
    %v459 = vpop.f32.mrb[0].mxu0
    %v460 = vadd.f32 %v387, %v459
    %v461 = vpop.f32.mrb[0].mxu0
    %462 = vdwg.mxu0
    %v463 = vmax.f32 %v455, 0.0
    %v464 = vmax.f32 %v460, 0.0
    %s465 = scalar_lea.vmem [#allocation7], 16
    %v466 = vld [vmem:[%s465] sm:$0xff]
    %467 = vmatprep.subr.mxu0 0.0
    %468 = vmatpush1.msra.mxu0 %v466
    %469 = vmatprep.subr.mxu0 0.0
    %470 = vmatpush1.msra.mxu0 0.0
    %471 = vmatprep.subr.mxu0 0.0
    %472 = vmatpush1.msra.mxu0 0.0
    %473 = vmatprep.subr.mxu0 0.0
    %474 = vmatpush1.msra.mxu0 0.0
    %475 = vmatprep.subr.mxu0 0.0
    %476 = vmatpush1.msra.mxu0 0.0
    %477 = vmatprep.subr.mxu0 0.0
    %478 = vmatpush1.msra.mxu0 0.0
    %479 = vmatprep.subr.mxu0 0.0
    %480 = vmatpush1.msra.mxu0 0.0
    %481 = vmatprep.subr.mxu0 0.0
    %482 = vmatpush1.msra.mxu0 0.0
    %483 = vmatprep.subr.mxu0 0.0
    %484 = vmatpush1.msra.mxu0 0.0
    %485 = vmatprep.subr.mxu0 0.0
    %486 = vmatpush1.msra.mxu0 0.0
    %487 = vmatprep.subr.mxu0 0.0
    %488 = vmatpush1.msra.mxu0 0.0
    %489 = vmatprep.subr.mxu0 0.0
    %490 = vmatpush1.msra.mxu0 0.0
    %491 = vmatprep.subr.mxu0 0.0
    %492 = vmatpush1.msra.mxu0 0.0
    %493 = vmatprep.subr.mxu0 0.0
    %494 = vmatpush1.msra.mxu0 0.0
    %495 = vmatprep.subr.mxu0 0.0
    %496 = vmatpush1.msra.mxu0 0.0
    %497 = vmatprep.subr.mxu0 0.0
    %498 = vmatpush1.msra.mxu0 0.0
    %499 = vmatprep.subr.mxu0 0.0
    %500 = vmatpush1.msra.mxu0 0.0
    %501 = vmatprep.subr.mxu0 0.0
    %502 = vmatpush1.msra.mxu0 0.0
    %503 = vmatprep.subr.mxu0 0.0
    %504 = vmatpush1.msra.mxu0 0.0
    %505 = vmatprep.subr.mxu0 0.0
    %506 = vmatpush1.msra.mxu0 0.0
    %507 = vmatprep.subr.mxu0 0.0
    %508 = vmatpush1.msra.mxu0 0.0
    %509 = vmatprep.subr.mxu0 0.0
    %510 = vmatpush1.msra.mxu0 0.0
    %511 = vmatprep.subr.mxu0 0.0
    %512 = vmatpush1.msra.mxu0 0.0
    %513 = vmatprep.subr.mxu0 0.0
    %514 = vmatpush1.msra.mxu0 0.0
    %515 = vmatprep.subr.mxu0 0.0
    %516 = vmatpush1.msra.mxu0 0.0
    %517 = vmatprep.subr.mxu0 0.0
    %518 = vmatpush1.msra.mxu0 0.0
    %519 = vmatprep.subr.mxu0 0.0
    %520 = vmatpush1.msra.mxu0 0.0
    %521 = vmatprep.subr.mxu0 0.0
    %522 = vmatpush1.msra.mxu0 0.0
    %523 = vmatprep.subr.mxu0 0.0
    %524 = vmatpush1.msra.mxu0 0.0
    %525 = vmatprep.subr.mxu0 0.0
    %526 = vmatpush1.msra.mxu0 0.0
    %527 = vmatprep.subr.mxu0 0.0
    %528 = vmatpush1.msra.mxu0 0.0
    %529 = vmatprep.subr.mxu0 0.0
    %530 = vmatpush1.msra.mxu0 0.0
    %531 = vmatprep.mubr.f32.mxu0 0.0
    %532 = vmatmul.mubr.f32.gmra.mrb[0].mxu0 %v214
    %v533 = vpop.f32.mrb[0].mxu0
    %v534 = vadd.f32 0.0, %v533
    %v535 = vpop.f32.mrb[0].mxu0
    %536 = vmatprep.mubr.f32.mxu0 0.0
    %537 = vmatmul.mubr.f32.gmra.mrb[0].mxu0 %v217
    %v538 = vpop.f32.mrb[0].mxu0
    %v539 = vadd.f32 0.0, %v538
    %v540 = vpop.f32.mrb[0].mxu0
    %541 = vdwg.mxu0
    %v542 = vld [vmem:[#allocation10 + $0x2] sm:$0x1]
    %v543 = vlaneseq
    %v544 = vshrl.u32 %v543, 7
    %v545 = vsub.s32 0, %v544
    %v546 = vrot.slane %v542, %v545
    %v548 = vsel %vm124, %v198, 0
    %v551 = vsel %vm124, %v203, 0
    %553 = vmatprep.subr.mxu0 0.0
    %554 = vmatpush1.msra.mxu0 %v534
    %555 = vmatprep.subr.mxu0 0.0
    %556 = vmatpush1.msra.mxu0 %v539
    %557 = vmatprep.subr.mxu0 0.0
    %558 = vmatpush1.msra.mxu0 0.0
    %559 = vmatprep.subr.mxu0 0.0
    %560 = vmatpush1.msra.mxu0 0.0
    %561 = vmatprep.subr.mxu0 0.0
    %562 = vmatpush1.msra.mxu0 0.0
    %563 = vmatprep.subr.mxu0 0.0
    %564 = vmatpush1.msra.mxu0 0.0
    %565 = vmatprep.subr.mxu0 0.0
    %566 = vmatpush1.msra.mxu0 0.0
    %567 = vmatprep.subr.mxu0 0.0
    %568 = vmatpush1.msra.mxu0 0.0
    %569 = vmatprep.subr.mxu0 0.0
    %570 = vmatpush1.msra.mxu0 0.0
    %571 = vmatprep.subr.mxu0 0.0
    %572 = vmatpush1.msra.mxu0 0.0
    %573 = vmatprep.subr.mxu0 0.0
    %574 = vmatpush1.msra.mxu0 0.0
    %575 = vmatprep.subr.mxu0 0.0
    %576 = vmatpush1.msra.mxu0 0.0
    %577 = vmatprep.subr.mxu0 0.0
    %578 = vmatpush1.msra.mxu0 0.0
    %579 = vmatprep.subr.mxu0 0.0
    %580 = vmatpush1.msra.mxu0 0.0
    %581 = vmatprep.subr.mxu0 0.0
    %582 = vmatpush1.msra.mxu0 0.0
    %583 = vmatprep.subr.mxu0 0.0
    %584 = vmatpush1.msra.mxu0 0.0
    %585 = vmatprep.subr.mxu0 0.0
    %586 = vmatpush1.msra.mxu0 0.0
    %587 = vmatprep.subr.mxu0 0.0
    %588 = vmatpush1.msra.mxu0 0.0
    %589 = vmatprep.subr.mxu0 0.0
    %590 = vmatpush1.msra.mxu0 0.0
    %591 = vmatprep.subr.mxu0 0.0
    %592 = vmatpush1.msra.mxu0 0.0
    %593 = vmatprep.subr.mxu0 0.0
    %594 = vmatpush1.msra.mxu0 0.0
    %595 = vmatprep.subr.mxu0 0.0
    %596 = vmatpush1.msra.mxu0 0.0
    %597 = vmatprep.subr.mxu0 0.0
    %598 = vmatpush1.msra.mxu0 0.0
    %599 = vmatprep.subr.mxu0 0.0
    %600 = vmatpush1.msra.mxu0 0.0
    %601 = vmatprep.subr.mxu0 0.0
    %602 = vmatpush1.msra.mxu0 0.0
    %603 = vmatprep.subr.mxu0 0.0
    %604 = vmatpush1.msra.mxu0 0.0
    %605 = vmatprep.subr.mxu0 0.0
    %606 = vmatpush1.msra.mxu0 0.0
    %607 = vmatprep.subr.mxu0 0.0
    %608 = vmatpush1.msra.mxu0 0.0
    %609 = vmatprep.subr.mxu0 0.0
    %610 = vmatpush1.msra.mxu0 0.0
    %611 = vmatprep.subr.mxu0 0.0
    %612 = vmatpush1.msra.mxu0 0.0
    %613 = vmatprep.subr.mxu0 0.0
    %614 = vmatpush1.msra.mxu0 0.0
    %615 = vmatprep.subr.mxu0 0.0
    %616 = vmatpush1.msra.mxu0 0.0
    %617 = vmatprep.mubr.f32.mxu0 0.0
    %618 = vmatmul.mubr.f32.gmra.mrb[0].mxu0 %v548
    %v619 = vpop.f32.mrb[0].mxu0
    %v620 = vadd.f32 %v546, %v619
    %v621 = vpop.f32.mrb[0].mxu0
    %622 = vmatprep.mubr.f32.mxu0 0.0
    %623 = vmatmul.mubr.f32.gmra.mrb[0].mxu0 %v551
    %v624 = vpop.f32.mrb[0].mxu0
    %v625 = vadd.f32 %v546, %v624
    %v626 = vpop.f32.mrb[0].mxu0
    %627 = vdwg.mxu0
    %v628 = vmax.f32 %v620, 0.0
    %v629 = vmax.f32 %v625, 0.0
    %v630 = vadd.f32 %v463, %v628
    %v631 = vadd.f32 %v464, %v629
    %v632 = vmul.f32 %v630, 0.5
    %v633 = vmul.f32 %v631, 0.5
    %v634 = vmul.f32 %v632, %v297
    %v635 = vmul.f32 %v633, %v302
    %v636 = vld [vmem:[%s5] sm:$0xff]
    %v637 = vld [vmem:[%s5 + $0x8] sm:$0xff]
    %v638 = vld [vmem:[%s5 + $0x10] sm:$0xff]
    %v639 = vld [vmem:[%s5 + $0x18] sm:$0xff]
    %v640 = vld [vmem:[#allocation10 + $0x3] sm:$0x1]
    %v641 = vlaneseq
    %v642 = vshrl.u32 %v641, 7
    %v643 = vsub.s32 0, %v642
    %v644 = vrot.slane %v640, %v643
    %vm645 = vcmask 261120
    %v647 = vsel %vm645, %v304, 0
    %v650 = vsel %vm645, %v305, 0
    %652 = vmatprep.subr.mxu0 0.0
    %653 = vmatpush1.msra.mxu0 %v636
    %654 = vmatprep.subr.mxu0 0.0
    %655 = vmatpush1.msra.mxu0 %v637
    %656 = vmatprep.subr.mxu0 0.0
    %657 = vmatpush1.msra.mxu0 %v638
    %658 = vmatprep.subr.mxu0 0.0
    %659 = vmatpush1.msra.mxu0 %v639
    %660 = vmatprep.subr.mxu0 0.0
    %661 = vmatpush1.msra.mxu0 0.0
    %662 = vmatprep.subr.mxu0 0.0
    %663 = vmatpush1.msra.mxu0 0.0
    %664 = vmatprep.subr.mxu0 0.0
    %665 = vmatpush1.msra.mxu0 0.0
    %666 = vmatprep.subr.mxu0 0.0
    %667 = vmatpush1.msra.mxu0 0.0
    %668 = vmatprep.subr.mxu0 0.0
    %669 = vmatpush1.msra.mxu0 0.0
    %670 = vmatprep.subr.mxu0 0.0
    %671 = vmatpush1.msra.mxu0 0.0
    %672 = vmatprep.subr.mxu0 0.0
    %673 = vmatpush1.msra.mxu0 0.0
    %674 = vmatprep.subr.mxu0 0.0
    %675 = vmatpush1.msra.mxu0 0.0
    %676 = vmatprep.subr.mxu0 0.0
    %677 = vmatpush1.msra.mxu0 0.0
    %678 = vmatprep.subr.mxu0 0.0
    %679 = vmatpush1.msra.mxu0 0.0
    %680 = vmatprep.subr.mxu0 0.0
    %681 = vmatpush1.msra.mxu0 0.0
    %682 = vmatprep.subr.mxu0 0.0
    %683 = vmatpush1.msra.mxu0 0.0
    %684 = vmatprep.subr.mxu0 0.0
    %685 = vmatpush1.msra.mxu0 0.0
    %686 = vmatprep.subr.mxu0 0.0
    %687 = vmatpush1.msra.mxu0 0.0
    %688 = vmatprep.subr.mxu0 0.0
    %689 = vmatpush1.msra.mxu0 0.0
    %690 = vmatprep.subr.mxu0 0.0
    %691 = vmatpush1.msra.mxu0 0.0
    %692 = vmatprep.subr.mxu0 0.0
    %693 = vmatpush1.msra.mxu0 0.0
    %694 = vmatprep.subr.mxu0 0.0
    %695 = vmatpush1.msra.mxu0 0.0
    %696 = vmatprep.subr.mxu0 0.0
    %697 = vmatpush1.msra.mxu0 0.0
    %698 = vmatprep.subr.mxu0 0.0
    %699 = vmatpush1.msra.mxu0 0.0
    %700 = vmatprep.subr.mxu0 0.0
    %701 = vmatpush1.msra.mxu0 0.0
    %702 = vmatprep.subr.mxu0 0.0
    %703 = vmatpush1.msra.mxu0 0.0
    %704 = vmatprep.subr.mxu0 0.0
    %705 = vmatpush1.msra.mxu0 0.0
    %706 = vmatprep.subr.mxu0 0.0
    %707 = vmatpush1.msra.mxu0 0.0
    %708 = vmatprep.subr.mxu0 0.0
    %709 = vmatpush1.msra.mxu0 0.0
    %710 = vmatprep.subr.mxu0 0.0
    %711 = vmatpush1.msra.mxu0 0.0
    %712 = vmatprep.subr.mxu0 0.0
    %713 = vmatpush1.msra.mxu0 0.0
    %714 = vmatprep.subr.mxu0 0.0
    %715 = vmatpush1.msra.mxu0 0.0
    %716 = vmatprep.mubr.f32.mxu0 0.0
    %717 = vmatmul.mubr.f32.gmra.mrb[0].mxu0 %v647
    %v718 = vpop.f32.mrb[0].mxu0
    %v719 = vadd.f32 %v644, %v718
    %v720 = vpop.f32.mrb[0].mxu0
    %721 = vmatprep.mubr.f32.mxu0 0.0
    %722 = vmatmul.mubr.f32.gmra.mrb[0].mxu0 %v650
    %v723 = vpop.f32.mrb[0].mxu0
    %v724 = vadd.f32 %v644, %v723
    %v725 = vpop.f32.mrb[0].mxu0
    %726 = vdwg.mxu0
    %729 = vrot.lane.b32.xlu0 %v719, 96
    %v730 = vpop.permute.xlu0 %729
    %731 = vrot.lane.b32.xlu0 %v724, 96
    %v732 = vpop.permute.xlu0 %731
    %v733 = vsel %vm212, %v719, 0
    %v735 = vsel %vm212, %v724, 0
    %v737 = vsel %vm212, %v730, 0
    %v739 = vsel %vm212, %v732, 0
    %741 = vmatprep.subr.mxu0 0.0
    %742 = vmatpush1.xpose.msra.mxu0 %v737
    %743 = vmatprep.subr.mxu0 0.0
    %744 = vmatpush1.xpose.msra.mxu0 %v739
    %745 = vmatprep.subr.mxu0 0.0
    %746 = vmatpush1.xpose.msra.mxu0 0.0
    %747 = vmatprep.subr.mxu0 0.0
    %748 = vmatpush1.xpose.msra.mxu0 0.0
    %749 = vmatprep.subr.mxu0 0.0
    %750 = vmatpush1.xpose.msra.mxu0 0.0
    %751 = vmatprep.subr.mxu0 0.0
    %752 = vmatpush1.xpose.msra.mxu0 0.0
    %753 = vmatprep.subr.mxu0 0.0
    %754 = vmatpush1.xpose.msra.mxu0 0.0
    %755 = vmatprep.subr.mxu0 0.0
    %756 = vmatpush1.xpose.msra.mxu0 0.0
    %757 = vmatprep.subr.mxu0 0.0
    %758 = vmatpush1.xpose.msra.mxu0 0.0
    %759 = vmatprep.subr.mxu0 0.0
    %760 = vmatpush1.xpose.msra.mxu0 0.0
    %761 = vmatprep.subr.mxu0 0.0
    %762 = vmatpush1.xpose.msra.mxu0 0.0
    %763 = vmatprep.subr.mxu0 0.0
    %764 = vmatpush1.xpose.msra.mxu0 0.0
    %765 = vmatprep.subr.mxu0 0.0
    %766 = vmatpush1.xpose.msra.mxu0 0.0
    %767 = vmatprep.subr.mxu0 0.0
    %768 = vmatpush1.xpose.msra.mxu0 0.0
    %769 = vmatprep.subr.mxu0 0.0
    %770 = vmatpush1.xpose.msra.mxu0 0.0
    %771 = vmatprep.subr.mxu0 0.0
    %772 = vmatpush1.xpose.msra.mxu0 0.0
    %773 = vmatprep.subr.mxu0 0.0
    %774 = vmatpush1.xpose.msra.mxu0 0.0
    %775 = vmatprep.subr.mxu0 0.0
    %776 = vmatpush1.xpose.msra.mxu0 0.0
    %777 = vmatprep.subr.mxu0 0.0
    %778 = vmatpush1.xpose.msra.mxu0 0.0
    %779 = vmatprep.subr.mxu0 0.0
    %780 = vmatpush1.xpose.msra.mxu0 0.0
    %781 = vmatprep.subr.mxu0 0.0
    %782 = vmatpush1.xpose.msra.mxu0 0.0
    %783 = vmatprep.subr.mxu0 0.0
    %784 = vmatpush1.xpose.msra.mxu0 0.0
    %785 = vmatprep.subr.mxu0 0.0
    %786 = vmatpush1.xpose.msra.mxu0 0.0
    %787 = vmatprep.subr.mxu0 0.0
    %788 = vmatpush1.xpose.msra.mxu0 0.0
    %789 = vmatprep.subr.mxu0 0.0
    %790 = vmatpush1.xpose.msra.mxu0 0.0
    %791 = vmatprep.subr.mxu0 0.0
    %792 = vmatpush1.xpose.msra.mxu0 0.0
    %793 = vmatprep.subr.mxu0 0.0
    %794 = vmatpush1.xpose.msra.mxu0 0.0
    %795 = vmatprep.subr.mxu0 0.0
    %796 = vmatpush1.xpose.msra.mxu0 0.0
    %797 = vmatprep.subr.mxu0 0.0
    %798 = vmatpush1.xpose.msra.mxu0 0.0
    %799 = vmatprep.subr.mxu0 0.0
    %800 = vmatpush1.xpose.msra.mxu0 0.0
    %801 = vmatprep.subr.mxu0 0.0
    %802 = vmatpush1.xpose.msra.mxu0 0.0
    %803 = vmatprep.subr.mxu0 0.0
    %804 = vmatpush1.xpose.msra.mxu0 0.0
    %805 = vmatprep.mubr.f32.mxu0 0.0
    %806 = vmatmul.mubr.f32.gmra.mrb[0].mxu0 %v733
    %v807 = vpop.f32.mrb[0].mxu0
    %v808 = vadd.f32 %v120, %v807
    %v809 = vpop.f32.mrb[0].mxu0
    %810 = vmatprep.mubr.f32.mxu0 0.0
    %811 = vmatmul.mubr.f32.gmra.mrb[0].mxu0 %v735
    %v812 = vpop.f32.mrb[0].mxu0
    %v813 = vadd.f32 %v121, %v812
    %v814 = vpop.f32.mrb[0].mxu0
    %815 = vdwg.mxu0
    %v816 = vsel %vm124, %v808, -inf
    %817 = vmax.xlane.f32.xlu0 %v816
    %v818 = vpop.xlane.xlu0 %817
    %v819 = vsel %vm124, %v813, -inf
    %820 = vmax.xlane.f32.xlu0 %v819
    %v821 = vpop.xlane.xlu0 %820
    %v822 = vsub.f32 %v808, %v818
    %v823 = vsub.f32 %v813, %v821
    %v824 = vmul.f32 %v822, 1.442695
    %v825 = vpow.pop %v824
    %v826 = vmul.f32 %v823, 1.442695
    %v827 = vpow.pop %v826
    %v828 = vsel %vm124, %v825, 0.0
    %829 = vadd.xlane.f32.xlu0 %v828
    %v830 = vpop.xlane.xlu0 %829
    %v831 = vsel %vm124, %v827, 0.0
    %832 = vadd.xlane.f32.xlu0 %v831
    %v833 = vpop.xlane.xlu0 %832
    %v834 = vrcp.pop %v830
    %v835 = vrcp.pop %v833
    %v836 = vmul.f32 %v825, %v834
    %v837 = vmul.f32 %v827, %v835
    %838 = vrot.lane.b32.xlu0 %v719, 64
    %v839 = vpop.permute.xlu0 %838
    %840 = vrot.lane.b32.xlu0 %v724, 64
    %v841 = vpop.permute.xlu0 %840
    %v845 = vsel %vm124, %v836, 0
    %v848 = vsel %vm124, %v837, 0
    %850 = vmatprep.subr.mxu0 0.0
    %851 = vmatpush1.msra.mxu0 %v839
    %852 = vmatprep.subr.mxu0 0.0
    %853 = vmatpush1.msra.mxu0 %v841
    %854 = vmatprep.subr.mxu0 0.0
    %855 = vmatpush1.msra.mxu0 0.0
    %856 = vmatprep.subr.mxu0 0.0
    %857 = vmatpush1.msra.mxu0 0.0
    %858 = vmatprep.subr.mxu0 0.0
    %859 = vmatpush1.msra.mxu0 0.0
    %860 = vmatprep.subr.mxu0 0.0
    %861 = vmatpush1.msra.mxu0 0.0
    %862 = vmatprep.subr.mxu0 0.0
    %863 = vmatpush1.msra.mxu0 0.0
    %864 = vmatprep.subr.mxu0 0.0
    %865 = vmatpush1.msra.mxu0 0.0
    %866 = vmatprep.subr.mxu0 0.0
    %867 = vmatpush1.msra.mxu0 0.0
    %868 = vmatprep.subr.mxu0 0.0
    %869 = vmatpush1.msra.mxu0 0.0
    %870 = vmatprep.subr.mxu0 0.0
    %871 = vmatpush1.msra.mxu0 0.0
    %872 = vmatprep.subr.mxu0 0.0
    %873 = vmatpush1.msra.mxu0 0.0
    %874 = vmatprep.subr.mxu0 0.0
    %875 = vmatpush1.msra.mxu0 0.0
    %876 = vmatprep.subr.mxu0 0.0
    %877 = vmatpush1.msra.mxu0 0.0
    %878 = vmatprep.subr.mxu0 0.0
    %879 = vmatpush1.msra.mxu0 0.0
    %880 = vmatprep.subr.mxu0 0.0
    %881 = vmatpush1.msra.mxu0 0.0
    %882 = vmatprep.subr.mxu0 0.0
    %883 = vmatpush1.msra.mxu0 0.0
    %884 = vmatprep.subr.mxu0 0.0
    %885 = vmatpush1.msra.mxu0 0.0
    %886 = vmatprep.subr.mxu0 0.0
    %887 = vmatpush1.msra.mxu0 0.0
    %888 = vmatprep.subr.mxu0 0.0
    %889 = vmatpush1.msra.mxu0 0.0
    %890 = vmatprep.subr.mxu0 0.0
    %891 = vmatpush1.msra.mxu0 0.0
    %892 = vmatprep.subr.mxu0 0.0
    %893 = vmatpush1.msra.mxu0 0.0
    %894 = vmatprep.subr.mxu0 0.0
    %895 = vmatpush1.msra.mxu0 0.0
    %896 = vmatprep.subr.mxu0 0.0
    %897 = vmatpush1.msra.mxu0 0.0
    %898 = vmatprep.subr.mxu0 0.0
    %899 = vmatpush1.msra.mxu0 0.0
    %900 = vmatprep.subr.mxu0 0.0
    %901 = vmatpush1.msra.mxu0 0.0
    %902 = vmatprep.subr.mxu0 0.0
    %903 = vmatpush1.msra.mxu0 0.0
    %904 = vmatprep.subr.mxu0 0.0
    %905 = vmatpush1.msra.mxu0 0.0
    %906 = vmatprep.subr.mxu0 0.0
    %907 = vmatpush1.msra.mxu0 0.0
    %908 = vmatprep.subr.mxu0 0.0
    %909 = vmatpush1.msra.mxu0 0.0
    %910 = vmatprep.subr.mxu0 0.0
    %911 = vmatpush1.msra.mxu0 0.0
    %912 = vmatprep.subr.mxu0 0.0
    %913 = vmatpush1.msra.mxu0 0.0
    %914 = vmatprep.mubr.f32.mxu0 0.0
    %915 = vmatmul.mubr.f32.gmra.mrb[0].mxu0 %v845
    %v916 = vpop.f32.mrb[0].mxu0
    %v917 = vadd.f32 0.0, %v916
    %v918 = vpop.f32.mrb[0].mxu0
    %919 = vmatprep.mubr.f32.mxu0 0.0
    %920 = vmatmul.mubr.f32.gmra.mrb[0].mxu0 %v848
    %v921 = vpop.f32.mrb[0].mxu0
    %v922 = vadd.f32 0.0, %v921
    %v923 = vpop.f32.mrb[0].mxu0
    %924 = vdwg.mxu0
    %925 = vrot.lane.b32.xlu0 %v719, 120
    %v926 = vpop.permute.xlu0 %925
    %927 = vrot.lane.b32.xlu0 %v724, 120
    %v928 = vpop.permute.xlu0 %927
    %929 = vrot.lane.b32.xlu0 %v719, 88
    %v930 = vpop.permute.xlu0 %929
    %931 = vrot.lane.b32.xlu0 %v724, 88
    %v932 = vpop.permute.xlu0 %931
    %v933 = vsel %vm212, %v926, 0
    %v935 = vsel %vm212, %v928, 0
    %v937 = vsel %vm212, %v930, 0
    %v939 = vsel %vm212, %v932, 0
    %941 = vmatprep.subr.mxu0 0.0
    %942 = vmatpush1.xpose.msra.mxu0 %v937
    %943 = vmatprep.subr.mxu0 0.0
    %944 = vmatpush1.xpose.msra.mxu0 %v939
    %945 = vmatprep.subr.mxu0 0.0
    %946 = vmatpush1.xpose.msra.mxu0 0.0
    %947 = vmatprep.subr.mxu0 0.0
    %948 = vmatpush1.xpose.msra.mxu0 0.0
    %949 = vmatprep.subr.mxu0 0.0
    %950 = vmatpush1.xpose.msra.mxu0 0.0
    %951 = vmatprep.subr.mxu0 0.0
    %952 = vmatpush1.xpose.msra.mxu0 0.0
    %953 = vmatprep.subr.mxu0 0.0
    %954 = vmatpush1.xpose.msra.mxu0 0.0
    %955 = vmatprep.subr.mxu0 0.0
    %956 = vmatpush1.xpose.msra.mxu0 0.0
    %957 = vmatprep.subr.mxu0 0.0
    %958 = vmatpush1.xpose.msra.mxu0 0.0
    %959 = vmatprep.subr.mxu0 0.0
    %960 = vmatpush1.xpose.msra.mxu0 0.0
    %961 = vmatprep.subr.mxu0 0.0
    %962 = vmatpush1.xpose.msra.mxu0 0.0
    %963 = vmatprep.subr.mxu0 0.0
    %964 = vmatpush1.xpose.msra.mxu0 0.0
    %965 = vmatprep.subr.mxu0 0.0
    %966 = vmatpush1.xpose.msra.mxu0 0.0
    %967 = vmatprep.subr.mxu0 0.0
    %968 = vmatpush1.xpose.msra.mxu0 0.0
    %969 = vmatprep.subr.mxu0 0.0
    %970 = vmatpush1.xpose.msra.mxu0 0.0
    %971 = vmatprep.subr.mxu0 0.0
    %972 = vmatpush1.xpose.msra.mxu0 0.0
    %973 = vmatprep.subr.mxu0 0.0
    %974 = vmatpush1.xpose.msra.mxu0 0.0
    %975 = vmatprep.subr.mxu0 0.0
    %976 = vmatpush1.xpose.msra.mxu0 0.0
    %977 = vmatprep.subr.mxu0 0.0
    %978 = vmatpush1.xpose.msra.mxu0 0.0
    %979 = vmatprep.subr.mxu0 0.0
    %980 = vmatpush1.xpose.msra.mxu0 0.0
    %981 = vmatprep.subr.mxu0 0.0
    %982 = vmatpush1.xpose.msra.mxu0 0.0
    %983 = vmatprep.subr.mxu0 0.0
    %984 = vmatpush1.xpose.msra.mxu0 0.0
    %985 = vmatprep.subr.mxu0 0.0
    %986 = vmatpush1.xpose.msra.mxu0 0.0
    %987 = vmatprep.subr.mxu0 0.0
    %988 = vmatpush1.xpose.msra.mxu0 0.0
    %989 = vmatprep.subr.mxu0 0.0
    %990 = vmatpush1.xpose.msra.mxu0 0.0
    %991 = vmatprep.subr.mxu0 0.0
    %992 = vmatpush1.xpose.msra.mxu0 0.0
    %993 = vmatprep.subr.mxu0 0.0
    %994 = vmatpush1.xpose.msra.mxu0 0.0
    %995 = vmatprep.subr.mxu0 0.0
    %996 = vmatpush1.xpose.msra.mxu0 0.0
    %997 = vmatprep.subr.mxu0 0.0
    %998 = vmatpush1.xpose.msra.mxu0 0.0
    %999 = vmatprep.subr.mxu0 0.0
    %1000 = vmatpush1.xpose.msra.mxu0 0.0
    %1001 = vmatprep.subr.mxu0 0.0
    %1002 = vmatpush1.xpose.msra.mxu0 0.0
    %1003 = vmatprep.subr.mxu0 0.0
    %1004 = vmatpush1.xpose.msra.mxu0 0.0
    %1005 = vmatprep.mubr.f32.mxu0 0.0
    %1006 = vmatmul.mubr.f32.gmra.mrb[0].mxu0 %v933
    %v1007 = vpop.f32.mrb[0].mxu0
    %v1008 = vadd.f32 %v120, %v1007
    %v1009 = vpop.f32.mrb[0].mxu0
    %1010 = vmatprep.mubr.f32.mxu0 0.0
    %1011 = vmatmul.mubr.f32.gmra.mrb[0].mxu0 %v935
    %v1012 = vpop.f32.mrb[0].mxu0
    %v1013 = vadd.f32 %v121, %v1012
    %v1014 = vpop.f32.mrb[0].mxu0
    %1015 = vdwg.mxu0
    %v1016 = vsel %vm124, %v1008, -inf
    %1017 = vmax.xlane.f32.xlu0 %v1016
    %v1018 = vpop.xlane.xlu0 %1017
    %v1019 = vsel %vm124, %v1013, -inf
    %1020 = vmax.xlane.f32.xlu0 %v1019
    %v1021 = vpop.xlane.xlu0 %1020
    %v1022 = vsub.f32 %v1008, %v1018
    %v1023 = vsub.f32 %v1013, %v1021
    %v1024 = vmul.f32 %v1022, 1.442695
    %v1025 = vpow.pop %v1024
    %v1026 = vmul.f32 %v1023, 1.442695
    %v1027 = vpow.pop %v1026
    %v1028 = vsel %vm124, %v1025, 0.0
    %1029 = vadd.xlane.f32.xlu0 %v1028
    %v1030 = vpop.xlane.xlu0 %1029
    %v1031 = vsel %vm124, %v1027, 0.0
    %1032 = vadd.xlane.f32.xlu0 %v1031
    %v1033 = vpop.xlane.xlu0 %1032
    %v1034 = vrcp.pop %v1030
    %v1035 = vrcp.pop %v1033
    %v1036 = vmul.f32 %v1025, %v1034
    %v1037 = vmul.f32 %v1027, %v1035
    %1038 = vrot.lane.b32.xlu0 %v719, 56
    %v1039 = vpop.permute.xlu0 %1038
    %1040 = vrot.lane.b32.xlu0 %v724, 56
    %v1041 = vpop.permute.xlu0 %1040
    %v1045 = vsel %vm124, %v1036, 0
    %v1048 = vsel %vm124, %v1037, 0
    %1050 = vmatprep.subr.mxu0 0.0
    %1051 = vmatpush1.msra.mxu0 %v1039
    %1052 = vmatprep.subr.mxu0 0.0
    %1053 = vmatpush1.msra.mxu0 %v1041
    %1054 = vmatprep.subr.mxu0 0.0
    %1055 = vmatpush1.msra.mxu0 0.0
    %1056 = vmatprep.subr.mxu0 0.0
    %1057 = vmatpush1.msra.mxu0 0.0
    %1058 = vmatprep.subr.mxu0 0.0
    %1059 = vmatpush1.msra.mxu0 0.0
    %1060 = vmatprep.subr.mxu0 0.0
    %1061 = vmatpush1.msra.mxu0 0.0
    %1062 = vmatprep.subr.mxu0 0.0
    %1063 = vmatpush1.msra.mxu0 0.0
    %1064 = vmatprep.subr.mxu0 0.0
    %1065 = vmatpush1.msra.mxu0 0.0
    %1066 = vmatprep.subr.mxu0 0.0
    %1067 = vmatpush1.msra.mxu0 0.0
    %1068 = vmatprep.subr.mxu0 0.0
    %1069 = vmatpush1.msra.mxu0 0.0
    %1070 = vmatprep.subr.mxu0 0.0
    %1071 = vmatpush1.msra.mxu0 0.0
    %1072 = vmatprep.subr.mxu0 0.0
    %1073 = vmatpush1.msra.mxu0 0.0
    %1074 = vmatprep.subr.mxu0 0.0
    %1075 = vmatpush1.msra.mxu0 0.0
    %1076 = vmatprep.subr.mxu0 0.0
    %1077 = vmatpush1.msra.mxu0 0.0
    %1078 = vmatprep.subr.mxu0 0.0
    %1079 = vmatpush1.msra.mxu0 0.0
    %1080 = vmatprep.subr.mxu0 0.0
    %1081 = vmatpush1.msra.mxu0 0.0
    %1082 = vmatprep.subr.mxu0 0.0
    %1083 = vmatpush1.msra.mxu0 0.0
    %1084 = vmatprep.subr.mxu0 0.0
    %1085 = vmatpush1.msra.mxu0 0.0
    %1086 = vmatprep.subr.mxu0 0.0
    %1087 = vmatpush1.msra.mxu0 0.0
    %1088 = vmatprep.subr.mxu0 0.0
    %1089 = vmatpush1.msra.mxu0 0.0
    %1090 = vmatprep.subr.mxu0 0.0
    %1091 = vmatpush1.msra.mxu0 0.0
    %1092 = vmatprep.subr.mxu0 0.0
    %1093 = vmatpush1.msra.mxu0 0.0
    %1094 = vmatprep.subr.mxu0 0.0
    %1095 = vmatpush1.msra.mxu0 0.0
    %1096 = vmatprep.subr.mxu0 0.0
    %1097 = vmatpush1.msra.mxu0 0.0
    %1098 = vmatprep.subr.mxu0 0.0
    %1099 = vmatpush1.msra.mxu0 0.0
    %1100 = vmatprep.subr.mxu0 0.0
    %1101 = vmatpush1.msra.mxu0 0.0
    %1102 = vmatprep.subr.mxu0 0.0
    %1103 = vmatpush1.msra.mxu0 0.0
    %1104 = vmatprep.subr.mxu0 0.0
    %1105 = vmatpush1.msra.mxu0 0.0
    %1106 = vmatprep.subr.mxu0 0.0
    %1107 = vmatpush1.msra.mxu0 0.0
    %1108 = vmatprep.subr.mxu0 0.0
    %1109 = vmatpush1.msra.mxu0 0.0
    %1110 = vmatprep.subr.mxu0 0.0
    %1111 = vmatpush1.msra.mxu0 0.0
    %1112 = vmatprep.subr.mxu0 0.0
    %1113 = vmatpush1.msra.mxu0 0.0
    %1114 = vmatprep.mubr.f32.mxu0 0.0
    %1115 = vmatmul.mubr.f32.gmra.mrb[0].mxu0 %v1045
    %v1116 = vpop.f32.mrb[0].mxu0
    %v1117 = vadd.f32 0.0, %v1116
    %v1118 = vpop.f32.mrb[0].mxu0
    %1119 = vmatprep.mubr.f32.mxu0 0.0
    %1120 = vmatmul.mubr.f32.gmra.mrb[0].mxu0 %v1048
    %v1121 = vpop.f32.mrb[0].mxu0
    %v1122 = vadd.f32 0.0, %v1121
    %v1123 = vpop.f32.mrb[0].mxu0
    %1124 = vdwg.mxu0
    %1125 = vrot.lane.b32.xlu0 %v719, 112
    %v1126 = vpop.permute.xlu0 %1125
    %1127 = vrot.lane.b32.xlu0 %v724, 112
    %v1128 = vpop.permute.xlu0 %1127
    %1129 = vrot.lane.b32.xlu0 %v719, 80
    %v1130 = vpop.permute.xlu0 %1129
    %1131 = vrot.lane.b32.xlu0 %v724, 80
    %v1132 = vpop.permute.xlu0 %1131
    %v1133 = vsel %vm212, %v1126, 0
    %v1135 = vsel %vm212, %v1128, 0
    %v1137 = vsel %vm212, %v1130, 0
    %v1139 = vsel %vm212, %v1132, 0
    %1141 = vmatprep.subr.mxu0 0.0
    %1142 = vmatpush1.xpose.msra.mxu0 %v1137
    %1143 = vmatprep.subr.mxu0 0.0
    %1144 = vmatpush1.xpose.msra.mxu0 %v1139
    %1145 = vmatprep.subr.mxu0 0.0
    %1146 = vmatpush1.xpose.msra.mxu0 0.0
    %1147 = vmatprep.subr.mxu0 0.0
    %1148 = vmatpush1.xpose.msra.mxu0 0.0
    %1149 = vmatprep.subr.mxu0 0.0
    %1150 = vmatpush1.xpose.msra.mxu0 0.0
    %1151 = vmatprep.subr.mxu0 0.0
    %1152 = vmatpush1.xpose.msra.mxu0 0.0
    %1153 = vmatprep.subr.mxu0 0.0
    %1154 = vmatpush1.xpose.msra.mxu0 0.0
    %1155 = vmatprep.subr.mxu0 0.0
    %1156 = vmatpush1.xpose.msra.mxu0 0.0
    %1157 = vmatprep.subr.mxu0 0.0
    %1158 = vmatpush1.xpose.msra.mxu0 0.0
    %1159 = vmatprep.subr.mxu0 0.0
    %1160 = vmatpush1.xpose.msra.mxu0 0.0
    %1161 = vmatprep.subr.mxu0 0.0
    %1162 = vmatpush1.xpose.msra.mxu0 0.0
    %1163 = vmatprep.subr.mxu0 0.0
    %1164 = vmatpush1.xpose.msra.mxu0 0.0
    %1165 = vmatprep.subr.mxu0 0.0
    %1166 = vmatpush1.xpose.msra.mxu0 0.0
    %1167 = vmatprep.subr.mxu0 0.0
    %1168 = vmatpush1.xpose.msra.mxu0 0.0
    %1169 = vmatprep.subr.mxu0 0.0
    %1170 = vmatpush1.xpose.msra.mxu0 0.0
    %1171 = vmatprep.subr.mxu0 0.0
    %1172 = vmatpush1.xpose.msra.mxu0 0.0
    %1173 = vmatprep.subr.mxu0 0.0
    %1174 = vmatpush1.xpose.msra.mxu0 0.0
    %1175 = vmatprep.subr.mxu0 0.0
    %1176 = vmatpush1.xpose.msra.mxu0 0.0
    %1177 = vmatprep.subr.mxu0 0.0
    %1178 = vmatpush1.xpose.msra.mxu0 0.0
    %1179 = vmatprep.subr.mxu0 0.0
    %1180 = vmatpush1.xpose.msra.mxu0 0.0
    %1181 = vmatprep.subr.mxu0 0.0
    %1182 = vmatpush1.xpose.msra.mxu0 0.0
    %1183 = vmatprep.subr.mxu0 0.0
    %1184 = vmatpush1.xpose.msra.mxu0 0.0
    %1185 = vmatprep.subr.mxu0 0.0
    %1186 = vmatpush1.xpose.msra.mxu0 0.0
    %1187 = vmatprep.subr.mxu0 0.0
    %1188 = vmatpush1.xpose.msra.mxu0 0.0
    %1189 = vmatprep.subr.mxu0 0.0
    %1190 = vmatpush1.xpose.msra.mxu0 0.0
    %1191 = vmatprep.subr.mxu0 0.0
    %1192 = vmatpush1.xpose.msra.mxu0 0.0
    %1193 = vmatprep.subr.mxu0 0.0
    %1194 = vmatpush1.xpose.msra.mxu0 0.0
    %1195 = vmatprep.subr.mxu0 0.0
    %1196 = vmatpush1.xpose.msra.mxu0 0.0
    %1197 = vmatprep.subr.mxu0 0.0
    %1198 = vmatpush1.xpose.msra.mxu0 0.0
    %1199 = vmatprep.subr.mxu0 0.0
    %1200 = vmatpush1.xpose.msra.mxu0 0.0
    %1201 = vmatprep.subr.mxu0 0.0
    %1202 = vmatpush1.xpose.msra.mxu0 0.0
    %1203 = vmatprep.subr.mxu0 0.0
    %1204 = vmatpush1.xpose.msra.mxu0 0.0
    %1205 = vmatprep.mubr.f32.mxu0 0.0
    %1206 = vmatmul.mubr.f32.gmra.mrb[0].mxu0 %v1133
    %v1207 = vpop.f32.mrb[0].mxu0
    %v1208 = vadd.f32 %v120, %v1207
    %v1209 = vpop.f32.mrb[0].mxu0
    %1210 = vmatprep.mubr.f32.mxu0 0.0
    %1211 = vmatmul.mubr.f32.gmra.mrb[0].mxu0 %v1135
    %v1212 = vpop.f32.mrb[0].mxu0
    %v1213 = vadd.f32 %v121, %v1212
    %v1214 = vpop.f32.mrb[0].mxu0
    %1215 = vdwg.mxu0
    %v1216 = vsel %vm124, %v1208, -inf
    %1217 = vmax.xlane.f32.xlu0 %v1216
    %v1218 = vpop.xlane.xlu0 %1217
    %v1219 = vsel %vm124, %v1213, -inf
    %1220 = vmax.xlane.f32.xlu0 %v1219
    %v1221 = vpop.xlane.xlu0 %1220
    %v1222 = vsub.f32 %v1208, %v1218
    %v1223 = vsub.f32 %v1213, %v1221
    %v1224 = vmul.f32 %v1222, 1.442695
    %v1225 = vpow.pop %v1224
    %v1226 = vmul.f32 %v1223, 1.442695
    %v1227 = vpow.pop %v1226
    %v1228 = vsel %vm124, %v1225, 0.0
    %1229 = vadd.xlane.f32.xlu0 %v1228
    %v1230 = vpop.xlane.xlu0 %1229
    %v1231 = vsel %vm124, %v1227, 0.0
    %1232 = vadd.xlane.f32.xlu0 %v1231
    %v1233 = vpop.xlane.xlu0 %1232
    %v1234 = vrcp.pop %v1230
    %v1235 = vrcp.pop %v1233
    %v1236 = vmul.f32 %v1225, %v1234
    %v1237 = vmul.f32 %v1227, %v1235
    %1238 = vrot.lane.b32.xlu0 %v719, 48
    %v1239 = vpop.permute.xlu0 %1238
    %1240 = vrot.lane.b32.xlu0 %v724, 48
    %v1241 = vpop.permute.xlu0 %1240
    %v1245 = vsel %vm124, %v1236, 0
    %v1248 = vsel %vm124, %v1237, 0
    %1250 = vmatprep.subr.mxu0 0.0
    %1251 = vmatpush1.msra.mxu0 %v1239
    %1252 = vmatprep.subr.mxu0 0.0
    %1253 = vmatpush1.msra.mxu0 %v1241
    %1254 = vmatprep.subr.mxu0 0.0
    %1255 = vmatpush1.msra.mxu0 0.0
    %1256 = vmatprep.subr.mxu0 0.0
    %1257 = vmatpush1.msra.mxu0 0.0
    %1258 = vmatprep.subr.mxu0 0.0
    %1259 = vmatpush1.msra.mxu0 0.0
    %1260 = vmatprep.subr.mxu0 0.0
    %1261 = vmatpush1.msra.mxu0 0.0
    %1262 = vmatprep.subr.mxu0 0.0
    %1263 = vmatpush1.msra.mxu0 0.0
    %1264 = vmatprep.subr.mxu0 0.0
    %1265 = vmatpush1.msra.mxu0 0.0
    %1266 = vmatprep.subr.mxu0 0.0
    %1267 = vmatpush1.msra.mxu0 0.0
    %1268 = vmatprep.subr.mxu0 0.0
    %1269 = vmatpush1.msra.mxu0 0.0
    %1270 = vmatprep.subr.mxu0 0.0
    %1271 = vmatpush1.msra.mxu0 0.0
    %1272 = vmatprep.subr.mxu0 0.0
    %1273 = vmatpush1.msra.mxu0 0.0
    %1274 = vmatprep.subr.mxu0 0.0
    %1275 = vmatpush1.msra.mxu0 0.0
    %1276 = vmatprep.subr.mxu0 0.0
    %1277 = vmatpush1.msra.mxu0 0.0
    %1278 = vmatprep.subr.mxu0 0.0
    %1279 = vmatpush1.msra.mxu0 0.0
    %1280 = vmatprep.subr.mxu0 0.0
    %1281 = vmatpush1.msra.mxu0 0.0
    %1282 = vmatprep.subr.mxu0 0.0
    %1283 = vmatpush1.msra.mxu0 0.0
    %1284 = vmatprep.subr.mxu0 0.0
    %1285 = vmatpush1.msra.mxu0 0.0
    %1286 = vmatprep.subr.mxu0 0.0
    %1287 = vmatpush1.msra.mxu0 0.0
    %1288 = vmatprep.subr.mxu0 0.0
    %1289 = vmatpush1.msra.mxu0 0.0
    %1290 = vmatprep.subr.mxu0 0.0
    %1291 = vmatpush1.msra.mxu0 0.0
    %1292 = vmatprep.subr.mxu0 0.0
    %1293 = vmatpush1.msra.mxu0 0.0
    %1294 = vmatprep.subr.mxu0 0.0
    %1295 = vmatpush1.msra.mxu0 0.0
    %1296 = vmatprep.subr.mxu0 0.0
    %1297 = vmatpush1.msra.mxu0 0.0
    %1298 = vmatprep.subr.mxu0 0.0
    %1299 = vmatpush1.msra.mxu0 0.0
    %1300 = vmatprep.subr.mxu0 0.0
    %1301 = vmatpush1.msra.mxu0 0.0
    %1302 = vmatprep.subr.mxu0 0.0
    %1303 = vmatpush1.msra.mxu0 0.0
    %1304 = vmatprep.subr.mxu0 0.0
    %1305 = vmatpush1.msra.mxu0 0.0
    %1306 = vmatprep.subr.mxu0 0.0
    %1307 = vmatpush1.msra.mxu0 0.0
    %1308 = vmatprep.subr.mxu0 0.0
    %1309 = vmatpush1.msra.mxu0 0.0
    %1310 = vmatprep.subr.mxu0 0.0
    %1311 = vmatpush1.msra.mxu0 0.0
    %1312 = vmatprep.subr.mxu0 0.0
    %1313 = vmatpush1.msra.mxu0 0.0
    %1314 = vmatprep.mubr.f32.mxu0 0.0
    %1315 = vmatmul.mubr.f32.gmra.mrb[0].mxu0 %v1245
    %v1316 = vpop.f32.mrb[0].mxu0
    %v1317 = vadd.f32 0.0, %v1316
    %v1318 = vpop.f32.mrb[0].mxu0
    %1319 = vmatprep.mubr.f32.mxu0 0.0
    %1320 = vmatmul.mubr.f32.gmra.mrb[0].mxu0 %v1248
    %v1321 = vpop.f32.mrb[0].mxu0
    %v1322 = vadd.f32 0.0, %v1321
    %v1323 = vpop.f32.mrb[0].mxu0
    %1324 = vdwg.mxu0
    %1325 = vrot.lane.b32.xlu0 %v719, 104
    %v1326 = vpop.permute.xlu0 %1325
    %1327 = vrot.lane.b32.xlu0 %v724, 104
    %v1328 = vpop.permute.xlu0 %1327
    %1329 = vrot.lane.b32.xlu0 %v719, 72
    %v1330 = vpop.permute.xlu0 %1329
    %1331 = vrot.lane.b32.xlu0 %v724, 72
    %v1332 = vpop.permute.xlu0 %1331
    %v1333 = vsel %vm212, %v1326, 0
    %v1335 = vsel %vm212, %v1328, 0
    %v1337 = vsel %vm212, %v1330, 0
    %v1339 = vsel %vm212, %v1332, 0
    %1341 = vmatprep.subr.mxu0 0.0
    %1342 = vmatpush1.xpose.msra.mxu0 %v1337
    %1343 = vmatprep.subr.mxu0 0.0
    %1344 = vmatpush1.xpose.msra.mxu0 %v1339
    %1345 = vmatprep.subr.mxu0 0.0
    %1346 = vmatpush1.xpose.msra.mxu0 0.0
    %1347 = vmatprep.subr.mxu0 0.0
    %1348 = vmatpush1.xpose.msra.mxu0 0.0
    %1349 = vmatprep.subr.mxu0 0.0
    %1350 = vmatpush1.xpose.msra.mxu0 0.0
    %1351 = vmatprep.subr.mxu0 0.0
    %1352 = vmatpush1.xpose.msra.mxu0 0.0
    %1353 = vmatprep.subr.mxu0 0.0
    %1354 = vmatpush1.xpose.msra.mxu0 0.0
    %1355 = vmatprep.subr.mxu0 0.0
    %1356 = vmatpush1.xpose.msra.mxu0 0.0
    %1357 = vmatprep.subr.mxu0 0.0
    %1358 = vmatpush1.xpose.msra.mxu0 0.0
    %1359 = vmatprep.subr.mxu0 0.0
    %1360 = vmatpush1.xpose.msra.mxu0 0.0
    %1361 = vmatprep.subr.mxu0 0.0
    %1362 = vmatpush1.xpose.msra.mxu0 0.0
    %1363 = vmatprep.subr.mxu0 0.0
    %1364 = vmatpush1.xpose.msra.mxu0 0.0
    %1365 = vmatprep.subr.mxu0 0.0
    %1366 = vmatpush1.xpose.msra.mxu0 0.0
    %1367 = vmatprep.subr.mxu0 0.0
    %1368 = vmatpush1.xpose.msra.mxu0 0.0
    %1369 = vmatprep.subr.mxu0 0.0
    %1370 = vmatpush1.xpose.msra.mxu0 0.0
    %1371 = vmatprep.subr.mxu0 0.0
    %1372 = vmatpush1.xpose.msra.mxu0 0.0
    %1373 = vmatprep.subr.mxu0 0.0
    %1374 = vmatpush1.xpose.msra.mxu0 0.0
    %1375 = vmatprep.subr.mxu0 0.0
    %1376 = vmatpush1.xpose.msra.mxu0 0.0
    %1377 = vmatprep.subr.mxu0 0.0
    %1378 = vmatpush1.xpose.msra.mxu0 0.0
    %1379 = vmatprep.subr.mxu0 0.0
    %1380 = vmatpush1.xpose.msra.mxu0 0.0
    %1381 = vmatprep.subr.mxu0 0.0
    %1382 = vmatpush1.xpose.msra.mxu0 0.0
    %1383 = vmatprep.subr.mxu0 0.0
    %1384 = vmatpush1.xpose.msra.mxu0 0.0
    %1385 = vmatprep.subr.mxu0 0.0
    %1386 = vmatpush1.xpose.msra.mxu0 0.0
    %1387 = vmatprep.subr.mxu0 0.0
    %1388 = vmatpush1.xpose.msra.mxu0 0.0
    %1389 = vmatprep.subr.mxu0 0.0
    %1390 = vmatpush1.xpose.msra.mxu0 0.0
    %1391 = vmatprep.subr.mxu0 0.0
    %1392 = vmatpush1.xpose.msra.mxu0 0.0
    %1393 = vmatprep.subr.mxu0 0.0
    %1394 = vmatpush1.xpose.msra.mxu0 0.0
    %1395 = vmatprep.subr.mxu0 0.0
    %1396 = vmatpush1.xpose.msra.mxu0 0.0
    %1397 = vmatprep.subr.mxu0 0.0
    %1398 = vmatpush1.xpose.msra.mxu0 0.0
    %1399 = vmatprep.subr.mxu0 0.0
    %1400 = vmatpush1.xpose.msra.mxu0 0.0
    %1401 = vmatprep.subr.mxu0 0.0
    %1402 = vmatpush1.xpose.msra.mxu0 0.0
    %1403 = vmatprep.subr.mxu0 0.0
    %1404 = vmatpush1.xpose.msra.mxu0 0.0
    %1405 = vmatprep.mubr.f32.mxu0 0.0
    %1406 = vmatmul.mubr.f32.gmra.mrb[0].mxu0 %v1333
    %v1407 = vpop.f32.mrb[0].mxu0
    %v1408 = vadd.f32 %v120, %v1407
    %v1409 = vpop.f32.mrb[0].mxu0
    %1410 = vmatprep.mubr.f32.mxu0 0.0
    %1411 = vmatmul.mubr.f32.gmra.mrb[0].mxu0 %v1335
    %v1412 = vpop.f32.mrb[0].mxu0
    %v1413 = vadd.f32 %v121, %v1412
    %v1414 = vpop.f32.mrb[0].mxu0
    %1415 = vdwg.mxu0
    %v1416 = vsel %vm124, %v1408, -inf
    %1417 = vmax.xlane.f32.xlu0 %v1416
    %v1418 = vpop.xlane.xlu0 %1417
    %v1419 = vsel %vm124, %v1413, -inf
    %1420 = vmax.xlane.f32.xlu0 %v1419
    %v1421 = vpop.xlane.xlu0 %1420
    %v1422 = vsub.f32 %v1408, %v1418
    %v1423 = vsub.f32 %v1413, %v1421
    %v1424 = vmul.f32 %v1422, 1.442695
    %v1425 = vpow.pop %v1424
    %v1426 = vmul.f32 %v1423, 1.442695
    %v1427 = vpow.pop %v1426
    %v1428 = vsel %vm124, %v1425, 0.0
    %1429 = vadd.xlane.f32.xlu0 %v1428
    %v1430 = vpop.xlane.xlu0 %1429
    %v1431 = vsel %vm124, %v1427, 0.0
    %1432 = vadd.xlane.f32.xlu0 %v1431
    %v1433 = vpop.xlane.xlu0 %1432
    %v1434 = vrcp.pop %v1430
    %v1435 = vrcp.pop %v1433
    %v1436 = vmul.f32 %v1425, %v1434
    %v1437 = vmul.f32 %v1427, %v1435
    %1438 = vrot.lane.b32.xlu0 %v719, 40
    %v1439 = vpop.permute.xlu0 %1438
    %1440 = vrot.lane.b32.xlu0 %v724, 40
    %v1441 = vpop.permute.xlu0 %1440
    %v1445 = vsel %vm124, %v1436, 0
    %v1448 = vsel %vm124, %v1437, 0
    %1450 = vmatprep.subr.mxu0 0.0
    %1451 = vmatpush1.msra.mxu0 %v1439
    %1452 = vmatprep.subr.mxu0 0.0
    %1453 = vmatpush1.msra.mxu0 %v1441
    %1454 = vmatprep.subr.mxu0 0.0
    %1455 = vmatpush1.msra.mxu0 0.0
    %1456 = vmatprep.subr.mxu0 0.0
    %1457 = vmatpush1.msra.mxu0 0.0
    %1458 = vmatprep.subr.mxu0 0.0
    %1459 = vmatpush1.msra.mxu0 0.0
    %1460 = vmatprep.subr.mxu0 0.0
    %1461 = vmatpush1.msra.mxu0 0.0
    %1462 = vmatprep.subr.mxu0 0.0
    %1463 = vmatpush1.msra.mxu0 0.0
    %1464 = vmatprep.subr.mxu0 0.0
    %1465 = vmatpush1.msra.mxu0 0.0
    %1466 = vmatprep.subr.mxu0 0.0
    %1467 = vmatpush1.msra.mxu0 0.0
    %1468 = vmatprep.subr.mxu0 0.0
    %1469 = vmatpush1.msra.mxu0 0.0
    %1470 = vmatprep.subr.mxu0 0.0
    %1471 = vmatpush1.msra.mxu0 0.0
    %1472 = vmatprep.subr.mxu0 0.0
    %1473 = vmatpush1.msra.mxu0 0.0
    %1474 = vmatprep.subr.mxu0 0.0
    %1475 = vmatpush1.msra.mxu0 0.0
    %1476 = vmatprep.subr.mxu0 0.0
    %1477 = vmatpush1.msra.mxu0 0.0
    %1478 = vmatprep.subr.mxu0 0.0
    %1479 = vmatpush1.msra.mxu0 0.0
    %1480 = vmatprep.subr.mxu0 0.0
    %1481 = vmatpush1.msra.mxu0 0.0
    %1482 = vmatprep.subr.mxu0 0.0
    %1483 = vmatpush1.msra.mxu0 0.0
    %1484 = vmatprep.subr.mxu0 0.0
    %1485 = vmatpush1.msra.mxu0 0.0
    %1486 = vmatprep.subr.mxu0 0.0
    %1487 = vmatpush1.msra.mxu0 0.0
    %1488 = vmatprep.subr.mxu0 0.0
    %1489 = vmatpush1.msra.mxu0 0.0
    %1490 = vmatprep.subr.mxu0 0.0
    %1491 = vmatpush1.msra.mxu0 0.0
    %1492 = vmatprep.subr.mxu0 0.0
    %1493 = vmatpush1.msra.mxu0 0.0
    %1494 = vmatprep.subr.mxu0 0.0
    %1495 = vmatpush1.msra.mxu0 0.0
    %1496 = vmatprep.subr.mxu0 0.0
    %1497 = vmatpush1.msra.mxu0 0.0
    %1498 = vmatprep.subr.mxu0 0.0
    %1499 = vmatpush1.msra.mxu0 0.0
    %1500 = vmatprep.subr.mxu0 0.0
    %1501 = vmatpush1.msra.mxu0 0.0
    %1502 = vmatprep.subr.mxu0 0.0
    %1503 = vmatpush1.msra.mxu0 0.0
    %1504 = vmatprep.subr.mxu0 0.0
    %1505 = vmatpush1.msra.mxu0 0.0
    %1506 = vmatprep.subr.mxu0 0.0
    %1507 = vmatpush1.msra.mxu0 0.0
    %1508 = vmatprep.subr.mxu0 0.0
    %1509 = vmatpush1.msra.mxu0 0.0
    %1510 = vmatprep.subr.mxu0 0.0
    %1511 = vmatpush1.msra.mxu0 0.0
    %1512 = vmatprep.subr.mxu0 0.0
    %1513 = vmatpush1.msra.mxu0 0.0
    %1514 = vmatprep.mubr.f32.mxu0 0.0
    %1515 = vmatmul.mubr.f32.gmra.mrb[0].mxu0 %v1445
    %v1516 = vpop.f32.mrb[0].mxu0
    %v1517 = vadd.f32 0.0, %v1516
    %v1518 = vpop.f32.mrb[0].mxu0
    %1519 = vmatprep.mubr.f32.mxu0 0.0
    %1520 = vmatmul.mubr.f32.gmra.mrb[0].mxu0 %v1448
    %v1521 = vpop.f32.mrb[0].mxu0
    %v1522 = vadd.f32 0.0, %v1521
    %v1523 = vpop.f32.mrb[0].mxu0
    %1524 = vdwg.mxu0
    %1527 = vrot.lane.b32.xlu0 %v1117, 8
    %v1528 = vpop.permute.xlu0 %1527
    %1529 = vrot.lane.b32.xlu0 %v1122, 8
    %v1530 = vpop.permute.xlu0 %1529
    %1535 = vrot.lane.b32.xlu0 %v1317, 16
    %v1536 = vpop.permute.xlu0 %1535
    %1537 = vrot.lane.b32.xlu0 %v1322, 16
    %v1538 = vpop.permute.xlu0 %1537
    %1543 = vrot.lane.b32.xlu0 %v1517, 24
    %v1544 = vpop.permute.xlu0 %1543
    %1545 = vrot.lane.b32.xlu0 %v1522, 24
    %v1546 = vpop.permute.xlu0 %1545
    %v1549 = vsel %vm212, %v917, %v1528
    %v1550 = vsel %vm212, %v922, %v1530
    %v1551 = vsel %vm124, %v1549, %v1536
    %v1552 = vsel %vm124, %v1550, %v1538
    %vm1553 = vcmask 195584
    %v1554 = vsel %vm1553, %v1551, %v1544
    %v1555 = vsel %vm1553, %v1552, %v1546
    %v1556 = vld [vmem:[%s6] sm:$0xff]
    %v1557 = vld [vmem:[%s6 + $0x8] sm:$0xff]
    %v1558 = vld [vmem:[%s6 + $0x10] sm:$0xff]
    %v1559 = vld [vmem:[%s6 + $0x18] sm:$0xff]
    %v1560 = vld [vmem:[#allocation10 + $0x4] sm:$0x1]
    %v1561 = vlaneseq
    %v1562 = vshrl.u32 %v1561, 7
    %v1563 = vsub.s32 0, %v1562
    %v1564 = vrot.slane %v1560, %v1563
    %v1566 = vsel %vm645, %v1554, 0
    %v1569 = vsel %vm645, %v1555, 0
    %1571 = vmatprep.subr.mxu0 0.0
    %1572 = vmatpush1.msra.mxu0 %v1556
    %1573 = vmatprep.subr.mxu0 0.0
    %1574 = vmatpush1.msra.mxu0 %v1557
    %1575 = vmatprep.subr.mxu0 0.0
    %1576 = vmatpush1.msra.mxu0 %v1558
    %1577 = vmatprep.subr.mxu0 0.0
    %1578 = vmatpush1.msra.mxu0 %v1559
    %1579 = vmatprep.subr.mxu0 0.0
    %1580 = vmatpush1.msra.mxu0 0.0
    %1581 = vmatprep.subr.mxu0 0.0
    %1582 = vmatpush1.msra.mxu0 0.0
    %1583 = vmatprep.subr.mxu0 0.0
    %1584 = vmatpush1.msra.mxu0 0.0
    %1585 = vmatprep.subr.mxu0 0.0
    %1586 = vmatpush1.msra.mxu0 0.0
    %1587 = vmatprep.subr.mxu0 0.0
    %1588 = vmatpush1.msra.mxu0 0.0
    %1589 = vmatprep.subr.mxu0 0.0
    %1590 = vmatpush1.msra.mxu0 0.0
    %1591 = vmatprep.subr.mxu0 0.0
    %1592 = vmatpush1.msra.mxu0 0.0
    %1593 = vmatprep.subr.mxu0 0.0
    %1594 = vmatpush1.msra.mxu0 0.0
    %1595 = vmatprep.subr.mxu0 0.0
    %1596 = vmatpush1.msra.mxu0 0.0
    %1597 = vmatprep.subr.mxu0 0.0
    %1598 = vmatpush1.msra.mxu0 0.0
    %1599 = vmatprep.subr.mxu0 0.0
    %1600 = vmatpush1.msra.mxu0 0.0
    %1601 = vmatprep.subr.mxu0 0.0
    %1602 = vmatpush1.msra.mxu0 0.0
    %1603 = vmatprep.subr.mxu0 0.0
    %1604 = vmatpush1.msra.mxu0 0.0
    %1605 = vmatprep.subr.mxu0 0.0
    %1606 = vmatpush1.msra.mxu0 0.0
    %1607 = vmatprep.subr.mxu0 0.0
    %1608 = vmatpush1.msra.mxu0 0.0
    %1609 = vmatprep.subr.mxu0 0.0
    %1610 = vmatpush1.msra.mxu0 0.0
    %1611 = vmatprep.subr.mxu0 0.0
    %1612 = vmatpush1.msra.mxu0 0.0
    %1613 = vmatprep.subr.mxu0 0.0
    %1614 = vmatpush1.msra.mxu0 0.0
    %1615 = vmatprep.subr.mxu0 0.0
    %1616 = vmatpush1.msra.mxu0 0.0
    %1617 = vmatprep.subr.mxu0 0.0
    %1618 = vmatpush1.msra.mxu0 0.0
    %1619 = vmatprep.subr.mxu0 0.0
    %1620 = vmatpush1.msra.mxu0 0.0
    %1621 = vmatprep.subr.mxu0 0.0
    %1622 = vmatpush1.msra.mxu0 0.0
    %1623 = vmatprep.subr.mxu0 0.0
    %1624 = vmatpush1.msra.mxu0 0.0
    %1625 = vmatprep.subr.mxu0 0.0
    %1626 = vmatpush1.msra.mxu0 0.0
    %1627 = vmatprep.subr.mxu0 0.0
    %1628 = vmatpush1.msra.mxu0 0.0
    %1629 = vmatprep.subr.mxu0 0.0
    %1630 = vmatpush1.msra.mxu0 0.0
    %1631 = vmatprep.subr.mxu0 0.0
    %1632 = vmatpush1.msra.mxu0 0.0
    %1633 = vmatprep.subr.mxu0 0.0
    %1634 = vmatpush1.msra.mxu0 0.0
    %1635 = vmatprep.mubr.f32.mxu0 0.0
    %1636 = vmatmul.mubr.f32.gmra.mrb[0].mxu0 %v1566
    %v1637 = vpop.f32.mrb[0].mxu0
    %v1638 = vadd.f32 %v1564, %v1637
    %v1639 = vpop.f32.mrb[0].mxu0
    %1640 = vmatprep.mubr.f32.mxu0 0.0
    %1641 = vmatmul.mubr.f32.gmra.mrb[0].mxu0 %v1569
    %v1642 = vpop.f32.mrb[0].mxu0
    %v1643 = vadd.f32 %v1564, %v1642
    %v1644 = vpop.f32.mrb[0].mxu0
    %1645 = vdwg.mxu0
    %v1646 = vadd.f32 %v304, %v1638
    %v1647 = vadd.f32 %v305, %v1643
    %v1648 = vsel %vm645, %v1646, 0.0
    %1649 = vadd.xlane.f32.xlu0 %v1648
    %v1650 = vpop.xlane.xlu0 %1649
    %v1651 = vsel %vm645, %v1647, 0.0
    %1652 = vadd.xlane.f32.xlu0 %v1651
    %v1653 = vpop.xlane.xlu0 %1652
    %v1654 = vrcp.pop 32.0
    %v1655 = vmul.f32 %v1650, %v1654
    %v1656 = vmul.f32 %v1653, %v1654
    %v1657 = vsub.f32 %v1646, %v1655
    %v1658 = vsub.f32 %v1647, %v1656
    %v1659 = vmul.f32 %v1657, %v1657
    %v1660 = vmul.f32 %v1658, %v1658
    %v1661 = vsel %vm645, %v1659, 0.0
    %1662 = vadd.xlane.f32.xlu0 %v1661
    %v1663 = vpop.xlane.xlu0 %1662
    %v1664 = vsel %vm645, %v1660, 0.0
    %1665 = vadd.xlane.f32.xlu0 %v1664
    %v1666 = vpop.xlane.xlu0 %1665
    %v1667 = vmul.f32 %v1663, %v1654
    %v1668 = vmul.f32 %v1666, %v1654
    %v1669 = vadd.f32 %v1667, 1e-05
    %v1670 = vadd.f32 %v1668, 1e-05
    %v1671 = vrsqrt.pop %v1669
    %v1672 = vrsqrt.pop %v1670
    %v1673 = vmul.f32 %v1657, %v1671
    %v1674 = vmul.f32 %v1658, %v1672
    %v1675 = vld [vmem:[#allocation10 + $0x5] sm:$0x1]
    %v1676 = vlaneseq
    %v1677 = vshrl.u32 %v1676, 7
    %v1678 = vsub.s32 0, %v1677
    %v1679 = vrot.slane %v1675, %v1678
    %v1680 = vmul.f32 %v1673, %v1679
    %v1681 = vmul.f32 %v1674, %v1679
    %v1682 = vld [vmem:[#allocation10 + $0x6] sm:$0x1]
    %v1683 = vlaneseq
    %v1684 = vshrl.u32 %v1683, 7
    %v1685 = vsub.s32 0, %v1684
    %v1686 = vrot.slane %v1682, %v1685
    %v1687 = vadd.f32 %v1680, %v1686
    %v1688 = vadd.f32 %v1681, %v1686
    %v1689 = vld [vmem:[%s7] sm:$0xff]
    %v1690 = vld [vmem:[%s7 + $0x8] sm:$0xff]
    %v1691 = vld [vmem:[%s7 + $0x10] sm:$0xff]
    %v1692 = vld [vmem:[%s7 + $0x18] sm:$0xff]
    %v1693 = vld [vmem:[#allocation10 + $0x7] sm:$0x1]
    %v1694 = vlaneseq
    %v1695 = vshrl.u32 %v1694, 7
    %v1696 = vsub.s32 0, %v1695
    %v1697 = vrot.slane %v1693, %v1696
    %v1699 = vsel %vm645, %v1687, 0
    %v1702 = vsel %vm645, %v1688, 0
    %1704 = vmatprep.subr.mxu0 0.0
    %1705 = vmatpush1.msra.mxu0 %v1689
    %1706 = vmatprep.subr.mxu0 0.0
    %1707 = vmatpush1.msra.mxu0 %v1690
    %1708 = vmatprep.subr.mxu0 0.0
    %1709 = vmatpush1.msra.mxu0 %v1691
    %1710 = vmatprep.subr.mxu0 0.0
    %1711 = vmatpush1.msra.mxu0 %v1692
    %1712 = vmatprep.subr.mxu0 0.0
    %1713 = vmatpush1.msra.mxu0 0.0
    %1714 = vmatprep.subr.mxu0 0.0
    %1715 = vmatpush1.msra.mxu0 0.0
    %1716 = vmatprep.subr.mxu0 0.0
    %1717 = vmatpush1.msra.mxu0 0.0
    %1718 = vmatprep.subr.mxu0 0.0
    %1719 = vmatpush1.msra.mxu0 0.0
    %1720 = vmatprep.subr.mxu0 0.0
    %1721 = vmatpush1.msra.mxu0 0.0
    %1722 = vmatprep.subr.mxu0 0.0
    %1723 = vmatpush1.msra.mxu0 0.0
    %1724 = vmatprep.subr.mxu0 0.0
    %1725 = vmatpush1.msra.mxu0 0.0
    %1726 = vmatprep.subr.mxu0 0.0
    %1727 = vmatpush1.msra.mxu0 0.0
    %1728 = vmatprep.subr.mxu0 0.0
    %1729 = vmatpush1.msra.mxu0 0.0
    %1730 = vmatprep.subr.mxu0 0.0
    %1731 = vmatpush1.msra.mxu0 0.0
    %1732 = vmatprep.subr.mxu0 0.0
    %1733 = vmatpush1.msra.mxu0 0.0
    %1734 = vmatprep.subr.mxu0 0.0
    %1735 = vmatpush1.msra.mxu0 0.0
    %1736 = vmatprep.subr.mxu0 0.0
    %1737 = vmatpush1.msra.mxu0 0.0
    %1738 = vmatprep.subr.mxu0 0.0
    %1739 = vmatpush1.msra.mxu0 0.0
    %1740 = vmatprep.subr.mxu0 0.0
    %1741 = vmatpush1.msra.mxu0 0.0
    %1742 = vmatprep.subr.mxu0 0.0
    %1743 = vmatpush1.msra.mxu0 0.0
    %1744 = vmatprep.subr.mxu0 0.0
    %1745 = vmatpush1.msra.mxu0 0.0
    %1746 = vmatprep.subr.mxu0 0.0
    %1747 = vmatpush1.msra.mxu0 0.0
    %1748 = vmatprep.subr.mxu0 0.0
    %1749 = vmatpush1.msra.mxu0 0.0
    %1750 = vmatprep.subr.mxu0 0.0
    %1751 = vmatpush1.msra.mxu0 0.0
    %1752 = vmatprep.subr.mxu0 0.0
    %1753 = vmatpush1.msra.mxu0 0.0
    %1754 = vmatprep.subr.mxu0 0.0
    %1755 = vmatpush1.msra.mxu0 0.0
    %1756 = vmatprep.subr.mxu0 0.0
    %1757 = vmatpush1.msra.mxu0 0.0
    %1758 = vmatprep.subr.mxu0 0.0
    %1759 = vmatpush1.msra.mxu0 0.0
    %1760 = vmatprep.subr.mxu0 0.0
    %1761 = vmatpush1.msra.mxu0 0.0
    %1762 = vmatprep.subr.mxu0 0.0
    %1763 = vmatpush1.msra.mxu0 0.0
    %1764 = vmatprep.subr.mxu0 0.0
    %1765 = vmatpush1.msra.mxu0 0.0
    %1766 = vmatprep.subr.mxu0 0.0
    %1767 = vmatpush1.msra.mxu0 0.0
    %1768 = vmatprep.mubr.f32.mxu0 0.0
    %1769 = vmatmul.mubr.f32.gmra.mrb[0].mxu0 %v1699
    %v1770 = vpop.f32.mrb[0].mxu0
    %v1771 = vadd.f32 %v1697, %v1770
    %v1772 = vpop.f32.mrb[0].mxu0
    %1773 = vmatprep.mubr.f32.mxu0 0.0
    %1774 = vmatmul.mubr.f32.gmra.mrb[0].mxu0 %v1702
    %v1775 = vpop.f32.mrb[0].mxu0
    %v1776 = vadd.f32 %v1697, %v1775
    %v1777 = vpop.f32.mrb[0].mxu0
    %1778 = vdwg.mxu0
    %v1779 = vmax.f32 %v1771, 0.0
    %v1780 = vmax.f32 %v1776, 0.0
    %v1781 = vld [vmem:[%s8] sm:$0xff]
    %v1782 = vld [vmem:[%s8 + $0x8] sm:$0xff]
    %v1783 = vld [vmem:[%s8 + $0x10] sm:$0xff]
    %v1784 = vld [vmem:[%s8 + $0x18] sm:$0xff]
    %v1785 = vld [vmem:[%s8 + $0x20] sm:$0xff]
    %v1786 = vld [vmem:[%s8 + $0x28] sm:$0xff]
    %v1787 = vld [vmem:[%s8 + $0x30] sm:$0xff]
    %v1788 = vld [vmem:[%s8 + $0x38] sm:$0xff]
    %v1789 = vld [vmem:[#allocation10 + $0x8] sm:$0x1]
    %v1790 = vlaneseq
    %v1791 = vshrl.u32 %v1790, 7
    %v1792 = vsub.s32 0, %v1791
    %v1793 = vrot.slane %v1789, %v1792
    %vm1794 = vcmask 523264
    %v1796 = vsel %vm1794, %v1779, 0
    %v1799 = vsel %vm1794, %v1780, 0
    %1801 = vmatprep.subr.mxu0 0.0
    %1802 = vmatpush1.msra.mxu0 %v1781
    %1803 = vmatprep.subr.mxu0 0.0
    %1804 = vmatpush1.msra.mxu0 %v1782
    %1805 = vmatprep.subr.mxu0 0.0
    %1806 = vmatpush1.msra.mxu0 %v1783
    %1807 = vmatprep.subr.mxu0 0.0
    %1808 = vmatpush1.msra.mxu0 %v1784
    %1809 = vmatprep.subr.mxu0 0.0
    %1810 = vmatpush1.msra.mxu0 %v1785
    %1811 = vmatprep.subr.mxu0 0.0
    %1812 = vmatpush1.msra.mxu0 %v1786
    %1813 = vmatprep.subr.mxu0 0.0
    %1814 = vmatpush1.msra.mxu0 %v1787
    %1815 = vmatprep.subr.mxu0 0.0
    %1816 = vmatpush1.msra.mxu0 %v1788
    %1817 = vmatprep.subr.mxu0 0.0
    %1818 = vmatpush1.msra.mxu0 0.0
    %1819 = vmatprep.subr.mxu0 0.0
    %1820 = vmatpush1.msra.mxu0 0.0
    %1821 = vmatprep.subr.mxu0 0.0
    %1822 = vmatpush1.msra.mxu0 0.0
    %1823 = vmatprep.subr.mxu0 0.0
    %1824 = vmatpush1.msra.mxu0 0.0
    %1825 = vmatprep.subr.mxu0 0.0
    %1826 = vmatpush1.msra.mxu0 0.0
    %1827 = vmatprep.subr.mxu0 0.0
    %1828 = vmatpush1.msra.mxu0 0.0
    %1829 = vmatprep.subr.mxu0 0.0
    %1830 = vmatpush1.msra.mxu0 0.0
    %1831 = vmatprep.subr.mxu0 0.0
    %1832 = vmatpush1.msra.mxu0 0.0
    %1833 = vmatprep.subr.mxu0 0.0
    %1834 = vmatpush1.msra.mxu0 0.0
    %1835 = vmatprep.subr.mxu0 0.0
    %1836 = vmatpush1.msra.mxu0 0.0
    %1837 = vmatprep.subr.mxu0 0.0
    %1838 = vmatpush1.msra.mxu0 0.0
    %1839 = vmatprep.subr.mxu0 0.0
    %1840 = vmatpush1.msra.mxu0 0.0
    %1841 = vmatprep.subr.mxu0 0.0
    %1842 = vmatpush1.msra.mxu0 0.0
    %1843 = vmatprep.subr.mxu0 0.0
    %1844 = vmatpush1.msra.mxu0 0.0
    %1845 = vmatprep.subr.mxu0 0.0
    %1846 = vmatpush1.msra.mxu0 0.0
    %1847 = vmatprep.subr.mxu0 0.0
    %1848 = vmatpush1.msra.mxu0 0.0
    %1849 = vmatprep.subr.mxu0 0.0
    %1850 = vmatpush1.msra.mxu0 0.0
    %1851 = vmatprep.subr.mxu0 0.0
    %1852 = vmatpush1.msra.mxu0 0.0
    %1853 = vmatprep.subr.mxu0 0.0
    %1854 = vmatpush1.msra.mxu0 0.0
    %1855 = vmatprep.subr.mxu0 0.0
    %1856 = vmatpush1.msra.mxu0 0.0
    %1857 = vmatprep.subr.mxu0 0.0
    %1858 = vmatpush1.msra.mxu0 0.0
    %1859 = vmatprep.subr.mxu0 0.0
    %1860 = vmatpush1.msra.mxu0 0.0
    %1861 = vmatprep.subr.mxu0 0.0
    %1862 = vmatpush1.msra.mxu0 0.0
    %1863 = vmatprep.subr.mxu0 0.0
    %1864 = vmatpush1.msra.mxu0 0.0
    %1865 = vmatprep.mubr.f32.mxu0 0.0
    %1866 = vmatmul.mubr.f32.gmra.mrb[0].mxu0 %v1796
    %v1867 = vpop.f32.mrb[0].mxu0
    %v1868 = vadd.f32 %v1793, %v1867
    %v1869 = vpop.f32.mrb[0].mxu0
    %1870 = vmatprep.mubr.f32.mxu0 0.0
    %1871 = vmatmul.mubr.f32.gmra.mrb[0].mxu0 %v1799
    %v1872 = vpop.f32.mrb[0].mxu0
    %v1873 = vadd.f32 %v1793, %v1872
    %v1874 = vpop.f32.mrb[0].mxu0
    %1875 = vdwg.mxu0
    %v1876 = vadd.f32 %v1687, %v1868
    %v1877 = vadd.f32 %v1688, %v1873
    %v1878 = vsel %vm645, %v1876, 0.0
    %1879 = vadd.xlane.f32.xlu0 %v1878
    %v1880 = vpop.xlane.xlu0 %1879
    %v1881 = vsel %vm645, %v1877, 0.0
    %1882 = vadd.xlane.f32.xlu0 %v1881
    %v1883 = vpop.xlane.xlu0 %1882
    %v1884 = vmul.f32 %v1880, %v1654
    %v1885 = vmul.f32 %v1883, %v1654
    %v1886 = vsub.f32 %v1876, %v1884
    %v1887 = vsub.f32 %v1877, %v1885
    %v1888 = vmul.f32 %v1886, %v1886
    %v1889 = vmul.f32 %v1887, %v1887
    %v1890 = vsel %vm645, %v1888, 0.0
    %1891 = vadd.xlane.f32.xlu0 %v1890
    %v1892 = vpop.xlane.xlu0 %1891
    %v1893 = vsel %vm645, %v1889, 0.0
    %1894 = vadd.xlane.f32.xlu0 %v1893
    %v1895 = vpop.xlane.xlu0 %1894
    %v1896 = vmul.f32 %v1892, %v1654
    %v1897 = vmul.f32 %v1895, %v1654
    %v1898 = vadd.f32 %v1896, 1e-05
    %v1899 = vadd.f32 %v1897, 1e-05
    %v1900 = vrsqrt.pop %v1898
    %v1901 = vrsqrt.pop %v1899
    %v1902 = vmul.f32 %v1886, %v1900
    %v1903 = vmul.f32 %v1887, %v1901
    %v1904 = vld [vmem:[#allocation10 + $0x9] sm:$0x1]
    %v1905 = vlaneseq
    %v1906 = vshrl.u32 %v1905, 7
    %v1907 = vsub.s32 0, %v1906
    %v1908 = vrot.slane %v1904, %v1907
    %v1909 = vmul.f32 %v1902, %v1908
    %v1910 = vmul.f32 %v1903, %v1908
    %v1911 = vld [vmem:[#allocation10 + $0xa] sm:$0x1]
    %v1912 = vlaneseq
    %v1913 = vshrl.u32 %v1912, 7
    %v1914 = vsub.s32 0, %v1913
    %v1915 = vrot.slane %v1911, %v1914
    %v1916 = vadd.f32 %v1909, %v1915
    %v1917 = vadd.f32 %v1910, %v1915
    %v1918 = vmul.f32 %v1916, %v297
    %v1919 = vmul.f32 %v1917, %v302
    %v1920 = vmul.f32 %v634, 0.5
    %v1921 = vmul.f32 %v635, 0.5
    %v1922 = vmul.f32 %v1918, 0.5
    %v1923 = vmul.f32 %v1919, 0.5
    %v1924 = vadd.f32 %v1920, %v1922
    %v1925 = vadd.f32 %v1921, %v1923
    %1926 = vmatprep.subr.mxu0 0.0
    %1927 = vmatpush1.msra.mxu0 %v634
    %1928 = vmatprep.subr.mxu0 0.0
    %1929 = vmatpush1.msra.mxu0 %v635
    %1930 = vmatprep.subr.mxu0 0.0
    %1931 = vmatpush1.msra.mxu0 0.0
    %1932 = vmatprep.subr.mxu0 0.0
    %1933 = vmatpush1.msra.mxu0 0.0
    %1934 = vmatprep.subr.mxu0 0.0
    %1935 = vmatpush1.msra.mxu0 0.0
    %1936 = vmatprep.subr.mxu0 0.0
    %1937 = vmatpush1.msra.mxu0 0.0
    %1938 = vmatprep.subr.mxu0 0.0
    %1939 = vmatpush1.msra.mxu0 0.0
    %1940 = vmatprep.subr.mxu0 0.0
    %1941 = vmatpush1.msra.mxu0 0.0
    %1942 = vmatprep.subr.mxu0 0.0
    %1943 = vmatpush1.msra.mxu0 0.0
    %1944 = vmatprep.subr.mxu0 0.0
    %1945 = vmatpush1.msra.mxu0 0.0
    %1946 = vmatprep.subr.mxu0 0.0
    %1947 = vmatpush1.msra.mxu0 0.0
    %1948 = vmatprep.subr.mxu0 0.0
    %1949 = vmatpush1.msra.mxu0 0.0
    %1950 = vmatprep.subr.mxu0 0.0
    %1951 = vmatpush1.msra.mxu0 0.0
    %1952 = vmatprep.subr.mxu0 0.0
    %1953 = vmatpush1.msra.mxu0 0.0
    %1954 = vmatprep.subr.mxu0 0.0
    %1955 = vmatpush1.msra.mxu0 0.0
    %1956 = vmatprep.subr.mxu0 0.0
    %1957 = vmatpush1.msra.mxu0 0.0
    %1958 = vmatprep.subr.mxu0 0.0
    %1959 = vmatpush1.msra.mxu0 0.0
    %1960 = vmatprep.subr.mxu0 0.0
    %1961 = vmatpush1.msra.mxu0 0.0
    %1962 = vmatprep.subr.mxu0 0.0
    %1963 = vmatpush1.msra.mxu0 0.0
    %1964 = vmatprep.subr.mxu0 0.0
    %1965 = vmatpush1.msra.mxu0 0.0
    %1966 = vmatprep.subr.mxu0 0.0
    %1967 = vmatpush1.msra.mxu0 0.0
    %1968 = vmatprep.subr.mxu0 0.0
    %1969 = vmatpush1.msra.mxu0 0.0
    %1970 = vmatprep.subr.mxu0 0.0
    %1971 = vmatpush1.msra.mxu0 0.0
    %1972 = vmatprep.subr.mxu0 0.0
    %1973 = vmatpush1.msra.mxu0 0.0
    %1974 = vmatprep.subr.mxu0 0.0
    %1975 = vmatpush1.msra.mxu0 0.0
    %1976 = vmatprep.subr.mxu0 0.0
    %1977 = vmatpush1.msra.mxu0 0.0
    %1978 = vmatprep.subr.mxu0 0.0
    %1979 = vmatpush1.msra.mxu0 0.0
    %1980 = vmatprep.subr.mxu0 0.0
    %1981 = vmatpush1.msra.mxu0 0.0
    %1982 = vmatprep.subr.mxu0 0.0
    %1983 = vmatpush1.msra.mxu0 0.0
    %1984 = vmatprep.subr.mxu0 0.0
    %1985 = vmatpush1.msra.mxu0 0.0
    %1986 = vmatprep.subr.mxu0 0.0
    %1987 = vmatpush1.msra.mxu0 0.0
    %1988 = vmatprep.subr.mxu0 0.0
    %1989 = vmatpush1.msra.mxu0 0.0
    %1990 = vmatprep.mubr.f32.mxu0 0.0
    %1991 = vmatmul.mubr.f32.gmra.mrb[0].mxu0 %v126
    %v1992 = vpop.f32.mrb[0].mxu0
    %v1993 = vadd.f32 0.0, %v1992
    %v1994 = vpop.f32.mrb[0].mxu0
    %1995 = vmatprep.mubr.f32.mxu0 0.0
    %1996 = vmatmul.mubr.f32.gmra.mrb[0].mxu0 %v129
    %v1997 = vpop.f32.mrb[0].mxu0
    %v1998 = vadd.f32 0.0, %v1997
    %v1999 = vpop.f32.mrb[0].mxu0
    %2000 = vdwg.mxu0
    %v2001 = vld [vmem:[#allocation8] sm:$0xff]
    %v2002 = vld [vmem:[#allocation8 + $0x8] sm:$0xff]
    %v2003 = vld [vmem:[#allocation8 + $0x10] sm:$0xff]
    %v2004 = vld [vmem:[#allocation8 + $0x18] sm:$0xff]
    %v2005 = vld [vmem:[#allocation10 + $0x13] sm:$0x1]
    %v2006 = vlaneseq
    %v2007 = vshrl.u32 %v2006, 7
    %v2008 = vsub.s32 0, %v2007
    %v2009 = vrot.slane %v2005, %v2008
    %v2011 = vsel %vm645, %v1993, 0
    %v2014 = vsel %vm645, %v1998, 0
    %2016 = vmatprep.subr.mxu0 0.0
    %2017 = vmatpush1.msra.mxu0 %v2001
    %2018 = vmatprep.subr.mxu0 0.0
    %2019 = vmatpush1.msra.mxu0 %v2002
    %2020 = vmatprep.subr.mxu0 0.0
    %2021 = vmatpush1.msra.mxu0 %v2003
    %2022 = vmatprep.subr.mxu0 0.0
    %2023 = vmatpush1.msra.mxu0 %v2004
    %2024 = vmatprep.subr.mxu0 0.0
    %2025 = vmatpush1.msra.mxu0 0.0
    %2026 = vmatprep.subr.mxu0 0.0
    %2027 = vmatpush1.msra.mxu0 0.0
    %2028 = vmatprep.subr.mxu0 0.0
    %2029 = vmatpush1.msra.mxu0 0.0
    %2030 = vmatprep.subr.mxu0 0.0
    %2031 = vmatpush1.msra.mxu0 0.0
    %2032 = vmatprep.subr.mxu0 0.0
    %2033 = vmatpush1.msra.mxu0 0.0
    %2034 = vmatprep.subr.mxu0 0.0
    %2035 = vmatpush1.msra.mxu0 0.0
    %2036 = vmatprep.subr.mxu0 0.0
    %2037 = vmatpush1.msra.mxu0 0.0
    %2038 = vmatprep.subr.mxu0 0.0
    %2039 = vmatpush1.msra.mxu0 0.0
    %2040 = vmatprep.subr.mxu0 0.0
    %2041 = vmatpush1.msra.mxu0 0.0
    %2042 = vmatprep.subr.mxu0 0.0
    %2043 = vmatpush1.msra.mxu0 0.0
    %2044 = vmatprep.subr.mxu0 0.0
    %2045 = vmatpush1.msra.mxu0 0.0
    %2046 = vmatprep.subr.mxu0 0.0
    %2047 = vmatpush1.msra.mxu0 0.0
    %2048 = vmatprep.subr.mxu0 0.0
    %2049 = vmatpush1.msra.mxu0 0.0
    %2050 = vmatprep.subr.mxu0 0.0
    %2051 = vmatpush1.msra.mxu0 0.0
    %2052 = vmatprep.subr.mxu0 0.0
    %2053 = vmatpush1.msra.mxu0 0.0
    %2054 = vmatprep.subr.mxu0 0.0
    %2055 = vmatpush1.msra.mxu0 0.0
    %2056 = vmatprep.subr.mxu0 0.0
    %2057 = vmatpush1.msra.mxu0 0.0
    %2058 = vmatprep.subr.mxu0 0.0
    %2059 = vmatpush1.msra.mxu0 0.0
    %2060 = vmatprep.subr.mxu0 0.0
    %2061 = vmatpush1.msra.mxu0 0.0
    %2062 = vmatprep.subr.mxu0 0.0
    %2063 = vmatpush1.msra.mxu0 0.0
    %2064 = vmatprep.subr.mxu0 0.0
    %2065 = vmatpush1.msra.mxu0 0.0
    %2066 = vmatprep.subr.mxu0 0.0
    %2067 = vmatpush1.msra.mxu0 0.0
    %2068 = vmatprep.subr.mxu0 0.0
    %2069 = vmatpush1.msra.mxu0 0.0
    %2070 = vmatprep.subr.mxu0 0.0
    %2071 = vmatpush1.msra.mxu0 0.0
    %2072 = vmatprep.subr.mxu0 0.0
    %2073 = vmatpush1.msra.mxu0 0.0
    %2074 = vmatprep.subr.mxu0 0.0
    %2075 = vmatpush1.msra.mxu0 0.0
    %2076 = vmatprep.subr.mxu0 0.0
    %2077 = vmatpush1.msra.mxu0 0.0
    %2078 = vmatprep.subr.mxu0 0.0
    %2079 = vmatpush1.msra.mxu0 0.0
    %2080 = vmatprep.mubr.f32.mxu0 0.0
    %2081 = vmatmul.mubr.f32.gmra.mrb[0].mxu0 %v2011
    %v2082 = vpop.f32.mrb[0].mxu0
    %v2083 = vadd.f32 %v2009, %v2082
    %v2084 = vpop.f32.mrb[0].mxu0
    %2085 = vmatprep.mubr.f32.mxu0 0.0
    %2086 = vmatmul.mubr.f32.gmra.mrb[0].mxu0 %v2014
    %v2087 = vpop.f32.mrb[0].mxu0
    %v2088 = vadd.f32 %v2009, %v2087
    %v2089 = vpop.f32.mrb[0].mxu0
    %2090 = vdwg.mxu0
    %v2091 = vmax.f32 %v2083, 0.0
    %v2092 = vmax.f32 %v2088, 0.0
    %v2093 = vmul.f32 %v2091, %v297
    %v2094 = vmul.f32 %v2092, %v302
    %s2095 = scalar_lea.vmem %s5, 32
    %v2096 = vld [vmem:[%s2095] sm:$0xff]
    %v2097 = vld [vmem:[%s2095 + $0x8] sm:$0xff]
    %v2098 = vld [vmem:[%s2095 + $0x10] sm:$0xff]
    %v2099 = vld [vmem:[%s2095 + $0x18] sm:$0xff]
    %v2100 = vld [vmem:[#allocation10 + $0xb] sm:$0x1]
    %v2101 = vlaneseq
    %v2102 = vshrl.u32 %v2101, 7
    %v2103 = vsub.s32 0, %v2102
    %v2104 = vrot.slane %v2100, %v2103
    %v2106 = vsel %vm645, %v1918, 0
    %v2109 = vsel %vm645, %v1919, 0
    %2111 = vmatprep.subr.mxu0 0.0
    %2112 = vmatpush1.msra.mxu0 %v2096
    %2113 = vmatprep.subr.mxu0 0.0
    %2114 = vmatpush1.msra.mxu0 %v2097
    %2115 = vmatprep.subr.mxu0 0.0
    %2116 = vmatpush1.msra.mxu0 %v2098
    %2117 = vmatprep.subr.mxu0 0.0
    %2118 = vmatpush1.msra.mxu0 %v2099
    %2119 = vmatprep.subr.mxu0 0.0
    %2120 = vmatpush1.msra.mxu0 0.0
    %2121 = vmatprep.subr.mxu0 0.0
    %2122 = vmatpush1.msra.mxu0 0.0
    %2123 = vmatprep.subr.mxu0 0.0
    %2124 = vmatpush1.msra.mxu0 0.0
    %2125 = vmatprep.subr.mxu0 0.0
    %2126 = vmatpush1.msra.mxu0 0.0
    %2127 = vmatprep.subr.mxu0 0.0
    %2128 = vmatpush1.msra.mxu0 0.0
    %2129 = vmatprep.subr.mxu0 0.0
    %2130 = vmatpush1.msra.mxu0 0.0
    %2131 = vmatprep.subr.mxu0 0.0
    %2132 = vmatpush1.msra.mxu0 0.0
    %2133 = vmatprep.subr.mxu0 0.0
    %2134 = vmatpush1.msra.mxu0 0.0
    %2135 = vmatprep.subr.mxu0 0.0
    %2136 = vmatpush1.msra.mxu0 0.0
    %2137 = vmatprep.subr.mxu0 0.0
    %2138 = vmatpush1.msra.mxu0 0.0
    %2139 = vmatprep.subr.mxu0 0.0
    %2140 = vmatpush1.msra.mxu0 0.0
    %2141 = vmatprep.subr.mxu0 0.0
    %2142 = vmatpush1.msra.mxu0 0.0
    %2143 = vmatprep.subr.mxu0 0.0
    %2144 = vmatpush1.msra.mxu0 0.0
    %2145 = vmatprep.subr.mxu0 0.0
    %2146 = vmatpush1.msra.mxu0 0.0
    %2147 = vmatprep.subr.mxu0 0.0
    %2148 = vmatpush1.msra.mxu0 0.0
    %2149 = vmatprep.subr.mxu0 0.0
    %2150 = vmatpush1.msra.mxu0 0.0
    %2151 = vmatprep.subr.mxu0 0.0
    %2152 = vmatpush1.msra.mxu0 0.0
    %2153 = vmatprep.subr.mxu0 0.0
    %2154 = vmatpush1.msra.mxu0 0.0
    %2155 = vmatprep.subr.mxu0 0.0
    %2156 = vmatpush1.msra.mxu0 0.0
    %2157 = vmatprep.subr.mxu0 0.0
    %2158 = vmatpush1.msra.mxu0 0.0
    %2159 = vmatprep.subr.mxu0 0.0
    %2160 = vmatpush1.msra.mxu0 0.0
    %2161 = vmatprep.subr.mxu0 0.0
    %2162 = vmatpush1.msra.mxu0 0.0
    %2163 = vmatprep.subr.mxu0 0.0
    %2164 = vmatpush1.msra.mxu0 0.0
    %2165 = vmatprep.subr.mxu0 0.0
    %2166 = vmatpush1.msra.mxu0 0.0
    %2167 = vmatprep.subr.mxu0 0.0
    %2168 = vmatpush1.msra.mxu0 0.0
    %2169 = vmatprep.subr.mxu0 0.0
    %2170 = vmatpush1.msra.mxu0 0.0
    %2171 = vmatprep.subr.mxu0 0.0
    %2172 = vmatpush1.msra.mxu0 0.0
    %2173 = vmatprep.subr.mxu0 0.0
    %2174 = vmatpush1.msra.mxu0 0.0
    %2175 = vmatprep.mubr.f32.mxu0 0.0
    %2176 = vmatmul.mubr.f32.gmra.mrb[0].mxu0 %v2106
    %v2177 = vpop.f32.mrb[0].mxu0
    %v2178 = vadd.f32 %v2104, %v2177
    %v2179 = vpop.f32.mrb[0].mxu0
    %2180 = vmatprep.mubr.f32.mxu0 0.0
    %2181 = vmatmul.mubr.f32.gmra.mrb[0].mxu0 %v2109
    %v2182 = vpop.f32.mrb[0].mxu0
    %v2183 = vadd.f32 %v2104, %v2182
    %v2184 = vpop.f32.mrb[0].mxu0
    %2185 = vdwg.mxu0
    %2188 = vrot.lane.b32.xlu0 %v2178, 96
    %v2189 = vpop.permute.xlu0 %2188
    %2190 = vrot.lane.b32.xlu0 %v2183, 96
    %v2191 = vpop.permute.xlu0 %2190
    %v2192 = vsel %vm212, %v2178, 0
    %v2194 = vsel %vm212, %v2183, 0
    %v2196 = vsel %vm212, %v2189, 0
    %v2198 = vsel %vm212, %v2191, 0
    %2200 = vmatprep.subr.mxu0 0.0
    %2201 = vmatpush1.xpose.msra.mxu0 %v2196
    %2202 = vmatprep.subr.mxu0 0.0
    %2203 = vmatpush1.xpose.msra.mxu0 %v2198
    %2204 = vmatprep.subr.mxu0 0.0
    %2205 = vmatpush1.xpose.msra.mxu0 0.0
    %2206 = vmatprep.subr.mxu0 0.0
    %2207 = vmatpush1.xpose.msra.mxu0 0.0
    %2208 = vmatprep.subr.mxu0 0.0
    %2209 = vmatpush1.xpose.msra.mxu0 0.0
    %2210 = vmatprep.subr.mxu0 0.0
    %2211 = vmatpush1.xpose.msra.mxu0 0.0
    %2212 = vmatprep.subr.mxu0 0.0
    %2213 = vmatpush1.xpose.msra.mxu0 0.0
    %2214 = vmatprep.subr.mxu0 0.0
    %2215 = vmatpush1.xpose.msra.mxu0 0.0
    %2216 = vmatprep.subr.mxu0 0.0
    %2217 = vmatpush1.xpose.msra.mxu0 0.0
    %2218 = vmatprep.subr.mxu0 0.0
    %2219 = vmatpush1.xpose.msra.mxu0 0.0
    %2220 = vmatprep.subr.mxu0 0.0
    %2221 = vmatpush1.xpose.msra.mxu0 0.0
    %2222 = vmatprep.subr.mxu0 0.0
    %2223 = vmatpush1.xpose.msra.mxu0 0.0
    %2224 = vmatprep.subr.mxu0 0.0
    %2225 = vmatpush1.xpose.msra.mxu0 0.0
    %2226 = vmatprep.subr.mxu0 0.0
    %2227 = vmatpush1.xpose.msra.mxu0 0.0
    %2228 = vmatprep.subr.mxu0 0.0
    %2229 = vmatpush1.xpose.msra.mxu0 0.0
    %2230 = vmatprep.subr.mxu0 0.0
    %2231 = vmatpush1.xpose.msra.mxu0 0.0
    %2232 = vmatprep.subr.mxu0 0.0
    %2233 = vmatpush1.xpose.msra.mxu0 0.0
    %2234 = vmatprep.subr.mxu0 0.0
    %2235 = vmatpush1.xpose.msra.mxu0 0.0
    %2236 = vmatprep.subr.mxu0 0.0
    %2237 = vmatpush1.xpose.msra.mxu0 0.0
    %2238 = vmatprep.subr.mxu0 0.0
    %2239 = vmatpush1.xpose.msra.mxu0 0.0
    %2240 = vmatprep.subr.mxu0 0.0
    %2241 = vmatpush1.xpose.msra.mxu0 0.0
    %2242 = vmatprep.subr.mxu0 0.0
    %2243 = vmatpush1.xpose.msra.mxu0 0.0
    %2244 = vmatprep.subr.mxu0 0.0
    %2245 = vmatpush1.xpose.msra.mxu0 0.0
    %2246 = vmatprep.subr.mxu0 0.0
    %2247 = vmatpush1.xpose.msra.mxu0 0.0
    %2248 = vmatprep.subr.mxu0 0.0
    %2249 = vmatpush1.xpose.msra.mxu0 0.0
    %2250 = vmatprep.subr.mxu0 0.0
    %2251 = vmatpush1.xpose.msra.mxu0 0.0
    %2252 = vmatprep.subr.mxu0 0.0
    %2253 = vmatpush1.xpose.msra.mxu0 0.0
    %2254 = vmatprep.subr.mxu0 0.0
    %2255 = vmatpush1.xpose.msra.mxu0 0.0
    %2256 = vmatprep.subr.mxu0 0.0
    %2257 = vmatpush1.xpose.msra.mxu0 0.0
    %2258 = vmatprep.subr.mxu0 0.0
    %2259 = vmatpush1.xpose.msra.mxu0 0.0
    %2260 = vmatprep.subr.mxu0 0.0
    %2261 = vmatpush1.xpose.msra.mxu0 0.0
    %2262 = vmatprep.subr.mxu0 0.0
    %2263 = vmatpush1.xpose.msra.mxu0 0.0
    %2264 = vmatprep.mubr.f32.mxu0 0.0
    %2265 = vmatmul.mubr.f32.gmra.mrb[0].mxu0 %v2192
    %v2266 = vpop.f32.mrb[0].mxu0
    %v2267 = vadd.f32 %v120, %v2266
    %v2268 = vpop.f32.mrb[0].mxu0
    %2269 = vmatprep.mubr.f32.mxu0 0.0
    %2270 = vmatmul.mubr.f32.gmra.mrb[0].mxu0 %v2194
    %v2271 = vpop.f32.mrb[0].mxu0
    %v2272 = vadd.f32 %v121, %v2271
    %v2273 = vpop.f32.mrb[0].mxu0
    %2274 = vdwg.mxu0
    %v2275 = vsel %vm124, %v2267, -inf
    %2276 = vmax.xlane.f32.xlu0 %v2275
    %v2277 = vpop.xlane.xlu0 %2276
    %v2278 = vsel %vm124, %v2272, -inf
    %2279 = vmax.xlane.f32.xlu0 %v2278
    %v2280 = vpop.xlane.xlu0 %2279
    %v2281 = vsub.f32 %v2267, %v2277
    %v2282 = vsub.f32 %v2272, %v2280
    %v2283 = vmul.f32 %v2281, 1.442695
    %v2284 = vpow.pop %v2283
    %v2285 = vmul.f32 %v2282, 1.442695
    %v2286 = vpow.pop %v2285
    %v2287 = vsel %vm124, %v2284, 0.0
    %2288 = vadd.xlane.f32.xlu0 %v2287
    %v2289 = vpop.xlane.xlu0 %2288
    %v2290 = vsel %vm124, %v2286, 0.0
    %2291 = vadd.xlane.f32.xlu0 %v2290
    %v2292 = vpop.xlane.xlu0 %2291
    %v2293 = vrcp.pop %v2289
    %v2294 = vrcp.pop %v2292
    %v2295 = vmul.f32 %v2284, %v2293
    %v2296 = vmul.f32 %v2286, %v2294
    %2297 = vrot.lane.b32.xlu0 %v2178, 64
    %v2298 = vpop.permute.xlu0 %2297
    %2299 = vrot.lane.b32.xlu0 %v2183, 64
    %v2300 = vpop.permute.xlu0 %2299
    %v2304 = vsel %vm124, %v2295, 0
    %v2307 = vsel %vm124, %v2296, 0
    %2309 = vmatprep.subr.mxu0 0.0
    %2310 = vmatpush1.msra.mxu0 %v2298
    %2311 = vmatprep.subr.mxu0 0.0
    %2312 = vmatpush1.msra.mxu0 %v2300
    %2313 = vmatprep.subr.mxu0 0.0
    %2314 = vmatpush1.msra.mxu0 0.0
    %2315 = vmatprep.subr.mxu0 0.0
    %2316 = vmatpush1.msra.mxu0 0.0
    %2317 = vmatprep.subr.mxu0 0.0
    %2318 = vmatpush1.msra.mxu0 0.0
    %2319 = vmatprep.subr.mxu0 0.0
    %2320 = vmatpush1.msra.mxu0 0.0
    %2321 = vmatprep.subr.mxu0 0.0
    %2322 = vmatpush1.msra.mxu0 0.0
    %2323 = vmatprep.subr.mxu0 0.0
    %2324 = vmatpush1.msra.mxu0 0.0
    %2325 = vmatprep.subr.mxu0 0.0
    %2326 = vmatpush1.msra.mxu0 0.0
    %2327 = vmatprep.subr.mxu0 0.0
    %2328 = vmatpush1.msra.mxu0 0.0
    %2329 = vmatprep.subr.mxu0 0.0
    %2330 = vmatpush1.msra.mxu0 0.0
    %2331 = vmatprep.subr.mxu0 0.0
    %2332 = vmatpush1.msra.mxu0 0.0
    %2333 = vmatprep.subr.mxu0 0.0
    %2334 = vmatpush1.msra.mxu0 0.0
    %2335 = vmatprep.subr.mxu0 0.0
    %2336 = vmatpush1.msra.mxu0 0.0
    %2337 = vmatprep.subr.mxu0 0.0
    %2338 = vmatpush1.msra.mxu0 0.0
    %2339 = vmatprep.subr.mxu0 0.0
    %2340 = vmatpush1.msra.mxu0 0.0
    %2341 = vmatprep.subr.mxu0 0.0
    %2342 = vmatpush1.msra.mxu0 0.0
    %2343 = vmatprep.subr.mxu0 0.0
    %2344 = vmatpush1.msra.mxu0 0.0
    %2345 = vmatprep.subr.mxu0 0.0
    %2346 = vmatpush1.msra.mxu0 0.0
    %2347 = vmatprep.subr.mxu0 0.0
    %2348 = vmatpush1.msra.mxu0 0.0
    %2349 = vmatprep.subr.mxu0 0.0
    %2350 = vmatpush1.msra.mxu0 0.0
    %2351 = vmatprep.subr.mxu0 0.0
    %2352 = vmatpush1.msra.mxu0 0.0
    %2353 = vmatprep.subr.mxu0 0.0
    %2354 = vmatpush1.msra.mxu0 0.0
    %2355 = vmatprep.subr.mxu0 0.0
    %2356 = vmatpush1.msra.mxu0 0.0
    %2357 = vmatprep.subr.mxu0 0.0
    %2358 = vmatpush1.msra.mxu0 0.0
    %2359 = vmatprep.subr.mxu0 0.0
    %2360 = vmatpush1.msra.mxu0 0.0
    %2361 = vmatprep.subr.mxu0 0.0
    %2362 = vmatpush1.msra.mxu0 0.0
    %2363 = vmatprep.subr.mxu0 0.0
    %2364 = vmatpush1.msra.mxu0 0.0
    %2365 = vmatprep.subr.mxu0 0.0
    %2366 = vmatpush1.msra.mxu0 0.0
    %2367 = vmatprep.subr.mxu0 0.0
    %2368 = vmatpush1.msra.mxu0 0.0
    %2369 = vmatprep.subr.mxu0 0.0
    %2370 = vmatpush1.msra.mxu0 0.0
    %2371 = vmatprep.subr.mxu0 0.0
    %2372 = vmatpush1.msra.mxu0 0.0
    %2373 = vmatprep.mubr.f32.mxu0 0.0
    %2374 = vmatmul.mubr.f32.gmra.mrb[0].mxu0 %v2304
    %v2375 = vpop.f32.mrb[0].mxu0
    %v2376 = vadd.f32 0.0, %v2375
    %v2377 = vpop.f32.mrb[0].mxu0
    %2378 = vmatprep.mubr.f32.mxu0 0.0
    %2379 = vmatmul.mubr.f32.gmra.mrb[0].mxu0 %v2307
    %v2380 = vpop.f32.mrb[0].mxu0
    %v2381 = vadd.f32 0.0, %v2380
    %v2382 = vpop.f32.mrb[0].mxu0
    %2383 = vdwg.mxu0
    %2384 = vrot.lane.b32.xlu0 %v2178, 120
    %v2385 = vpop.permute.xlu0 %2384
    %2386 = vrot.lane.b32.xlu0 %v2183, 120
    %v2387 = vpop.permute.xlu0 %2386
    %2388 = vrot.lane.b32.xlu0 %v2178, 88
    %v2389 = vpop.permute.xlu0 %2388
    %2390 = vrot.lane.b32.xlu0 %v2183, 88
    %v2391 = vpop.permute.xlu0 %2390
    %v2392 = vsel %vm212, %v2385, 0
    %v2394 = vsel %vm212, %v2387, 0
    %v2396 = vsel %vm212, %v2389, 0
    %v2398 = vsel %vm212, %v2391, 0
    %2400 = vmatprep.subr.mxu0 0.0
    %2401 = vmatpush1.xpose.msra.mxu0 %v2396
    %2402 = vmatprep.subr.mxu0 0.0
    %2403 = vmatpush1.xpose.msra.mxu0 %v2398
    %2404 = vmatprep.subr.mxu0 0.0
    %2405 = vmatpush1.xpose.msra.mxu0 0.0
    %2406 = vmatprep.subr.mxu0 0.0
    %2407 = vmatpush1.xpose.msra.mxu0 0.0
    %2408 = vmatprep.subr.mxu0 0.0
    %2409 = vmatpush1.xpose.msra.mxu0 0.0
    %2410 = vmatprep.subr.mxu0 0.0
    %2411 = vmatpush1.xpose.msra.mxu0 0.0
    %2412 = vmatprep.subr.mxu0 0.0
    %2413 = vmatpush1.xpose.msra.mxu0 0.0
    %2414 = vmatprep.subr.mxu0 0.0
    %2415 = vmatpush1.xpose.msra.mxu0 0.0
    %2416 = vmatprep.subr.mxu0 0.0
    %2417 = vmatpush1.xpose.msra.mxu0 0.0
    %2418 = vmatprep.subr.mxu0 0.0
    %2419 = vmatpush1.xpose.msra.mxu0 0.0
    %2420 = vmatprep.subr.mxu0 0.0
    %2421 = vmatpush1.xpose.msra.mxu0 0.0
    %2422 = vmatprep.subr.mxu0 0.0
    %2423 = vmatpush1.xpose.msra.mxu0 0.0
    %2424 = vmatprep.subr.mxu0 0.0
    %2425 = vmatpush1.xpose.msra.mxu0 0.0
    %2426 = vmatprep.subr.mxu0 0.0
    %2427 = vmatpush1.xpose.msra.mxu0 0.0
    %2428 = vmatprep.subr.mxu0 0.0
    %2429 = vmatpush1.xpose.msra.mxu0 0.0
    %2430 = vmatprep.subr.mxu0 0.0
    %2431 = vmatpush1.xpose.msra.mxu0 0.0
    %2432 = vmatprep.subr.mxu0 0.0
    %2433 = vmatpush1.xpose.msra.mxu0 0.0
    %2434 = vmatprep.subr.mxu0 0.0
    %2435 = vmatpush1.xpose.msra.mxu0 0.0
    %2436 = vmatprep.subr.mxu0 0.0
    %2437 = vmatpush1.xpose.msra.mxu0 0.0
    %2438 = vmatprep.subr.mxu0 0.0
    %2439 = vmatpush1.xpose.msra.mxu0 0.0
    %2440 = vmatprep.subr.mxu0 0.0
    %2441 = vmatpush1.xpose.msra.mxu0 0.0
    %2442 = vmatprep.subr.mxu0 0.0
    %2443 = vmatpush1.xpose.msra.mxu0 0.0
    %2444 = vmatprep.subr.mxu0 0.0
    %2445 = vmatpush1.xpose.msra.mxu0 0.0
    %2446 = vmatprep.subr.mxu0 0.0
    %2447 = vmatpush1.xpose.msra.mxu0 0.0
    %2448 = vmatprep.subr.mxu0 0.0
    %2449 = vmatpush1.xpose.msra.mxu0 0.0
    %2450 = vmatprep.subr.mxu0 0.0
    %2451 = vmatpush1.xpose.msra.mxu0 0.0
    %2452 = vmatprep.subr.mxu0 0.0
    %2453 = vmatpush1.xpose.msra.mxu0 0.0
    %2454 = vmatprep.subr.mxu0 0.0
    %2455 = vmatpush1.xpose.msra.mxu0 0.0
    %2456 = vmatprep.subr.mxu0 0.0
    %2457 = vmatpush1.xpose.msra.mxu0 0.0
    %2458 = vmatprep.subr.mxu0 0.0
    %2459 = vmatpush1.xpose.msra.mxu0 0.0
    %2460 = vmatprep.subr.mxu0 0.0
    %2461 = vmatpush1.xpose.msra.mxu0 0.0
    %2462 = vmatprep.subr.mxu0 0.0
    %2463 = vmatpush1.xpose.msra.mxu0 0.0
    %2464 = vmatprep.mubr.f32.mxu0 0.0
    %2465 = vmatmul.mubr.f32.gmra.mrb[0].mxu0 %v2392
    %v2466 = vpop.f32.mrb[0].mxu0
    %v2467 = vadd.f32 %v120, %v2466
    %v2468 = vpop.f32.mrb[0].mxu0
    %2469 = vmatprep.mubr.f32.mxu0 0.0
    %2470 = vmatmul.mubr.f32.gmra.mrb[0].mxu0 %v2394
    %v2471 = vpop.f32.mrb[0].mxu0
    %v2472 = vadd.f32 %v121, %v2471
    %v2473 = vpop.f32.mrb[0].mxu0
    %2474 = vdwg.mxu0
    %v2475 = vsel %vm124, %v2467, -inf
    %2476 = vmax.xlane.f32.xlu0 %v2475
    %v2477 = vpop.xlane.xlu0 %2476
    %v2478 = vsel %vm124, %v2472, -inf
    %2479 = vmax.xlane.f32.xlu0 %v2478
    %v2480 = vpop.xlane.xlu0 %2479
    %v2481 = vsub.f32 %v2467, %v2477
    %v2482 = vsub.f32 %v2472, %v2480
    %v2483 = vmul.f32 %v2481, 1.442695
    %v2484 = vpow.pop %v2483
    %v2485 = vmul.f32 %v2482, 1.442695
    %v2486 = vpow.pop %v2485
    %v2487 = vsel %vm124, %v2484, 0.0
    %2488 = vadd.xlane.f32.xlu0 %v2487
    %v2489 = vpop.xlane.xlu0 %2488
    %v2490 = vsel %vm124, %v2486, 0.0
    %2491 = vadd.xlane.f32.xlu0 %v2490
    %v2492 = vpop.xlane.xlu0 %2491
    %v2493 = vrcp.pop %v2489
    %v2494 = vrcp.pop %v2492
    %v2495 = vmul.f32 %v2484, %v2493
    %v2496 = vmul.f32 %v2486, %v2494
    %2497 = vrot.lane.b32.xlu0 %v2178, 56
    %v2498 = vpop.permute.xlu0 %2497
    %2499 = vrot.lane.b32.xlu0 %v2183, 56
    %v2500 = vpop.permute.xlu0 %2499
    %v2504 = vsel %vm124, %v2495, 0
    %v2507 = vsel %vm124, %v2496, 0
    %2509 = vmatprep.subr.mxu0 0.0
    %2510 = vmatpush1.msra.mxu0 %v2498
    %2511 = vmatprep.subr.mxu0 0.0
    %2512 = vmatpush1.msra.mxu0 %v2500
    %2513 = vmatprep.subr.mxu0 0.0
    %2514 = vmatpush1.msra.mxu0 0.0
    %2515 = vmatprep.subr.mxu0 0.0
    %2516 = vmatpush1.msra.mxu0 0.0
    %2517 = vmatprep.subr.mxu0 0.0
    %2518 = vmatpush1.msra.mxu0 0.0
    %2519 = vmatprep.subr.mxu0 0.0
    %2520 = vmatpush1.msra.mxu0 0.0
    %2521 = vmatprep.subr.mxu0 0.0
    %2522 = vmatpush1.msra.mxu0 0.0
    %2523 = vmatprep.subr.mxu0 0.0
    %2524 = vmatpush1.msra.mxu0 0.0
    %2525 = vmatprep.subr.mxu0 0.0
    %2526 = vmatpush1.msra.mxu0 0.0
    %2527 = vmatprep.subr.mxu0 0.0
    %2528 = vmatpush1.msra.mxu0 0.0
    %2529 = vmatprep.subr.mxu0 0.0
    %2530 = vmatpush1.msra.mxu0 0.0
    %2531 = vmatprep.subr.mxu0 0.0
    %2532 = vmatpush1.msra.mxu0 0.0
    %2533 = vmatprep.subr.mxu0 0.0
    %2534 = vmatpush1.msra.mxu0 0.0
    %2535 = vmatprep.subr.mxu0 0.0
    %2536 = vmatpush1.msra.mxu0 0.0
    %2537 = vmatprep.subr.mxu0 0.0
    %2538 = vmatpush1.msra.mxu0 0.0
    %2539 = vmatprep.subr.mxu0 0.0
    %2540 = vmatpush1.msra.mxu0 0.0
    %2541 = vmatprep.subr.mxu0 0.0
    %2542 = vmatpush1.msra.mxu0 0.0
    %2543 = vmatprep.subr.mxu0 0.0
    %2544 = vmatpush1.msra.mxu0 0.0
    %2545 = vmatprep.subr.mxu0 0.0
    %2546 = vmatpush1.msra.mxu0 0.0
    %2547 = vmatprep.subr.mxu0 0.0
    %2548 = vmatpush1.msra.mxu0 0.0
    %2549 = vmatprep.subr.mxu0 0.0
    %2550 = vmatpush1.msra.mxu0 0.0
    %2551 = vmatprep.subr.mxu0 0.0
    %2552 = vmatpush1.msra.mxu0 0.0
    %2553 = vmatprep.subr.mxu0 0.0
    %2554 = vmatpush1.msra.mxu0 0.0
    %2555 = vmatprep.subr.mxu0 0.0
    %2556 = vmatpush1.msra.mxu0 0.0
    %2557 = vmatprep.subr.mxu0 0.0
    %2558 = vmatpush1.msra.mxu0 0.0
    %2559 = vmatprep.subr.mxu0 0.0
    %2560 = vmatpush1.msra.mxu0 0.0
    %2561 = vmatprep.subr.mxu0 0.0
    %2562 = vmatpush1.msra.mxu0 0.0
    %2563 = vmatprep.subr.mxu0 0.0
    %2564 = vmatpush1.msra.mxu0 0.0
    %2565 = vmatprep.subr.mxu0 0.0
    %2566 = vmatpush1.msra.mxu0 0.0
    %2567 = vmatprep.subr.mxu0 0.0
    %2568 = vmatpush1.msra.mxu0 0.0
    %2569 = vmatprep.subr.mxu0 0.0
    %2570 = vmatpush1.msra.mxu0 0.0
    %2571 = vmatprep.subr.mxu0 0.0
    %2572 = vmatpush1.msra.mxu0 0.0
    %2573 = vmatprep.mubr.f32.mxu0 0.0
    %2574 = vmatmul.mubr.f32.gmra.mrb[0].mxu0 %v2504
    %v2575 = vpop.f32.mrb[0].mxu0
    %v2576 = vadd.f32 0.0, %v2575
    %v2577 = vpop.f32.mrb[0].mxu0
    %2578 = vmatprep.mubr.f32.mxu0 0.0
    %2579 = vmatmul.mubr.f32.gmra.mrb[0].mxu0 %v2507
    %v2580 = vpop.f32.mrb[0].mxu0
    %v2581 = vadd.f32 0.0, %v2580
    %v2582 = vpop.f32.mrb[0].mxu0
    %2583 = vdwg.mxu0
    %2584 = vrot.lane.b32.xlu0 %v2178, 112
    %v2585 = vpop.permute.xlu0 %2584
    %2586 = vrot.lane.b32.xlu0 %v2183, 112
    %v2587 = vpop.permute.xlu0 %2586
    %2588 = vrot.lane.b32.xlu0 %v2178, 80
    %v2589 = vpop.permute.xlu0 %2588
    %2590 = vrot.lane.b32.xlu0 %v2183, 80
    %v2591 = vpop.permute.xlu0 %2590
    %v2592 = vsel %vm212, %v2585, 0
    %v2594 = vsel %vm212, %v2587, 0
    %v2596 = vsel %vm212, %v2589, 0
    %v2598 = vsel %vm212, %v2591, 0
    %2600 = vmatprep.subr.mxu0 0.0
    %2601 = vmatpush1.xpose.msra.mxu0 %v2596
    %2602 = vmatprep.subr.mxu0 0.0
    %2603 = vmatpush1.xpose.msra.mxu0 %v2598
    %2604 = vmatprep.subr.mxu0 0.0
    %2605 = vmatpush1.xpose.msra.mxu0 0.0
    %2606 = vmatprep.subr.mxu0 0.0
    %2607 = vmatpush1.xpose.msra.mxu0 0.0
    %2608 = vmatprep.subr.mxu0 0.0
    %2609 = vmatpush1.xpose.msra.mxu0 0.0
    %2610 = vmatprep.subr.mxu0 0.0
    %2611 = vmatpush1.xpose.msra.mxu0 0.0
    %2612 = vmatprep.subr.mxu0 0.0
    %2613 = vmatpush1.xpose.msra.mxu0 0.0
    %2614 = vmatprep.subr.mxu0 0.0
    %2615 = vmatpush1.xpose.msra.mxu0 0.0
    %2616 = vmatprep.subr.mxu0 0.0
    %2617 = vmatpush1.xpose.msra.mxu0 0.0
    %2618 = vmatprep.subr.mxu0 0.0
    %2619 = vmatpush1.xpose.msra.mxu0 0.0
    %2620 = vmatprep.subr.mxu0 0.0
    %2621 = vmatpush1.xpose.msra.mxu0 0.0
    %2622 = vmatprep.subr.mxu0 0.0
    %2623 = vmatpush1.xpose.msra.mxu0 0.0
    %2624 = vmatprep.subr.mxu0 0.0
    %2625 = vmatpush1.xpose.msra.mxu0 0.0
    %2626 = vmatprep.subr.mxu0 0.0
    %2627 = vmatpush1.xpose.msra.mxu0 0.0
    %2628 = vmatprep.subr.mxu0 0.0
    %2629 = vmatpush1.xpose.msra.mxu0 0.0
    %2630 = vmatprep.subr.mxu0 0.0
    %2631 = vmatpush1.xpose.msra.mxu0 0.0
    %2632 = vmatprep.subr.mxu0 0.0
    %2633 = vmatpush1.xpose.msra.mxu0 0.0
    %2634 = vmatprep.subr.mxu0 0.0
    %2635 = vmatpush1.xpose.msra.mxu0 0.0
    %2636 = vmatprep.subr.mxu0 0.0
    %2637 = vmatpush1.xpose.msra.mxu0 0.0
    %2638 = vmatprep.subr.mxu0 0.0
    %2639 = vmatpush1.xpose.msra.mxu0 0.0
    %2640 = vmatprep.subr.mxu0 0.0
    %2641 = vmatpush1.xpose.msra.mxu0 0.0
    %2642 = vmatprep.subr.mxu0 0.0
    %2643 = vmatpush1.xpose.msra.mxu0 0.0
    %2644 = vmatprep.subr.mxu0 0.0
    %2645 = vmatpush1.xpose.msra.mxu0 0.0
    %2646 = vmatprep.subr.mxu0 0.0
    %2647 = vmatpush1.xpose.msra.mxu0 0.0
    %2648 = vmatprep.subr.mxu0 0.0
    %2649 = vmatpush1.xpose.msra.mxu0 0.0
    %2650 = vmatprep.subr.mxu0 0.0
    %2651 = vmatpush1.xpose.msra.mxu0 0.0
    %2652 = vmatprep.subr.mxu0 0.0
    %2653 = vmatpush1.xpose.msra.mxu0 0.0
    %2654 = vmatprep.subr.mxu0 0.0
    %2655 = vmatpush1.xpose.msra.mxu0 0.0
    %2656 = vmatprep.subr.mxu0 0.0
    %2657 = vmatpush1.xpose.msra.mxu0 0.0
    %2658 = vmatprep.subr.mxu0 0.0
    %2659 = vmatpush1.xpose.msra.mxu0 0.0
    %2660 = vmatprep.subr.mxu0 0.0
    %2661 = vmatpush1.xpose.msra.mxu0 0.0
    %2662 = vmatprep.subr.mxu0 0.0
    %2663 = vmatpush1.xpose.msra.mxu0 0.0
    %2664 = vmatprep.mubr.f32.mxu0 0.0
    %2665 = vmatmul.mubr.f32.gmra.mrb[0].mxu0 %v2592
    %v2666 = vpop.f32.mrb[0].mxu0
    %v2667 = vadd.f32 %v120, %v2666
    %v2668 = vpop.f32.mrb[0].mxu0
    %2669 = vmatprep.mubr.f32.mxu0 0.0
    %2670 = vmatmul.mubr.f32.gmra.mrb[0].mxu0 %v2594
    %v2671 = vpop.f32.mrb[0].mxu0
    %v2672 = vadd.f32 %v121, %v2671
    %v2673 = vpop.f32.mrb[0].mxu0
    %2674 = vdwg.mxu0
    %v2675 = vsel %vm124, %v2667, -inf
    %2676 = vmax.xlane.f32.xlu0 %v2675
    %v2677 = vpop.xlane.xlu0 %2676
    %v2678 = vsel %vm124, %v2672, -inf
    %2679 = vmax.xlane.f32.xlu0 %v2678
    %v2680 = vpop.xlane.xlu0 %2679
    %v2681 = vsub.f32 %v2667, %v2677
    %v2682 = vsub.f32 %v2672, %v2680
    %v2683 = vmul.f32 %v2681, 1.442695
    %v2684 = vpow.pop %v2683
    %v2685 = vmul.f32 %v2682, 1.442695
    %v2686 = vpow.pop %v2685
    %v2687 = vsel %vm124, %v2684, 0.0
    %2688 = vadd.xlane.f32.xlu0 %v2687
    %v2689 = vpop.xlane.xlu0 %2688
    %v2690 = vsel %vm124, %v2686, 0.0
    %2691 = vadd.xlane.f32.xlu0 %v2690
    %v2692 = vpop.xlane.xlu0 %2691
    %v2693 = vrcp.pop %v2689
    %v2694 = vrcp.pop %v2692
    %v2695 = vmul.f32 %v2684, %v2693
    %v2696 = vmul.f32 %v2686, %v2694
    %2697 = vrot.lane.b32.xlu0 %v2178, 48
    %v2698 = vpop.permute.xlu0 %2697
    %2699 = vrot.lane.b32.xlu0 %v2183, 48
    %v2700 = vpop.permute.xlu0 %2699
    %v2704 = vsel %vm124, %v2695, 0
    %v2707 = vsel %vm124, %v2696, 0
    %2709 = vmatprep.subr.mxu0 0.0
    %2710 = vmatpush1.msra.mxu0 %v2698
    %2711 = vmatprep.subr.mxu0 0.0
    %2712 = vmatpush1.msra.mxu0 %v2700
    %2713 = vmatprep.subr.mxu0 0.0
    %2714 = vmatpush1.msra.mxu0 0.0
    %2715 = vmatprep.subr.mxu0 0.0
    %2716 = vmatpush1.msra.mxu0 0.0
    %2717 = vmatprep.subr.mxu0 0.0
    %2718 = vmatpush1.msra.mxu0 0.0
    %2719 = vmatprep.subr.mxu0 0.0
    %2720 = vmatpush1.msra.mxu0 0.0
    %2721 = vmatprep.subr.mxu0 0.0
    %2722 = vmatpush1.msra.mxu0 0.0
    %2723 = vmatprep.subr.mxu0 0.0
    %2724 = vmatpush1.msra.mxu0 0.0
    %2725 = vmatprep.subr.mxu0 0.0
    %2726 = vmatpush1.msra.mxu0 0.0
    %2727 = vmatprep.subr.mxu0 0.0
    %2728 = vmatpush1.msra.mxu0 0.0
    %2729 = vmatprep.subr.mxu0 0.0
    %2730 = vmatpush1.msra.mxu0 0.0
    %2731 = vmatprep.subr.mxu0 0.0
    %2732 = vmatpush1.msra.mxu0 0.0
    %2733 = vmatprep.subr.mxu0 0.0
    %2734 = vmatpush1.msra.mxu0 0.0
    %2735 = vmatprep.subr.mxu0 0.0
    %2736 = vmatpush1.msra.mxu0 0.0
    %2737 = vmatprep.subr.mxu0 0.0
    %2738 = vmatpush1.msra.mxu0 0.0
    %2739 = vmatprep.subr.mxu0 0.0
    %2740 = vmatpush1.msra.mxu0 0.0
    %2741 = vmatprep.subr.mxu0 0.0
    %2742 = vmatpush1.msra.mxu0 0.0
    %2743 = vmatprep.subr.mxu0 0.0
    %2744 = vmatpush1.msra.mxu0 0.0
    %2745 = vmatprep.subr.mxu0 0.0
    %2746 = vmatpush1.msra.mxu0 0.0
    %2747 = vmatprep.subr.mxu0 0.0
    %2748 = vmatpush1.msra.mxu0 0.0
    %2749 = vmatprep.subr.mxu0 0.0
    %2750 = vmatpush1.msra.mxu0 0.0
    %2751 = vmatprep.subr.mxu0 0.0
    %2752 = vmatpush1.msra.mxu0 0.0
    %2753 = vmatprep.subr.mxu0 0.0
    %2754 = vmatpush1.msra.mxu0 0.0
    %2755 = vmatprep.subr.mxu0 0.0
    %2756 = vmatpush1.msra.mxu0 0.0
    %2757 = vmatprep.subr.mxu0 0.0
    %2758 = vmatpush1.msra.mxu0 0.0
    %2759 = vmatprep.subr.mxu0 0.0
    %2760 = vmatpush1.msra.mxu0 0.0
    %2761 = vmatprep.subr.mxu0 0.0
    %2762 = vmatpush1.msra.mxu0 0.0
    %2763 = vmatprep.subr.mxu0 0.0
    %2764 = vmatpush1.msra.mxu0 0.0
    %2765 = vmatprep.subr.mxu0 0.0
    %2766 = vmatpush1.msra.mxu0 0.0
    %2767 = vmatprep.subr.mxu0 0.0
    %2768 = vmatpush1.msra.mxu0 0.0
    %2769 = vmatprep.subr.mxu0 0.0
    %2770 = vmatpush1.msra.mxu0 0.0
    %2771 = vmatprep.subr.mxu0 0.0
    %2772 = vmatpush1.msra.mxu0 0.0
    %2773 = vmatprep.mubr.f32.mxu0 0.0
    %2774 = vmatmul.mubr.f32.gmra.mrb[0].mxu0 %v2704
    %v2775 = vpop.f32.mrb[0].mxu0
    %v2776 = vadd.f32 0.0, %v2775
    %v2777 = vpop.f32.mrb[0].mxu0
    %2778 = vmatprep.mubr.f32.mxu0 0.0
    %2779 = vmatmul.mubr.f32.gmra.mrb[0].mxu0 %v2707
    %v2780 = vpop.f32.mrb[0].mxu0
    %v2781 = vadd.f32 0.0, %v2780
    %v2782 = vpop.f32.mrb[0].mxu0
    %2783 = vdwg.mxu0
    %2784 = vrot.lane.b32.xlu0 %v2178, 104
    %v2785 = vpop.permute.xlu0 %2784
    %2786 = vrot.lane.b32.xlu0 %v2183, 104
    %v2787 = vpop.permute.xlu0 %2786
    %2788 = vrot.lane.b32.xlu0 %v2178, 72
    %v2789 = vpop.permute.xlu0 %2788
    %2790 = vrot.lane.b32.xlu0 %v2183, 72
    %v2791 = vpop.permute.xlu0 %2790
    %v2792 = vsel %vm212, %v2785, 0
    %v2794 = vsel %vm212, %v2787, 0
    %v2796 = vsel %vm212, %v2789, 0
    %v2798 = vsel %vm212, %v2791, 0
    %2800 = vmatprep.subr.mxu0 0.0
    %2801 = vmatpush1.xpose.msra.mxu0 %v2796
    %2802 = vmatprep.subr.mxu0 0.0
    %2803 = vmatpush1.xpose.msra.mxu0 %v2798
    %2804 = vmatprep.subr.mxu0 0.0
    %2805 = vmatpush1.xpose.msra.mxu0 0.0
    %2806 = vmatprep.subr.mxu0 0.0
    %2807 = vmatpush1.xpose.msra.mxu0 0.0
    %2808 = vmatprep.subr.mxu0 0.0
    %2809 = vmatpush1.xpose.msra.mxu0 0.0
    %2810 = vmatprep.subr.mxu0 0.0
    %2811 = vmatpush1.xpose.msra.mxu0 0.0
    %2812 = vmatprep.subr.mxu0 0.0
    %2813 = vmatpush1.xpose.msra.mxu0 0.0
    %2814 = vmatprep.subr.mxu0 0.0
    %2815 = vmatpush1.xpose.msra.mxu0 0.0
    %2816 = vmatprep.subr.mxu0 0.0
    %2817 = vmatpush1.xpose.msra.mxu0 0.0
    %2818 = vmatprep.subr.mxu0 0.0
    %2819 = vmatpush1.xpose.msra.mxu0 0.0
    %2820 = vmatprep.subr.mxu0 0.0
    %2821 = vmatpush1.xpose.msra.mxu0 0.0
    %2822 = vmatprep.subr.mxu0 0.0
    %2823 = vmatpush1.xpose.msra.mxu0 0.0
    %2824 = vmatprep.subr.mxu0 0.0
    %2825 = vmatpush1.xpose.msra.mxu0 0.0
    %2826 = vmatprep.subr.mxu0 0.0
    %2827 = vmatpush1.xpose.msra.mxu0 0.0
    %2828 = vmatprep.subr.mxu0 0.0
    %2829 = vmatpush1.xpose.msra.mxu0 0.0
    %2830 = vmatprep.subr.mxu0 0.0
    %2831 = vmatpush1.xpose.msra.mxu0 0.0
    %2832 = vmatprep.subr.mxu0 0.0
    %2833 = vmatpush1.xpose.msra.mxu0 0.0
    %2834 = vmatprep.subr.mxu0 0.0
    %2835 = vmatpush1.xpose.msra.mxu0 0.0
    %2836 = vmatprep.subr.mxu0 0.0
    %2837 = vmatpush1.xpose.msra.mxu0 0.0
    %2838 = vmatprep.subr.mxu0 0.0
    %2839 = vmatpush1.xpose.msra.mxu0 0.0
    %2840 = vmatprep.subr.mxu0 0.0
    %2841 = vmatpush1.xpose.msra.mxu0 0.0
    %2842 = vmatprep.subr.mxu0 0.0
    %2843 = vmatpush1.xpose.msra.mxu0 0.0
    %2844 = vmatprep.subr.mxu0 0.0
    %2845 = vmatpush1.xpose.msra.mxu0 0.0
    %2846 = vmatprep.subr.mxu0 0.0
    %2847 = vmatpush1.xpose.msra.mxu0 0.0
    %2848 = vmatprep.subr.mxu0 0.0
    %2849 = vmatpush1.xpose.msra.mxu0 0.0
    %2850 = vmatprep.subr.mxu0 0.0
    %2851 = vmatpush1.xpose.msra.mxu0 0.0
    %2852 = vmatprep.subr.mxu0 0.0
    %2853 = vmatpush1.xpose.msra.mxu0 0.0
    %2854 = vmatprep.subr.mxu0 0.0
    %2855 = vmatpush1.xpose.msra.mxu0 0.0
    %2856 = vmatprep.subr.mxu0 0.0
    %2857 = vmatpush1.xpose.msra.mxu0 0.0
    %2858 = vmatprep.subr.mxu0 0.0
    %2859 = vmatpush1.xpose.msra.mxu0 0.0
    %2860 = vmatprep.subr.mxu0 0.0
    %2861 = vmatpush1.xpose.msra.mxu0 0.0
    %2862 = vmatprep.subr.mxu0 0.0
    %2863 = vmatpush1.xpose.msra.mxu0 0.0
    %2864 = vmatprep.mubr.f32.mxu0 0.0
    %2865 = vmatmul.mubr.f32.gmra.mrb[0].mxu0 %v2792
    %v2866 = vpop.f32.mrb[0].mxu0
    %v2867 = vadd.f32 %v120, %v2866
    %v2868 = vpop.f32.mrb[0].mxu0
    %2869 = vmatprep.mubr.f32.mxu0 0.0
    %2870 = vmatmul.mubr.f32.gmra.mrb[0].mxu0 %v2794
    %v2871 = vpop.f32.mrb[0].mxu0
    %v2872 = vadd.f32 %v121, %v2871
    %v2873 = vpop.f32.mrb[0].mxu0
    %2874 = vdwg.mxu0
    %v2875 = vsel %vm124, %v2867, -inf
    %2876 = vmax.xlane.f32.xlu0 %v2875
    %v2877 = vpop.xlane.xlu0 %2876
    %v2878 = vsel %vm124, %v2872, -inf
    %2879 = vmax.xlane.f32.xlu0 %v2878
    %v2880 = vpop.xlane.xlu0 %2879
    %v2881 = vsub.f32 %v2867, %v2877
    %v2882 = vsub.f32 %v2872, %v2880
    %v2883 = vmul.f32 %v2881, 1.442695
    %v2884 = vpow.pop %v2883
    %v2885 = vmul.f32 %v2882, 1.442695
    %v2886 = vpow.pop %v2885
    %v2887 = vsel %vm124, %v2884, 0.0
    %2888 = vadd.xlane.f32.xlu0 %v2887
    %v2889 = vpop.xlane.xlu0 %2888
    %v2890 = vsel %vm124, %v2886, 0.0
    %2891 = vadd.xlane.f32.xlu0 %v2890
    %v2892 = vpop.xlane.xlu0 %2891
    %v2893 = vrcp.pop %v2889
    %v2894 = vrcp.pop %v2892
    %v2895 = vmul.f32 %v2884, %v2893
    %v2896 = vmul.f32 %v2886, %v2894
    %2897 = vrot.lane.b32.xlu0 %v2178, 40
    %v2898 = vpop.permute.xlu0 %2897
    %2899 = vrot.lane.b32.xlu0 %v2183, 40
    %v2900 = vpop.permute.xlu0 %2899
    %v2904 = vsel %vm124, %v2895, 0
    %v2907 = vsel %vm124, %v2896, 0
    %2909 = vmatprep.subr.mxu0 0.0
    %2910 = vmatpush1.msra.mxu0 %v2898
    %2911 = vmatprep.subr.mxu0 0.0
    %2912 = vmatpush1.msra.mxu0 %v2900
    %2913 = vmatprep.subr.mxu0 0.0
    %2914 = vmatpush1.msra.mxu0 0.0
    %2915 = vmatprep.subr.mxu0 0.0
    %2916 = vmatpush1.msra.mxu0 0.0
    %2917 = vmatprep.subr.mxu0 0.0
    %2918 = vmatpush1.msra.mxu0 0.0
    %2919 = vmatprep.subr.mxu0 0.0
    %2920 = vmatpush1.msra.mxu0 0.0
    %2921 = vmatprep.subr.mxu0 0.0
    %2922 = vmatpush1.msra.mxu0 0.0
    %2923 = vmatprep.subr.mxu0 0.0
    %2924 = vmatpush1.msra.mxu0 0.0
    %2925 = vmatprep.subr.mxu0 0.0
    %2926 = vmatpush1.msra.mxu0 0.0
    %2927 = vmatprep.subr.mxu0 0.0
    %2928 = vmatpush1.msra.mxu0 0.0
    %2929 = vmatprep.subr.mxu0 0.0
    %2930 = vmatpush1.msra.mxu0 0.0
    %2931 = vmatprep.subr.mxu0 0.0
    %2932 = vmatpush1.msra.mxu0 0.0
    %2933 = vmatprep.subr.mxu0 0.0
    %2934 = vmatpush1.msra.mxu0 0.0
    %2935 = vmatprep.subr.mxu0 0.0
    %2936 = vmatpush1.msra.mxu0 0.0
    %2937 = vmatprep.subr.mxu0 0.0
    %2938 = vmatpush1.msra.mxu0 0.0
    %2939 = vmatprep.subr.mxu0 0.0
    %2940 = vmatpush1.msra.mxu0 0.0
    %2941 = vmatprep.subr.mxu0 0.0
    %2942 = vmatpush1.msra.mxu0 0.0
    %2943 = vmatprep.subr.mxu0 0.0
    %2944 = vmatpush1.msra.mxu0 0.0
    %2945 = vmatprep.subr.mxu0 0.0
    %2946 = vmatpush1.msra.mxu0 0.0
    %2947 = vmatprep.subr.mxu0 0.0
    %2948 = vmatpush1.msra.mxu0 0.0
    %2949 = vmatprep.subr.mxu0 0.0
    %2950 = vmatpush1.msra.mxu0 0.0
    %2951 = vmatprep.subr.mxu0 0.0
    %2952 = vmatpush1.msra.mxu0 0.0
    %2953 = vmatprep.subr.mxu0 0.0
    %2954 = vmatpush1.msra.mxu0 0.0
    %2955 = vmatprep.subr.mxu0 0.0
    %2956 = vmatpush1.msra.mxu0 0.0
    %2957 = vmatprep.subr.mxu0 0.0
    %2958 = vmatpush1.msra.mxu0 0.0
    %2959 = vmatprep.subr.mxu0 0.0
    %2960 = vmatpush1.msra.mxu0 0.0
    %2961 = vmatprep.subr.mxu0 0.0
    %2962 = vmatpush1.msra.mxu0 0.0
    %2963 = vmatprep.subr.mxu0 0.0
    %2964 = vmatpush1.msra.mxu0 0.0
    %2965 = vmatprep.subr.mxu0 0.0
    %2966 = vmatpush1.msra.mxu0 0.0
    %2967 = vmatprep.subr.mxu0 0.0
    %2968 = vmatpush1.msra.mxu0 0.0
    %2969 = vmatprep.subr.mxu0 0.0
    %2970 = vmatpush1.msra.mxu0 0.0
    %2971 = vmatprep.subr.mxu0 0.0
    %2972 = vmatpush1.msra.mxu0 0.0
    %2973 = vmatprep.mubr.f32.mxu0 0.0
    %2974 = vmatmul.mubr.f32.gmra.mrb[0].mxu0 %v2904
    %v2975 = vpop.f32.mrb[0].mxu0
    %v2976 = vadd.f32 0.0, %v2975
    %v2977 = vpop.f32.mrb[0].mxu0
    %2978 = vmatprep.mubr.f32.mxu0 0.0
    %2979 = vmatmul.mubr.f32.gmra.mrb[0].mxu0 %v2907
    %v2980 = vpop.f32.mrb[0].mxu0
    %v2981 = vadd.f32 0.0, %v2980
    %v2982 = vpop.f32.mrb[0].mxu0
    %2983 = vdwg.mxu0
    %2986 = vrot.lane.b32.xlu0 %v2576, 8
    %v2987 = vpop.permute.xlu0 %2986
    %2988 = vrot.lane.b32.xlu0 %v2581, 8
    %v2989 = vpop.permute.xlu0 %2988
    %2994 = vrot.lane.b32.xlu0 %v2776, 16
    %v2995 = vpop.permute.xlu0 %2994
    %2996 = vrot.lane.b32.xlu0 %v2781, 16
    %v2997 = vpop.permute.xlu0 %2996
    %3002 = vrot.lane.b32.xlu0 %v2976, 24
    %v3003 = vpop.permute.xlu0 %3002
    %3004 = vrot.lane.b32.xlu0 %v2981, 24
    %v3005 = vpop.permute.xlu0 %3004
    %v3008 = vsel %vm212, %v2376, %v2987
    %v3009 = vsel %vm212, %v2381, %v2989
    %v3010 = vsel %vm124, %v3008, %v2995
    %v3011 = vsel %vm124, %v3009, %v2997
    %v3012 = vsel %vm1553, %v3010, %v3003
    %v3013 = vsel %vm1553, %v3011, %v3005
    %s3014 = scalar_lea.vmem %s6, 32
    %v3015 = vld [vmem:[%s3014] sm:$0xff]
    %v3016 = vld [vmem:[%s3014 + $0x8] sm:$0xff]
    %v3017 = vld [vmem:[%s3014 + $0x10] sm:$0xff]
    %v3018 = vld [vmem:[%s3014 + $0x18] sm:$0xff]
    %v3019 = vld [vmem:[#allocation10 + $0xc] sm:$0x1]
    %v3020 = vlaneseq
    %v3021 = vshrl.u32 %v3020, 7
    %v3022 = vsub.s32 0, %v3021
    %v3023 = vrot.slane %v3019, %v3022
    %v3025 = vsel %vm645, %v3012, 0
    %v3028 = vsel %vm645, %v3013, 0
    %3030 = vmatprep.subr.mxu0 0.0
    %3031 = vmatpush1.msra.mxu0 %v3015
    %3032 = vmatprep.subr.mxu0 0.0
    %3033 = vmatpush1.msra.mxu0 %v3016
    %3034 = vmatprep.subr.mxu0 0.0
    %3035 = vmatpush1.msra.mxu0 %v3017
    %3036 = vmatprep.subr.mxu0 0.0
    %3037 = vmatpush1.msra.mxu0 %v3018
    %3038 = vmatprep.subr.mxu0 0.0
    %3039 = vmatpush1.msra.mxu0 0.0
    %3040 = vmatprep.subr.mxu0 0.0
    %3041 = vmatpush1.msra.mxu0 0.0
    %3042 = vmatprep.subr.mxu0 0.0
    %3043 = vmatpush1.msra.mxu0 0.0
    %3044 = vmatprep.subr.mxu0 0.0
    %3045 = vmatpush1.msra.mxu0 0.0
    %3046 = vmatprep.subr.mxu0 0.0
    %3047 = vmatpush1.msra.mxu0 0.0
    %3048 = vmatprep.subr.mxu0 0.0
    %3049 = vmatpush1.msra.mxu0 0.0
    %3050 = vmatprep.subr.mxu0 0.0
    %3051 = vmatpush1.msra.mxu0 0.0
    %3052 = vmatprep.subr.mxu0 0.0
    %3053 = vmatpush1.msra.mxu0 0.0
    %3054 = vmatprep.subr.mxu0 0.0
    %3055 = vmatpush1.msra.mxu0 0.0
    %3056 = vmatprep.subr.mxu0 0.0
    %3057 = vmatpush1.msra.mxu0 0.0
    %3058 = vmatprep.subr.mxu0 0.0
    %3059 = vmatpush1.msra.mxu0 0.0
    %3060 = vmatprep.subr.mxu0 0.0
    %3061 = vmatpush1.msra.mxu0 0.0
    %3062 = vmatprep.subr.mxu0 0.0
    %3063 = vmatpush1.msra.mxu0 0.0
    %3064 = vmatprep.subr.mxu0 0.0
    %3065 = vmatpush1.msra.mxu0 0.0
    %3066 = vmatprep.subr.mxu0 0.0
    %3067 = vmatpush1.msra.mxu0 0.0
    %3068 = vmatprep.subr.mxu0 0.0
    %3069 = vmatpush1.msra.mxu0 0.0
    %3070 = vmatprep.subr.mxu0 0.0
    %3071 = vmatpush1.msra.mxu0 0.0
    %3072 = vmatprep.subr.mxu0 0.0
    %3073 = vmatpush1.msra.mxu0 0.0
    %3074 = vmatprep.subr.mxu0 0.0
    %3075 = vmatpush1.msra.mxu0 0.0
    %3076 = vmatprep.subr.mxu0 0.0
    %3077 = vmatpush1.msra.mxu0 0.0
    %3078 = vmatprep.subr.mxu0 0.0
    %3079 = vmatpush1.msra.mxu0 0.0
    %3080 = vmatprep.subr.mxu0 0.0
    %3081 = vmatpush1.msra.mxu0 0.0
    %3082 = vmatprep.subr.mxu0 0.0
    %3083 = vmatpush1.msra.mxu0 0.0
    %3084 = vmatprep.subr.mxu0 0.0
    %3085 = vmatpush1.msra.mxu0 0.0
    %3086 = vmatprep.subr.mxu0 0.0
    %3087 = vmatpush1.msra.mxu0 0.0
    %3088 = vmatprep.subr.mxu0 0.0
    %3089 = vmatpush1.msra.mxu0 0.0
    %3090 = vmatprep.subr.mxu0 0.0
    %3091 = vmatpush1.msra.mxu0 0.0
    %3092 = vmatprep.subr.mxu0 0.0
    %3093 = vmatpush1.msra.mxu0 0.0
    %3094 = vmatprep.mubr.f32.mxu0 0.0
    %3095 = vmatmul.mubr.f32.gmra.mrb[0].mxu0 %v3025
    %v3096 = vpop.f32.mrb[0].mxu0
    %v3097 = vadd.f32 %v3023, %v3096
    %v3098 = vpop.f32.mrb[0].mxu0
    %3099 = vmatprep.mubr.f32.mxu0 0.0
    %3100 = vmatmul.mubr.f32.gmra.mrb[0].mxu0 %v3028
    %v3101 = vpop.f32.mrb[0].mxu0
    %v3102 = vadd.f32 %v3023, %v3101
    %v3103 = vpop.f32.mrb[0].mxu0
    %3104 = vdwg.mxu0
    %v3105 = vadd.f32 %v1918, %v3097
    %v3106 = vadd.f32 %v1919, %v3102
    %v3107 = vsel %vm645, %v3105, 0.0
    %3108 = vadd.xlane.f32.xlu0 %v3107
    %v3109 = vpop.xlane.xlu0 %3108
    %v3110 = vsel %vm645, %v3106, 0.0
    %3111 = vadd.xlane.f32.xlu0 %v3110
    %v3112 = vpop.xlane.xlu0 %3111
    %v3113 = vmul.f32 %v3109, %v1654
    %v3114 = vmul.f32 %v3112, %v1654
    %v3115 = vsub.f32 %v3105, %v3113
    %v3116 = vsub.f32 %v3106, %v3114
    %v3117 = vmul.f32 %v3115, %v3115
    %v3118 = vmul.f32 %v3116, %v3116
    %v3119 = vsel %vm645, %v3117, 0.0
    %3120 = vadd.xlane.f32.xlu0 %v3119
    %v3121 = vpop.xlane.xlu0 %3120
    %v3122 = vsel %vm645, %v3118, 0.0
    %3123 = vadd.xlane.f32.xlu0 %v3122
    %v3124 = vpop.xlane.xlu0 %3123
    %v3125 = vmul.f32 %v3121, %v1654
    %v3126 = vmul.f32 %v3124, %v1654
    %v3127 = vadd.f32 %v3125, 1e-05
    %v3128 = vadd.f32 %v3126, 1e-05
    %v3129 = vrsqrt.pop %v3127
    %v3130 = vrsqrt.pop %v3128
    %v3131 = vmul.f32 %v3115, %v3129
    %v3132 = vmul.f32 %v3116, %v3130
    %v3133 = vld [vmem:[#allocation10 + $0xd] sm:$0x1]
    %v3134 = vlaneseq
    %v3135 = vshrl.u32 %v3134, 7
    %v3136 = vsub.s32 0, %v3135
    %v3137 = vrot.slane %v3133, %v3136
    %v3138 = vmul.f32 %v3131, %v3137
    %v3139 = vmul.f32 %v3132, %v3137
    %v3140 = vld [vmem:[#allocation10 + $0xe] sm:$0x1]
    %v3141 = vlaneseq
    %v3142 = vshrl.u32 %v3141, 7
    %v3143 = vsub.s32 0, %v3142
    %v3144 = vrot.slane %v3140, %v3143
    %v3145 = vadd.f32 %v3138, %v3144
    %v3146 = vadd.f32 %v3139, %v3144
    %s3147 = scalar_lea.vmem %s7, 32
    %v3148 = vld [vmem:[%s3147] sm:$0xff]
    %v3149 = vld [vmem:[%s3147 + $0x8] sm:$0xff]
    %v3150 = vld [vmem:[%s3147 + $0x10] sm:$0xff]
    %v3151 = vld [vmem:[%s3147 + $0x18] sm:$0xff]
    %v3152 = vld [vmem:[#allocation10 + $0xf] sm:$0x1]
    %v3153 = vlaneseq
    %v3154 = vshrl.u32 %v3153, 7
    %v3155 = vsub.s32 0, %v3154
    %v3156 = vrot.slane %v3152, %v3155
    %v3158 = vsel %vm645, %v3145, 0
    %v3161 = vsel %vm645, %v3146, 0
    %3163 = vmatprep.subr.mxu0 0.0
    %3164 = vmatpush1.msra.mxu0 %v3148
    %3165 = vmatprep.subr.mxu0 0.0
    %3166 = vmatpush1.msra.mxu0 %v3149
    %3167 = vmatprep.subr.mxu0 0.0
    %3168 = vmatpush1.msra.mxu0 %v3150
    %3169 = vmatprep.subr.mxu0 0.0
    %3170 = vmatpush1.msra.mxu0 %v3151
    %3171 = vmatprep.subr.mxu0 0.0
    %3172 = vmatpush1.msra.mxu0 0.0
    %3173 = vmatprep.subr.mxu0 0.0
    %3174 = vmatpush1.msra.mxu0 0.0
    %3175 = vmatprep.subr.mxu0 0.0
    %3176 = vmatpush1.msra.mxu0 0.0
    %3177 = vmatprep.subr.mxu0 0.0
    %3178 = vmatpush1.msra.mxu0 0.0
    %3179 = vmatprep.subr.mxu0 0.0
    %3180 = vmatpush1.msra.mxu0 0.0
    %3181 = vmatprep.subr.mxu0 0.0
    %3182 = vmatpush1.msra.mxu0 0.0
    %3183 = vmatprep.subr.mxu0 0.0
    %3184 = vmatpush1.msra.mxu0 0.0
    %3185 = vmatprep.subr.mxu0 0.0
    %3186 = vmatpush1.msra.mxu0 0.0
    %3187 = vmatprep.subr.mxu0 0.0
    %3188 = vmatpush1.msra.mxu0 0.0
    %3189 = vmatprep.subr.mxu0 0.0
    %3190 = vmatpush1.msra.mxu0 0.0
    %3191 = vmatprep.subr.mxu0 0.0
    %3192 = vmatpush1.msra.mxu0 0.0
    %3193 = vmatprep.subr.mxu0 0.0
    %3194 = vmatpush1.msra.mxu0 0.0
    %3195 = vmatprep.subr.mxu0 0.0
    %3196 = vmatpush1.msra.mxu0 0.0
    %3197 = vmatprep.subr.mxu0 0.0
    %3198 = vmatpush1.msra.mxu0 0.0
    %3199 = vmatprep.subr.mxu0 0.0
    %3200 = vmatpush1.msra.mxu0 0.0
    %3201 = vmatprep.subr.mxu0 0.0
    %3202 = vmatpush1.msra.mxu0 0.0
    %3203 = vmatprep.subr.mxu0 0.0
    %3204 = vmatpush1.msra.mxu0 0.0
    %3205 = vmatprep.subr.mxu0 0.0
    %3206 = vmatpush1.msra.mxu0 0.0
    %3207 = vmatprep.subr.mxu0 0.0
    %3208 = vmatpush1.msra.mxu0 0.0
    %3209 = vmatprep.subr.mxu0 0.0
    %3210 = vmatpush1.msra.mxu0 0.0
    %3211 = vmatprep.subr.mxu0 0.0
    %3212 = vmatpush1.msra.mxu0 0.0
    %3213 = vmatprep.subr.mxu0 0.0
    %3214 = vmatpush1.msra.mxu0 0.0
    %3215 = vmatprep.subr.mxu0 0.0
    %3216 = vmatpush1.msra.mxu0 0.0
    %3217 = vmatprep.subr.mxu0 0.0
    %3218 = vmatpush1.msra.mxu0 0.0
    %3219 = vmatprep.subr.mxu0 0.0
    %3220 = vmatpush1.msra.mxu0 0.0
    %3221 = vmatprep.subr.mxu0 0.0
    %3222 = vmatpush1.msra.mxu0 0.0
    %3223 = vmatprep.subr.mxu0 0.0
    %3224 = vmatpush1.msra.mxu0 0.0
    %3225 = vmatprep.subr.mxu0 0.0
    %3226 = vmatpush1.msra.mxu0 0.0
    %3227 = vmatprep.mubr.f32.mxu0 0.0
    %3228 = vmatmul.mubr.f32.gmra.mrb[0].mxu0 %v3158
    %v3229 = vpop.f32.mrb[0].mxu0
    %v3230 = vadd.f32 %v3156, %v3229
    %v3231 = vpop.f32.mrb[0].mxu0
    %3232 = vmatprep.mubr.f32.mxu0 0.0
    %3233 = vmatmul.mubr.f32.gmra.mrb[0].mxu0 %v3161
    %v3234 = vpop.f32.mrb[0].mxu0
    %v3235 = vadd.f32 %v3156, %v3234
    %v3236 = vpop.f32.mrb[0].mxu0
    %3237 = vdwg.mxu0
    %v3238 = vmax.f32 %v3230, 0.0
    %v3239 = vmax.f32 %v3235, 0.0
    %s3240 = scalar_lea.vmem %s8, 64
    %v3241 = vld [vmem:[%s3240] sm:$0xff]
    %v3242 = vld [vmem:[%s3240 + $0x8] sm:$0xff]
    %v3243 = vld [vmem:[%s3240 + $0x10] sm:$0xff]
    %v3244 = vld [vmem:[%s3240 + $0x18] sm:$0xff]
    %v3245 = vld [vmem:[%s3240 + $0x20] sm:$0xff]
    %v3246 = vld [vmem:[%s3240 + $0x28] sm:$0xff]
    %v3247 = vld [vmem:[%s3240 + $0x30] sm:$0xff]
    %v3248 = vld [vmem:[%s3240 + $0x38] sm:$0xff]
    %v3249 = vld [vmem:[#allocation10 + $0x10] sm:$0x1]
    %v3250 = vlaneseq
    %v3251 = vshrl.u32 %v3250, 7
    %v3252 = vsub.s32 0, %v3251
    %v3253 = vrot.slane %v3249, %v3252
    %v3255 = vsel %vm1794, %v3238, 0
    %v3258 = vsel %vm1794, %v3239, 0
    %3260 = vmatprep.subr.mxu0 0.0
    %3261 = vmatpush1.msra.mxu0 %v3241
    %3262 = vmatprep.subr.mxu0 0.0
    %3263 = vmatpush1.msra.mxu0 %v3242
    %3264 = vmatprep.subr.mxu0 0.0
    %3265 = vmatpush1.msra.mxu0 %v3243
    %3266 = vmatprep.subr.mxu0 0.0
    %3267 = vmatpush1.msra.mxu0 %v3244
    %3268 = vmatprep.subr.mxu0 0.0
    %3269 = vmatpush1.msra.mxu0 %v3245
    %3270 = vmatprep.subr.mxu0 0.0
    %3271 = vmatpush1.msra.mxu0 %v3246
    %3272 = vmatprep.subr.mxu0 0.0
    %3273 = vmatpush1.msra.mxu0 %v3247
    %3274 = vmatprep.subr.mxu0 0.0
    %3275 = vmatpush1.msra.mxu0 %v3248
    %3276 = vmatprep.subr.mxu0 0.0
    %3277 = vmatpush1.msra.mxu0 0.0
    %3278 = vmatprep.subr.mxu0 0.0
    %3279 = vmatpush1.msra.mxu0 0.0
    %3280 = vmatprep.subr.mxu0 0.0
    %3281 = vmatpush1.msra.mxu0 0.0
    %3282 = vmatprep.subr.mxu0 0.0
    %3283 = vmatpush1.msra.mxu0 0.0
    %3284 = vmatprep.subr.mxu0 0.0
    %3285 = vmatpush1.msra.mxu0 0.0
    %3286 = vmatprep.subr.mxu0 0.0
    %3287 = vmatpush1.msra.mxu0 0.0
    %3288 = vmatprep.subr.mxu0 0.0
    %3289 = vmatpush1.msra.mxu0 0.0
    %3290 = vmatprep.subr.mxu0 0.0
    %3291 = vmatpush1.msra.mxu0 0.0
    %3292 = vmatprep.subr.mxu0 0.0
    %3293 = vmatpush1.msra.mxu0 0.0
    %3294 = vmatprep.subr.mxu0 0.0
    %3295 = vmatpush1.msra.mxu0 0.0
    %3296 = vmatprep.subr.mxu0 0.0
    %3297 = vmatpush1.msra.mxu0 0.0
    %3298 = vmatprep.subr.mxu0 0.0
    %3299 = vmatpush1.msra.mxu0 0.0
    %3300 = vmatprep.subr.mxu0 0.0
    %3301 = vmatpush1.msra.mxu0 0.0
    %3302 = vmatprep.subr.mxu0 0.0
    %3303 = vmatpush1.msra.mxu0 0.0
    %3304 = vmatprep.subr.mxu0 0.0
    %3305 = vmatpush1.msra.mxu0 0.0
    %3306 = vmatprep.subr.mxu0 0.0
    %3307 = vmatpush1.msra.mxu0 0.0
    %3308 = vmatprep.subr.mxu0 0.0
    %3309 = vmatpush1.msra.mxu0 0.0
    %3310 = vmatprep.subr.mxu0 0.0
    %3311 = vmatpush1.msra.mxu0 0.0
    %3312 = vmatprep.subr.mxu0 0.0
    %3313 = vmatpush1.msra.mxu0 0.0
    %3314 = vmatprep.subr.mxu0 0.0
    %3315 = vmatpush1.msra.mxu0 0.0
    %3316 = vmatprep.subr.mxu0 0.0
    %3317 = vmatpush1.msra.mxu0 0.0
    %3318 = vmatprep.subr.mxu0 0.0
    %3319 = vmatpush1.msra.mxu0 0.0
    %3320 = vmatprep.subr.mxu0 0.0
    %3321 = vmatpush1.msra.mxu0 0.0
    %3322 = vmatprep.subr.mxu0 0.0
    %3323 = vmatpush1.msra.mxu0 0.0
    %3324 = vmatprep.mubr.f32.mxu0 0.0
    %3325 = vmatmul.mubr.f32.gmra.mrb[0].mxu0 %v3255
    %v3326 = vpop.f32.mrb[0].mxu0
    %v3327 = vadd.f32 %v3253, %v3326
    %v3328 = vpop.f32.mrb[0].mxu0
    %3329 = vmatprep.mubr.f32.mxu0 0.0
    %3330 = vmatmul.mubr.f32.gmra.mrb[0].mxu0 %v3258
    %v3331 = vpop.f32.mrb[0].mxu0
    %v3332 = vadd.f32 %v3253, %v3331
    %v3333 = vpop.f32.mrb[0].mxu0
    %3334 = vdwg.mxu0
    %v3335 = vadd.f32 %v3145, %v3327
    %v3336 = vadd.f32 %v3146, %v3332
    %v3337 = vsel %vm645, %v3335, 0.0
    %3338 = vadd.xlane.f32.xlu0 %v3337
    %v3339 = vpop.xlane.xlu0 %3338
    %v3340 = vsel %vm645, %v3336, 0.0
    %3341 = vadd.xlane.f32.xlu0 %v3340
    %v3342 = vpop.xlane.xlu0 %3341
    %v3343 = vmul.f32 %v3339, %v1654
    %v3344 = vmul.f32 %v3342, %v1654
    %v3345 = vsub.f32 %v3335, %v3343
    %v3346 = vsub.f32 %v3336, %v3344
    %v3347 = vmul.f32 %v3345, %v3345
    %v3348 = vmul.f32 %v3346, %v3346
    %v3349 = vsel %vm645, %v3347, 0.0
    %3350 = vadd.xlane.f32.xlu0 %v3349
    %v3351 = vpop.xlane.xlu0 %3350
    %v3352 = vsel %vm645, %v3348, 0.0
    %3353 = vadd.xlane.f32.xlu0 %v3352
    %v3354 = vpop.xlane.xlu0 %3353
    %v3355 = vmul.f32 %v3351, %v1654
    %v3356 = vmul.f32 %v3354, %v1654
    %v3357 = vadd.f32 %v3355, 1e-05
    %v3358 = vadd.f32 %v3356, 1e-05
    %v3359 = vrsqrt.pop %v3357
    %v3360 = vrsqrt.pop %v3358
    %v3361 = vmul.f32 %v3345, %v3359
    %v3362 = vmul.f32 %v3346, %v3360
    %v3363 = vld [vmem:[#allocation10 + $0x11] sm:$0x1]
    %v3364 = vlaneseq
    %v3365 = vshrl.u32 %v3364, 7
    %v3366 = vsub.s32 0, %v3365
    %v3367 = vrot.slane %v3363, %v3366
    %v3368 = vmul.f32 %v3361, %v3367
    %v3369 = vmul.f32 %v3362, %v3367
    %v3370 = vld [vmem:[#allocation10 + $0x12] sm:$0x1]
    %v3371 = vlaneseq
    %v3372 = vshrl.u32 %v3371, 7
    %v3373 = vsub.s32 0, %v3372
    %v3374 = vrot.slane %v3370, %v3373
    %v3375 = vadd.f32 %v3368, %v3374
    %v3376 = vadd.f32 %v3369, %v3374
    %v3377 = vmul.f32 %v3375, %v297
    %v3378 = vmul.f32 %v3376, %v302
    %v3379 = vmul.f32 %v2093, 0.56286514
    %v3380 = vmul.f32 %v2094, 0.56286514
    %v3381 = vmul.f32 %v3377, 0.4371349
    %v3382 = vmul.f32 %v3378, 0.4371349
    %v3383 = vadd.f32 %v3379, %v3381
    %v3384 = vadd.f32 %v3380, %v3382
    %v3385 = vmul.f32 %v3383, 0.6
    %v3386 = vmul.f32 %v3384, 0.6
    %v3387 = vmul.f32 %v1924, 0.4
    %v3388 = vmul.f32 %v1925, 0.4
    %v3389 = vadd.f32 %v3385, %v3387
    %v3390 = vadd.f32 %v3386, %v3388
    %v3391 = vlaneseq
    %v3392 = vshrl.u32 %v3391, 7
    %v3393 = vlaneseq
    %v3394 = vand.u32 %v3393, 127
    %v3395 = vmul.u32 %v3392, 8
    %vm3396 = vcmp.ge.s32.totalorder %v3394, %v3395
    %v3397 = vadd.s32 %v3392, 1
    %v3398 = vmul.u32 %v3397, 8
    %vm3399 = vcmp.lt.s32.totalorder %v3394, %v3398
    %vm3400 = vmand %vm3396, %vm3399
    %v3401 = vsel %vm3400, 1, 0
    %v3402 = vcvt.s32.f32 %v3401
    %3405 = vrot.lane.b32.xlu0 %v3377, 32
    %v3406 = vpop.permute.xlu0 %3405
    %3407 = vrot.lane.b32.xlu0 %v3378, 32
    %v3408 = vpop.permute.xlu0 %3407
    %3413 = vrot.lane.b32.xlu0 %v3389, 64
    %v3414 = vpop.permute.xlu0 %3413
    %3415 = vrot.lane.b32.xlu0 %v3390, 64
    %v3416 = vpop.permute.xlu0 %3415
    %v3419 = vsel %vm645, %v2093, %v3406
    %v3420 = vsel %vm645, %v2094, %v3408
    %v3421 = vsel %vm1794, %v3419, %v3414
    %v3422 = vsel %vm1794, %v3420, %v3416
    %v3424 = vsel %vm124, %v3402, 0
    %3426 = vmatprep.subr.mxu0 0.0
    %3427 = vmatpush1.msra.mxu0 %v3421
    %3428 = vmatprep.subr.mxu0 0.0
    %3429 = vmatpush1.msra.mxu0 %v3422
    %3430 = vmatprep.subr.mxu0 0.0
    %3431 = vmatpush1.msra.mxu0 0.0
    %3432 = vmatprep.subr.mxu0 0.0
    %3433 = vmatpush1.msra.mxu0 0.0
    %3434 = vmatprep.subr.mxu0 0.0
    %3435 = vmatpush1.msra.mxu0 0.0
    %3436 = vmatprep.subr.mxu0 0.0
    %3437 = vmatpush1.msra.mxu0 0.0
    %3438 = vmatprep.subr.mxu0 0.0
    %3439 = vmatpush1.msra.mxu0 0.0
    %3440 = vmatprep.subr.mxu0 0.0
    %3441 = vmatpush1.msra.mxu0 0.0
    %3442 = vmatprep.subr.mxu0 0.0
    %3443 = vmatpush1.msra.mxu0 0.0
    %3444 = vmatprep.subr.mxu0 0.0
    %3445 = vmatpush1.msra.mxu0 0.0
    %3446 = vmatprep.subr.mxu0 0.0
    %3447 = vmatpush1.msra.mxu0 0.0
    %3448 = vmatprep.subr.mxu0 0.0
    %3449 = vmatpush1.msra.mxu0 0.0
    %3450 = vmatprep.subr.mxu0 0.0
    %3451 = vmatpush1.msra.mxu0 0.0
    %3452 = vmatprep.subr.mxu0 0.0
    %3453 = vmatpush1.msra.mxu0 0.0
    %3454 = vmatprep.subr.mxu0 0.0
    %3455 = vmatpush1.msra.mxu0 0.0
    %3456 = vmatprep.subr.mxu0 0.0
    %3457 = vmatpush1.msra.mxu0 0.0
    %3458 = vmatprep.subr.mxu0 0.0
    %3459 = vmatpush1.msra.mxu0 0.0
    %3460 = vmatprep.subr.mxu0 0.0
    %3461 = vmatpush1.msra.mxu0 0.0
    %3462 = vmatprep.subr.mxu0 0.0
    %3463 = vmatpush1.msra.mxu0 0.0
    %3464 = vmatprep.subr.mxu0 0.0
    %3465 = vmatpush1.msra.mxu0 0.0
    %3466 = vmatprep.subr.mxu0 0.0
    %3467 = vmatpush1.msra.mxu0 0.0
    %3468 = vmatprep.subr.mxu0 0.0
    %3469 = vmatpush1.msra.mxu0 0.0
    %3470 = vmatprep.subr.mxu0 0.0
    %3471 = vmatpush1.msra.mxu0 0.0
    %3472 = vmatprep.subr.mxu0 0.0
    %3473 = vmatpush1.msra.mxu0 0.0
    %3474 = vmatprep.subr.mxu0 0.0
    %3475 = vmatpush1.msra.mxu0 0.0
    %3476 = vmatprep.subr.mxu0 0.0
    %3477 = vmatpush1.msra.mxu0 0.0
    %3478 = vmatprep.subr.mxu0 0.0
    %3479 = vmatpush1.msra.mxu0 0.0
    %3480 = vmatprep.subr.mxu0 0.0
    %3481 = vmatpush1.msra.mxu0 0.0
    %3482 = vmatprep.subr.mxu0 0.0
    %3483 = vmatpush1.msra.mxu0 0.0
    %3484 = vmatprep.subr.mxu0 0.0
    %3485 = vmatpush1.msra.mxu0 0.0
    %3486 = vmatprep.subr.mxu0 0.0
    %3487 = vmatpush1.msra.mxu0 0.0
    %3488 = vmatprep.subr.mxu0 0.0
    %3489 = vmatpush1.msra.mxu0 0.0
    %3490 = vmatprep.mubr.f32.mxu0 0.0
    %3491 = vmatmul.mubr.f32.gmra.mrb[0].mxu0 %v3424
    %v3492 = vpop.f32.mrb[0].mxu0
    %v3493 = vadd.f32 0.0, %v3492
    %v3494 = vpop.f32.mrb[0].mxu0
    %3495 = vdwg.mxu0
    %v3496 = vld [vmem:[%s10] sm:$0xff]
    %v3497 = vld [vmem:[%s10 + $0x8] sm:$0xff]
    %v3498 = vld [vmem:[%s10 + $0x10] sm:$0xff]
    %v3499 = vld [vmem:[%s10 + $0x18] sm:$0xff]
    %v3500 = vld [vmem:[%s10 + $0x20] sm:$0xff]
    %v3501 = vld [vmem:[%s10 + $0x28] sm:$0xff]
    %v3502 = vld [vmem:[%s10 + $0x30] sm:$0xff]
    %v3503 = vld [vmem:[%s10 + $0x38] sm:$0xff]
    %v3504 = vld [vmem:[%s10 + $0x40] sm:$0xff]
    %v3505 = vld [vmem:[%s10 + $0x48] sm:$0xff]
    %v3506 = vld [vmem:[%s10 + $0x50] sm:$0xff]
    %v3507 = vld [vmem:[%s10 + $0x58] sm:$0xff]
    %v3508 = vld [vmem:[#allocation10 + $0x14] sm:$0x1]
    %v3509 = vlaneseq
    %v3510 = vshrl.u32 %v3509, 7
    %v3511 = vsub.s32 0, %v3510
    %v3512 = vrot.slane %v3508, %v3511
    %vm3513 = vcmask 785408
    %v3515 = vsel %vm3513, %v3493, 0
    %3517 = vmatprep.subr.mxu0 0.0
    %3518 = vmatpush1.msra.mxu0 %v3496
    %3519 = vmatprep.subr.mxu0 0.0
    %3520 = vmatpush1.msra.mxu0 %v3497
    %3521 = vmatprep.subr.mxu0 0.0
    %3522 = vmatpush1.msra.mxu0 %v3498
    %3523 = vmatprep.subr.mxu0 0.0
    %3524 = vmatpush1.msra.mxu0 %v3499
    %3525 = vmatprep.subr.mxu0 0.0
    %3526 = vmatpush1.msra.mxu0 %v3500
    %3527 = vmatprep.subr.mxu0 0.0
    %3528 = vmatpush1.msra.mxu0 %v3501
    %3529 = vmatprep.subr.mxu0 0.0
    %3530 = vmatpush1.msra.mxu0 %v3502
    %3531 = vmatprep.subr.mxu0 0.0
    %3532 = vmatpush1.msra.mxu0 %v3503
    %3533 = vmatprep.subr.mxu0 0.0
    %3534 = vmatpush1.msra.mxu0 %v3504
    %3535 = vmatprep.subr.mxu0 0.0
    %3536 = vmatpush1.msra.mxu0 %v3505
    %3537 = vmatprep.subr.mxu0 0.0
    %3538 = vmatpush1.msra.mxu0 %v3506
    %3539 = vmatprep.subr.mxu0 0.0
    %3540 = vmatpush1.msra.mxu0 %v3507
    %3541 = vmatprep.subr.mxu0 0.0
    %3542 = vmatpush1.msra.mxu0 0.0
    %3543 = vmatprep.subr.mxu0 0.0
    %3544 = vmatpush1.msra.mxu0 0.0
    %3545 = vmatprep.subr.mxu0 0.0
    %3546 = vmatpush1.msra.mxu0 0.0
    %3547 = vmatprep.subr.mxu0 0.0
    %3548 = vmatpush1.msra.mxu0 0.0
    %3549 = vmatprep.subr.mxu0 0.0
    %3550 = vmatpush1.msra.mxu0 0.0
    %3551 = vmatprep.subr.mxu0 0.0
    %3552 = vmatpush1.msra.mxu0 0.0
    %3553 = vmatprep.subr.mxu0 0.0
    %3554 = vmatpush1.msra.mxu0 0.0
    %3555 = vmatprep.subr.mxu0 0.0
    %3556 = vmatpush1.msra.mxu0 0.0
    %3557 = vmatprep.subr.mxu0 0.0
    %3558 = vmatpush1.msra.mxu0 0.0
    %3559 = vmatprep.subr.mxu0 0.0
    %3560 = vmatpush1.msra.mxu0 0.0
    %3561 = vmatprep.subr.mxu0 0.0
    %3562 = vmatpush1.msra.mxu0 0.0
    %3563 = vmatprep.subr.mxu0 0.0
    %3564 = vmatpush1.msra.mxu0 0.0
    %3565 = vmatprep.subr.mxu0 0.0
    %3566 = vmatpush1.msra.mxu0 0.0
    %3567 = vmatprep.subr.mxu0 0.0
    %3568 = vmatpush1.msra.mxu0 0.0
    %3569 = vmatprep.subr.mxu0 0.0
    %3570 = vmatpush1.msra.mxu0 0.0
    %3571 = vmatprep.subr.mxu0 0.0
    %3572 = vmatpush1.msra.mxu0 0.0
    %3573 = vmatprep.subr.mxu0 0.0
    %3574 = vmatpush1.msra.mxu0 0.0
    %3575 = vmatprep.subr.mxu0 0.0
    %3576 = vmatpush1.msra.mxu0 0.0
    %3577 = vmatprep.subr.mxu0 0.0
    %3578 = vmatpush1.msra.mxu0 0.0
    %3579 = vmatprep.subr.mxu0 0.0
    %3580 = vmatpush1.msra.mxu0 0.0
    %3581 = vmatprep.mubr.f32.mxu0 0.0
    %3582 = vmatmul.mubr.f32.gmra.mrb[0].mxu0 %v3515
    %v3583 = vpop.f32.mrb[0].mxu0
    %v3584 = vadd.f32 %v3512, %v3583
    %v3585 = vpop.f32.mrb[0].mxu0
    %3586 = vdwg.mxu0
    %v3587 = vmax.f32 %v3584, 0.0
    %v3588 = vld [vmem:[%s11] sm:$0xff]
    %v3589 = vld [vmem:[%s11 + $0x8] sm:$0xff]
    %v3590 = vld [vmem:[%s11 + $0x10] sm:$0xff]
    %v3591 = vld [vmem:[%s11 + $0x18] sm:$0xff]
    %v3592 = vld [vmem:[%s11 + $0x20] sm:$0xff]
    %v3593 = vld [vmem:[%s11 + $0x28] sm:$0xff]
    %v3594 = vld [vmem:[%s11 + $0x30] sm:$0xff]
    %v3595 = vld [vmem:[%s11 + $0x38] sm:$0xff]
    %v3596 = vld [vmem:[%s11 + $0x40] sm:$0xff]
    %v3597 = vld [vmem:[%s11 + $0x48] sm:$0xff]
    %v3598 = vld [vmem:[%s11 + $0x50] sm:$0xff]
    %v3599 = vld [vmem:[%s11 + $0x58] sm:$0xff]
    %v3600 = vld [vmem:[#allocation10 + $0x15] sm:$0x1]
    %v3601 = vlaneseq
    %v3602 = vshrl.u32 %v3601, 7
    %v3603 = vsub.s32 0, %v3602
    %v3604 = vrot.slane %v3600, %v3603
    %v3606 = vsel %vm3513, %v3587, 0
    %3608 = vmatprep.subr.mxu0 0.0
    %3609 = vmatpush1.msra.mxu0 %v3588
    %3610 = vmatprep.subr.mxu0 0.0
    %3611 = vmatpush1.msra.mxu0 %v3589
    %3612 = vmatprep.subr.mxu0 0.0
    %3613 = vmatpush1.msra.mxu0 %v3590
    %3614 = vmatprep.subr.mxu0 0.0
    %3615 = vmatpush1.msra.mxu0 %v3591
    %3616 = vmatprep.subr.mxu0 0.0
    %3617 = vmatpush1.msra.mxu0 %v3592
    %3618 = vmatprep.subr.mxu0 0.0
    %3619 = vmatpush1.msra.mxu0 %v3593
    %3620 = vmatprep.subr.mxu0 0.0
    %3621 = vmatpush1.msra.mxu0 %v3594
    %3622 = vmatprep.subr.mxu0 0.0
    %3623 = vmatpush1.msra.mxu0 %v3595
    %3624 = vmatprep.subr.mxu0 0.0
    %3625 = vmatpush1.msra.mxu0 %v3596
    %3626 = vmatprep.subr.mxu0 0.0
    %3627 = vmatpush1.msra.mxu0 %v3597
    %3628 = vmatprep.subr.mxu0 0.0
    %3629 = vmatpush1.msra.mxu0 %v3598
    %3630 = vmatprep.subr.mxu0 0.0
    %3631 = vmatpush1.msra.mxu0 %v3599
    %3632 = vmatprep.subr.mxu0 0.0
    %3633 = vmatpush1.msra.mxu0 0.0
    %3634 = vmatprep.subr.mxu0 0.0
    %3635 = vmatpush1.msra.mxu0 0.0
    %3636 = vmatprep.subr.mxu0 0.0
    %3637 = vmatpush1.msra.mxu0 0.0
    %3638 = vmatprep.subr.mxu0 0.0
    %3639 = vmatpush1.msra.mxu0 0.0
    %3640 = vmatprep.subr.mxu0 0.0
    %3641 = vmatpush1.msra.mxu0 0.0
    %3642 = vmatprep.subr.mxu0 0.0
    %3643 = vmatpush1.msra.mxu0 0.0
    %3644 = vmatprep.subr.mxu0 0.0
    %3645 = vmatpush1.msra.mxu0 0.0
    %3646 = vmatprep.subr.mxu0 0.0
    %3647 = vmatpush1.msra.mxu0 0.0
    %3648 = vmatprep.subr.mxu0 0.0
    %3649 = vmatpush1.msra.mxu0 0.0
    %3650 = vmatprep.subr.mxu0 0.0
    %3651 = vmatpush1.msra.mxu0 0.0
    %3652 = vmatprep.subr.mxu0 0.0
    %3653 = vmatpush1.msra.mxu0 0.0
    %3654 = vmatprep.subr.mxu0 0.0
    %3655 = vmatpush1.msra.mxu0 0.0
    %3656 = vmatprep.subr.mxu0 0.0
    %3657 = vmatpush1.msra.mxu0 0.0
    %3658 = vmatprep.subr.mxu0 0.0
    %3659 = vmatpush1.msra.mxu0 0.0
    %3660 = vmatprep.subr.mxu0 0.0
    %3661 = vmatpush1.msra.mxu0 0.0
    %3662 = vmatprep.subr.mxu0 0.0
    %3663 = vmatpush1.msra.mxu0 0.0
    %3664 = vmatprep.subr.mxu0 0.0
    %3665 = vmatpush1.msra.mxu0 0.0
    %3666 = vmatprep.subr.mxu0 0.0
    %3667 = vmatpush1.msra.mxu0 0.0
    %3668 = vmatprep.subr.mxu0 0.0
    %3669 = vmatpush1.msra.mxu0 0.0
    %3670 = vmatprep.subr.mxu0 0.0
    %3671 = vmatpush1.msra.mxu0 0.0
    %3672 = vmatprep.mubr.f32.mxu0 0.0
    %3673 = vmatmul.mubr.f32.gmra.mrb[0].mxu0 %v3606
    %v3674 = vpop.f32.mrb[0].mxu0
    %v3675 = vadd.f32 %v3604, %v3674
    %v3676 = vpop.f32.mrb[0].mxu0
    %3677 = vdwg.mxu0
    %v3678 = vmax.f32 %v3675, 0.0
    %v3679 = vld [vmem:[%s12] sm:$0xff]
    %v3680 = vld [vmem:[%s12 + $0x8] sm:$0xff]
    %v3681 = vld [vmem:[%s12 + $0x10] sm:$0xff]
    %v3682 = vld [vmem:[%s12 + $0x18] sm:$0xff]
    %v3683 = vld [vmem:[%s12 + $0x20] sm:$0xff]
    %v3684 = vld [vmem:[%s12 + $0x28] sm:$0xff]
    %v3685 = vld [vmem:[#allocation10 + $0x16] sm:$0x1]
    %v3686 = vlaneseq
    %v3687 = vshrl.u32 %v3686, 7
    %v3688 = vsub.s32 0, %v3687
    %v3689 = vrot.slane %v3685, %v3688
    %vm3690 = vcmask 392192
    %v3692 = vsel %vm3690, %v3678, 0
    %3694 = vmatprep.subr.mxu0 0.0
    %3695 = vmatpush1.msra.mxu0 %v3679
    %3696 = vmatprep.subr.mxu0 0.0
    %3697 = vmatpush1.msra.mxu0 %v3680
    %3698 = vmatprep.subr.mxu0 0.0
    %3699 = vmatpush1.msra.mxu0 %v3681
    %3700 = vmatprep.subr.mxu0 0.0
    %3701 = vmatpush1.msra.mxu0 %v3682
    %3702 = vmatprep.subr.mxu0 0.0
    %3703 = vmatpush1.msra.mxu0 %v3683
    %3704 = vmatprep.subr.mxu0 0.0
    %3705 = vmatpush1.msra.mxu0 %v3684
    %3706 = vmatprep.subr.mxu0 0.0
    %3707 = vmatpush1.msra.mxu0 0.0
    %3708 = vmatprep.subr.mxu0 0.0
    %3709 = vmatpush1.msra.mxu0 0.0
    %3710 = vmatprep.subr.mxu0 0.0
    %3711 = vmatpush1.msra.mxu0 0.0
    %3712 = vmatprep.subr.mxu0 0.0
    %3713 = vmatpush1.msra.mxu0 0.0
    %3714 = vmatprep.subr.mxu0 0.0
    %3715 = vmatpush1.msra.mxu0 0.0
    %3716 = vmatprep.subr.mxu0 0.0
    %3717 = vmatpush1.msra.mxu0 0.0
    %3718 = vmatprep.subr.mxu0 0.0
    %3719 = vmatpush1.msra.mxu0 0.0
    %3720 = vmatprep.subr.mxu0 0.0
    %3721 = vmatpush1.msra.mxu0 0.0
    %3722 = vmatprep.subr.mxu0 0.0
    %3723 = vmatpush1.msra.mxu0 0.0
    %3724 = vmatprep.subr.mxu0 0.0
    %3725 = vmatpush1.msra.mxu0 0.0
    %3726 = vmatprep.subr.mxu0 0.0
    %3727 = vmatpush1.msra.mxu0 0.0
    %3728 = vmatprep.subr.mxu0 0.0
    %3729 = vmatpush1.msra.mxu0 0.0
    %3730 = vmatprep.subr.mxu0 0.0
    %3731 = vmatpush1.msra.mxu0 0.0
    %3732 = vmatprep.subr.mxu0 0.0
    %3733 = vmatpush1.msra.mxu0 0.0
    %3734 = vmatprep.subr.mxu0 0.0
    %3735 = vmatpush1.msra.mxu0 0.0
    %3736 = vmatprep.subr.mxu0 0.0
    %3737 = vmatpush1.msra.mxu0 0.0
    %3738 = vmatprep.subr.mxu0 0.0
    %3739 = vmatpush1.msra.mxu0 0.0
    %3740 = vmatprep.subr.mxu0 0.0
    %3741 = vmatpush1.msra.mxu0 0.0
    %3742 = vmatprep.subr.mxu0 0.0
    %3743 = vmatpush1.msra.mxu0 0.0
    %3744 = vmatprep.subr.mxu0 0.0
    %3745 = vmatpush1.msra.mxu0 0.0
    %3746 = vmatprep.subr.mxu0 0.0
    %3747 = vmatpush1.msra.mxu0 0.0
    %3748 = vmatprep.subr.mxu0 0.0
    %3749 = vmatpush1.msra.mxu0 0.0
    %3750 = vmatprep.subr.mxu0 0.0
    %3751 = vmatpush1.msra.mxu0 0.0
    %3752 = vmatprep.subr.mxu0 0.0
    %3753 = vmatpush1.msra.mxu0 0.0
    %3754 = vmatprep.subr.mxu0 0.0
    %3755 = vmatpush1.msra.mxu0 0.0
    %3756 = vmatprep.subr.mxu0 0.0
    %3757 = vmatpush1.msra.mxu0 0.0
    %3758 = vmatprep.mubr.f32.mxu0 0.0
    %3759 = vmatmul.mubr.f32.gmra.mrb[0].mxu0 %v3692
    %v3760 = vpop.f32.mrb[0].mxu0
    %v3761 = vadd.f32 %v3689, %v3760
    %v3762 = vpop.f32.mrb[0].mxu0
    %3763 = vdwg.mxu0
    %3764 = vst [vmem:[#allocation11] sm:$0x3] %v3761
    // Predicated region
    $region78: #{tpu_custom_call.1} parent=1 // pred_check
      _
    $region79: #{tpu_custom_call.1} parent=1 // pred_check_branch
      %3766 = sbr.rel (0) target = $region81
    $region80: #{tpu_custom_call.1} parent=1 // pred_region
      %s3768 = ssub.s32 32, 32
      %3769 = vsyncadd [#allocation4], %s3768
      %s3771 = sshll.u32 [#allocation11], 4
      %s3772 = int_to_ptr.vmem [resolvable:$true] %s3771
      %3774 = dma.vmem_to_hbm [thread:$0]  %s3772, 32, %s14, [#allocation4]
    $region81: #{tpu_custom_call.1} parent=1 // pred_fallthru
      _
    // Predicated region
    $region82: #{tpu_custom_call.1} parent=1 // pred_check
      _
    $region83: #{tpu_custom_call.1} parent=1 // pred_check_branch
      %3776 = sbr.rel (0) target = $region85
    $region84: #{tpu_custom_call.1} parent=1 // pred_region
      %3777 = dma.done [#allocation4], 32
    $region85: #{tpu_custom_call.1} parent=1 // pred_fallthru
      _
    %3778 = vsyncpa [#allocation3], 1
    %3779 = vsyncpa [#allocation6], 1
    %3780 = vsyncpa [#allocation9], 1
    %3781 = vsyncpa [#allocation4], 1

</llo_original>
